<compile_context>
chip_gen: v6e
topology: v6e:2x2x1
jax: 0.10.0
libtpu: 0.0.40
codegen_flags: <defaults>
</compile_context>

<pallas_src>
import math
import functools

import jax
import jax.numpy as jnp
import numpy as np
from jax.experimental import pallas as pl
from jax.experimental.pallas import tpu as pltpu

# ---- model config (small, consistent with the module's constructor) ----
NTOKEN   = 32
D_MODEL  = 32
NHEAD    = 4
HEAD_DIM = D_MODEL // NHEAD
D_HID    = 64
NLAYERS  = 2
SEQ      = 8
BATCH    = 2
LN_EPS   = 1e-5
OUT_PAD  = 128          # lane-dense decoder output width (>= NTOKEN, multiple of 128)
N_VEC    = 8            # packed per-layer vector rows (biases + LN params)


def _layer_norm(x, w, b):
    mu = jnp.mean(x, axis=-1, keepdims=True)
    var = jnp.mean((x - mu) ** 2, axis=-1, keepdims=True)
    return (x - mu) * jax.lax.rsqrt(var + LN_EPS) * w + b


def transformer_kernel(x_ref, pe_ref, mask_ref,
                       wqkv_ref, wo_ref, w1_ref, w2_ref, vec_ref,
                       wd_ref, bd_ref,
                       out_ref, *, nlayers, nhead):
    S, D = pe_ref.shape
    K = D // nhead

    # embedding * sqrt(d_model) + positional encoding
    # TODO(synk): dropout layers are identity at inference (eval mode); no RNG path.
    x = x_ref[0] * jnp.float32(math.sqrt(D)) + pe_ref[...]           # [S, D]
    mask = mask_ref[...]                                             # [S, S]

    for l in range(nlayers):
        vecs = vec_ref[l]                                            # [N_VEC, 128]
        bqkv = vecs[0, :3 * D]
        ob   = vecs[1, :D]
        ln1w = vecs[2, :D]
        ln1b = vecs[3, :D]
        b1   = vecs[4, :D_HID]
        b2   = vecs[5, :D]
        ln2w = vecs[6, :D]
        ln2b = vecs[7, :D]

        # ---- fused QKV projection: heads packed along lanes, q-scale pre-folded ----
        qkv = jnp.dot(x, wqkv_ref[l],
                      preferred_element_type=jnp.float32) + bqkv      # [S, 3D]
        q = qkv[:, :D]
        k = qkv[:, D:2 * D]
        v = qkv[:, 2 * D:]

        # per-head static lane slices; scores / PV are tiny [S,S] and [S,K] matmuls
        heads = []
        for h in range(nhead):
            qh = q[:, h * K:(h + 1) * K]                              # [S, K]
            kh = k[:, h * K:(h + 1) * K]
            vh = v[:, h * K:(h + 1) * K]
            s = jnp.einsum('sk,tk->st', qh, kh,
                           preferred_element_type=jnp.float32) + mask # [S, S]
            s = s - jnp.max(s, axis=-1, keepdims=True)
            e = jnp.exp(s)
            p = e / jnp.sum(e, axis=-1, keepdims=True)                # exact softmax
            heads.append(jnp.dot(p, vh,
                                 preferred_element_type=jnp.float32)) # [S, K]
        o = jnp.concatenate(heads, axis=-1)                           # [S, D]

        # ---- output projection: single dense matmul (head concat is lane concat) ----
        attn = jnp.dot(o, wo_ref[l],
                       preferred_element_type=jnp.float32) + ob       # [S, D]
        x = _layer_norm(x + attn, ln1w, ln1b)

        # ---- feed-forward (weights pre-transposed: plain x @ w) ----
        h1 = jnp.maximum(
            jnp.dot(x, w1_ref[l], preferred_element_type=jnp.float32) + b1, 0.0)
        ff = jnp.dot(h1, w2_ref[l], preferred_element_type=jnp.float32) + b2
        x = _layer_norm(x + ff, ln2w, ln2b)

    # ---- decoder projection, lane-dense (padded to OUT_PAD = 128 lanes) ----
    out_ref[0] = jnp.dot(x, wd_ref[...],
                         preferred_element_type=jnp.float32) + bd_ref[...]


def make_pos_encoding(seq_len, d_model):
    pos = jnp.arange(seq_len, dtype=jnp.float32)[:, None]
    div = jnp.exp(jnp.arange(0, d_model, 2, dtype=jnp.float32)
                  * (-math.log(10000.0) / d_model))
    pe = jnp.zeros((seq_len, d_model), jnp.float32)
    pe = pe.at[:, 0::2].set(jnp.sin(pos * div))
    pe = pe.at[:, 1::2].set(jnp.cos(pos * div))
    return pe


def init_params(key):
    """Parameters in PyTorch-native layouts (weights are [out, in])."""
    ks = jax.random.split(key, 9)
    u = lambda k, shape, a: jax.random.uniform(k, shape, jnp.float32, -a, a)
    sd = 1.0 / math.sqrt(D_MODEL)
    sh = 1.0 / math.sqrt(D_HID)
    return dict(
        emb=u(ks[0], (NTOKEN, D_MODEL), 0.1),
        ipw=u(ks[1], (NLAYERS, 3 * D_MODEL, D_MODEL), sd),
        ipb=u(ks[2], (NLAYERS, 3 * D_MODEL), sd),
        opw=u(ks[3], (NLAYERS, D_MODEL, D_MODEL), sd),
        opb=jnp.zeros((NLAYERS, D_MODEL), jnp.float32),
        ln1w=jnp.ones((NLAYERS, D_MODEL), jnp.float32),
        ln1b=jnp.zeros((NLAYERS, D_MODEL), jnp.float32),
        l1w=u(ks[4], (NLAYERS, D_HID, D_MODEL), sd),
        l1b=u(ks[5], (NLAYERS, D_HID), sd),
        l2w=u(ks[6], (NLAYERS, D_MODEL, D_HID), sh),
        l2b=u(ks[7], (NLAYERS, D_MODEL), sh),
        ln2w=jnp.ones((NLAYERS, D_MODEL), jnp.float32),
        ln2b=jnp.zeros((NLAYERS, D_MODEL), jnp.float32),
        dw=u(ks[8], (NTOKEN, D_MODEL), 0.1),
        db=jnp.zeros((NTOKEN,), jnp.float32),
    )


def prepare_params(params):
    """Pre-transpose / reshape PyTorch-layout weights into kernel layouts.

    - wqkv: [L, D, 3D]   fused QKV, x @ w form, 1/sqrt(head_dim) folded into q cols
    - wo:   [L, D, D]    x @ w form (head concat handled by lane concat in-kernel)
    - w1/w2: pre-transposed so kernel does x @ w
    - vecs: [L, 8, 128]  all per-layer bias / LN vectors packed lane-dense
    - wd/bd: zero-padded to OUT_PAD lanes for a lane-dense final store
    """
    L, D = NLAYERS, D_MODEL
    scale = 1.0 / math.sqrt(HEAD_DIM)

    wqkv = jnp.transpose(params['ipw'], (0, 2, 1))                    # [L, D, 3D]
    bqkv = params['ipb']                                              # [L, 3D]
    qmask = jnp.concatenate([jnp.full((D,), scale, jnp.float32),
                             jnp.ones((2 * D,), jnp.float32)])
    wqkv = wqkv * qmask[None, None, :]
    bqkv = bqkv * qmask[None, :]

    wo = jnp.transpose(params['opw'], (0, 2, 1))                      # [L, D, D]
    w1 = jnp.transpose(params['l1w'], (0, 2, 1))                      # [L, D, D_HID]
    w2 = jnp.transpose(params['l2w'], (0, 2, 1))                      # [L, D_HID, D]

    vecs = jnp.zeros((L, N_VEC, 128), jnp.float32)
    vecs = vecs.at[:, 0, :3 * D].set(bqkv)
    vecs = vecs.at[:, 1, :D].set(params['opb'])
    vecs = vecs.at[:, 2, :D].set(params['ln1w'])
    vecs = vecs.at[:, 3, :D].set(params['ln1b'])
    vecs = vecs.at[:, 4, :D_HID].set(params['l1b'])
    vecs = vecs.at[:, 5, :D].set(params['l2b'])
    vecs = vecs.at[:, 6, :D].set(params['ln2w'])
    vecs = vecs.at[:, 7, :D].set(params['ln2b'])

    wd = jnp.zeros((D, OUT_PAD), jnp.float32).at[:, :NTOKEN].set(params['dw'].T)
    bd = jnp.zeros((1, OUT_PAD), jnp.float32).at[:, :NTOKEN].set(params['db'][None, :])

    return wqkv, wo, w1, w2, vecs, wd, bd


@jax.jit
def transformer_forward(src, src_mask, params, pe):
    """src: [S, B] int32 token ids; src_mask: [S, S] additive float mask.
    Returns [S, B, NTOKEN] (PyTorch seq-first convention)."""
    S, B = src.shape

    # embedding gather in glue; batch-major activations [B, S, D]
    x_emb = jnp.transpose(params['emb'][src], (1, 0, 2))

    wqkv, wo, w1, w2, vecs, wd, bd = prepare_params(params)
    kernel = functools.partial(transformer_kernel, nlayers=NLAYERS, nhead=NHEAD)

    # grid over batch: each step handles one batch element's [S, D] slab with the
    # shared [S, S] causal mask -- no (B*S)^2 packed mask, no cross-batch waste.
    # TODO(synk): if the model is scaled up, move the layer loop onto a grid axis
    # with per-layer BlockSpecs so only one layer's weights are VMEM-resident.
    in_specs = [
        pl.BlockSpec((1, S, D_MODEL), lambda b: (b, 0, 0)),                 # x_emb
        pl.BlockSpec((S, D_MODEL), lambda b: (0, 0)),                       # pe
        pl.BlockSpec((S, S), lambda b: (0, 0)),                             # src_mask
        pl.BlockSpec((NLAYERS, D_MODEL, 3 * D_MODEL), lambda b: (0, 0, 0)), # wqkv
        pl.BlockSpec((NLAYERS, D_MODEL, D_MODEL), lambda b: (0, 0, 0)),     # wo
        pl.BlockSpec((NLAYERS, D_MODEL, D_HID), lambda b: (0, 0, 0)),       # w1
        pl.BlockSpec((NLAYERS, D_HID, D_MODEL), lambda b: (0, 0, 0)),       # w2
        pl.BlockSpec((NLAYERS, N_VEC, 128), lambda b: (0, 0, 0)),           # vecs
        pl.BlockSpec((D_MODEL, OUT_PAD), lambda b: (0, 0)),                 # wd
        pl.BlockSpec((1, OUT_PAD), lambda b: (0, 0)),                       # bd
    ]
    out_specs = pl.BlockSpec((1, S, OUT_PAD), lambda b: (b, 0, 0))

    out = pl.pallas_call(
        kernel,
        out_shape=jax.ShapeDtypeStruct((B, S, OUT_PAD), jnp.float32),
        grid=(B,),
        in_specs=in_specs,
        out_specs=out_specs,
        compiler_params=pltpu.CompilerParams(
            dimension_semantics=("parallel",)),
    )(x_emb, pe, src_mask, wqkv, wo, w1, w2, vecs, wd, bd)

    logits = out[:, :, :NTOKEN]                                      # [B, S, NTOKEN]
    return jnp.transpose(logits, (1, 0, 2))                          # [S, B, NTOKEN]


# ---- pure-JAX reference (PyTorch-equivalent math, raw param layouts) ----
def reference_forward(src, src_mask, params, pe):
    S, B = src.shape
    hd = D_MODEL // NHEAD
    x = jnp.transpose(params['emb'][src] * math.sqrt(D_MODEL) + pe[:, None, :],
                      (1, 0, 2))                                     # [B, S, D]

    def one(xb):
        x = xb
        for l in range(NLAYERS):
            qkv = x @ params['ipw'][l].T + params['ipb'][l]
            q = qkv[:, :D_MODEL]
            k = qkv[:, D_MODEL:2 * D_MODEL]
            v = qkv[:, 2 * D_MODEL:]
            heads = []
            for h in range(NHEAD):
                qh = q[:, h * hd:(h + 1) * hd] / math.sqrt(hd)
                kh = k[:, h * hd:(h + 1) * hd]
                vh = v[:, h * hd:(h + 1) * hd]
                p = jax.nn.softmax(qh @ kh.T + src_mask, axis=-1)
                heads.append(p @ vh)
            attn = jnp.concatenate(heads, -1) @ params['opw'][l].T + params['opb'][l]
            x = _layer_norm(x + attn, params['ln1w'][l], params['ln1b'][l])
            h1 = jax.nn.relu(x @ params['l1w'][l].T + params['l1b'][l])
            ff = h1 @ params['l2w'][l].T + params['l2b'][l]
            x = _layer_norm(x + ff, params['ln2w'][l], params['ln2b'][l])
        return x @ params['dw'].T + params['db']

    out = jax.vmap(one)(x)                                           # [B, S, NTOKEN]
    return jnp.transpose(out, (1, 0, 2))


if __name__ == "__main__":
    key = jax.random.PRNGKey(0)
    k_param, k_src = jax.random.split(key)

    params = init_params(k_param)
    pe = make_pos_encoding(SEQ, D_MODEL)

    src = jax.random.randint(k_src, (SEQ, BATCH), 0, NTOKEN, dtype=jnp.int32)
    # causal additive mask, like nn.Transformer.generate_square_subsequent_mask
    src_mask = jnp.where(jnp.tril(jnp.ones((SEQ, SEQ), bool)),
                         0.0, -1e9).astype(jnp.float32)

    out = transformer_forward(src, src_mask, params, pe)
    out = jax.block_until_ready(out)

    ref = reference_forward(src, src_mask, params, pe)
    assert out.shape == (SEQ, BATCH, NTOKEN), out.shape
    assert np.allclose(np.asarray(out), np.asarray(ref), atol=2e-3, rtol=2e-3), \
        float(np.max(np.abs(np.asarray(out) - np.asarray(ref))))

    print("KERNEL_OK")
</pallas_src>

<mosaic_0001>
module attributes {stable_mosaic.version = 11 : i64} {
  func.func @transformer_kernel(%arg0: i32, %arg1: memref<1x8x32xf32, #tpu.memory_space<vmem>>, %arg2: memref<8x32xf32, #tpu.memory_space<vmem>>, %arg3: memref<8x8xf32, #tpu.memory_space<vmem>>, %arg4: memref<2x32x96xf32, #tpu.memory_space<vmem>>, %arg5: memref<2x32x32xf32, #tpu.memory_space<vmem>>, %arg6: memref<2x32x64xf32, #tpu.memory_space<vmem>>, %arg7: memref<2x64x32xf32, #tpu.memory_space<vmem>>, %arg8: memref<2x8x128xf32, #tpu.memory_space<vmem>>, %arg9: memref<32x128xf32, #tpu.memory_space<vmem>>, %arg10: memref<1x128xf32, #tpu.memory_space<vmem>>, %arg11: memref<1x8x128xf32, #tpu.memory_space<vmem>>) attributes {dimension_semantics = [#tpu.dimension_semantics<parallel>], iteration_bounds = array<i64: 2>, scalar_prefetch = 0 : i64, scratch_operands = 0 : i64, tpu.core_type = #tpu.core_type<tc>, window_params = [{transform_indices = @transform_0, window_bounds = array<i64: 1, 8, 32>}, {pipeline_mode = #tpu.pipeline_mode<synchronous>, transform_indices = @transform_1, window_bounds = array<i64: 8, 32>}, {pipeline_mode = #tpu.pipeline_mode<synchronous>, transform_indices = @transform_2, window_bounds = array<i64: 8, 8>}, {pipeline_mode = #tpu.pipeline_mode<synchronous>, transform_indices = @transform_3, window_bounds = array<i64: 2, 32, 96>}, {pipeline_mode = #tpu.pipeline_mode<synchronous>, transform_indices = @transform_4, window_bounds = array<i64: 2, 32, 32>}, {pipeline_mode = #tpu.pipeline_mode<synchronous>, transform_indices = @transform_5, window_bounds = array<i64: 2, 32, 64>}, {pipeline_mode = #tpu.pipeline_mode<synchronous>, transform_indices = @transform_6, window_bounds = array<i64: 2, 64, 32>}, {pipeline_mode = #tpu.pipeline_mode<synchronous>, transform_indices = @transform_7, window_bounds = array<i64: 2, 8, 128>}, {pipeline_mode = #tpu.pipeline_mode<synchronous>, transform_indices = @transform_8, window_bounds = array<i64: 32, 128>}, {pipeline_mode = #tpu.pipeline_mode<synchronous>, transform_indices = @transform_9, window_bounds = array<i64: 1, 128>}, {transform_indices = @transform_10, window_bounds = array<i64: 1, 8, 128>}]} {
    %c0 = arith.constant 0 : index
    %c0_0 = arith.constant 0 : index
    %c0_1 = arith.constant 0 : index
    %0 = vector.load %arg1[%c0, %c0_0, %c0_1] : memref<1x8x32xf32, #tpu.memory_space<vmem>>, vector<1x8x32xf32>
    %1 = vector.shape_cast %0 : vector<1x8x32xf32> to vector<8x32xf32>
    %cst = arith.constant 5.65685415 : f32
    %2 = vector.broadcast %cst : f32 to vector<8x32xf32>
    %3 = arith.mulf %1, %2 : vector<8x32xf32>
    %c0_2 = arith.constant 0 : index
    %c0_3 = arith.constant 0 : index
    %4 = vector.load %arg2[%c0_2, %c0_3] : memref<8x32xf32, #tpu.memory_space<vmem>>, vector<8x32xf32>
    %5 = arith.addf %3, %4 : vector<8x32xf32>
    %c0_4 = arith.constant 0 : index
    %c0_5 = arith.constant 0 : index
    %6 = vector.load %arg3[%c0_4, %c0_5] : memref<8x8xf32, #tpu.memory_space<vmem>>, vector<8x8xf32>
    %c0_6 = arith.constant 0 : index
    %c0_7 = arith.constant 0 : index
    %c0_8 = arith.constant 0 : index
    %7 = vector.load %arg8[%c0_6, %c0_7, %c0_8] : memref<2x8x128xf32, #tpu.memory_space<vmem>>, vector<1x8x128xf32>
    %8 = vector.shape_cast %7 : vector<1x8x128xf32> to vector<8x128xf32>
    %9 = vector.extract_strided_slice %8 {offsets = [0, 0], sizes = [1, 96], strides = [1, 1]} : vector<8x128xf32> to vector<1x96xf32>
    %10 = vector.shape_cast %9 : vector<1x96xf32> to vector<96xf32>
    %11 = vector.extract_strided_slice %8 {offsets = [1, 0], sizes = [1, 32], strides = [1, 1]} : vector<8x128xf32> to vector<1x32xf32>
    %12 = vector.shape_cast %11 : vector<1x32xf32> to vector<32xf32>
    %13 = vector.extract_strided_slice %8 {offsets = [2, 0], sizes = [1, 32], strides = [1, 1]} : vector<8x128xf32> to vector<1x32xf32>
    %14 = vector.shape_cast %13 : vector<1x32xf32> to vector<32xf32>
    %15 = vector.extract_strided_slice %8 {offsets = [3, 0], sizes = [1, 32], strides = [1, 1]} : vector<8x128xf32> to vector<1x32xf32>
    %16 = vector.shape_cast %15 : vector<1x32xf32> to vector<32xf32>
    %17 = vector.extract_strided_slice %8 {offsets = [4, 0], sizes = [1, 64], strides = [1, 1]} : vector<8x128xf32> to vector<1x64xf32>
    %18 = vector.shape_cast %17 : vector<1x64xf32> to vector<64xf32>
    %19 = vector.extract_strided_slice %8 {offsets = [5, 0], sizes = [1, 32], strides = [1, 1]} : vector<8x128xf32> to vector<1x32xf32>
    %20 = vector.shape_cast %19 : vector<1x32xf32> to vector<32xf32>
    %21 = vector.extract_strided_slice %8 {offsets = [6, 0], sizes = [1, 32], strides = [1, 1]} : vector<8x128xf32> to vector<1x32xf32>
    %22 = vector.shape_cast %21 : vector<1x32xf32> to vector<32xf32>
    %23 = vector.extract_strided_slice %8 {offsets = [7, 0], sizes = [1, 32], strides = [1, 1]} : vector<8x128xf32> to vector<1x32xf32>
    %24 = vector.shape_cast %23 : vector<1x32xf32> to vector<32xf32>
    %c0_9 = arith.constant 0 : index
    %c0_10 = arith.constant 0 : index
    %c0_11 = arith.constant 0 : index
    %25 = vector.load %arg4[%c0_9, %c0_10, %c0_11] : memref<2x32x96xf32, #tpu.memory_space<vmem>>, vector<1x32x96xf32>
    %26 = vector.shape_cast %25 : vector<1x32x96xf32> to vector<32x96xf32>
    %cst_12 = arith.constant dense<0.000000e+00> : vector<8x96xf32>
    %27 = tpu.matmul %5, %26, %cst_12 {dimension_numbers = #tpu.dot_dimension_numbers<[1], [0], [0], [1], [0, 0, 1, 1], [], []>} : vector<8x32xf32>, vector<32x96xf32>, vector<8x96xf32> -> vector<8x96xf32>
    %28 = vector.shape_cast %10 : vector<96xf32> to vector<1x96xf32>
    %29 = vector.broadcast %28 : vector<1x96xf32> to vector<8x96xf32>
    %30 = arith.addf %27, %29 : vector<8x96xf32>
    %31 = vector.extract_strided_slice %30 {offsets = [0, 0], sizes = [8, 32], strides = [1, 1]} : vector<8x96xf32> to vector<8x32xf32>
    %32 = vector.extract_strided_slice %30 {offsets = [0, 32], sizes = [8, 32], strides = [1, 1]} : vector<8x96xf32> to vector<8x32xf32>
    %33 = vector.extract_strided_slice %30 {offsets = [0, 64], sizes = [8, 32], strides = [1, 1]} : vector<8x96xf32> to vector<8x32xf32>
    %34 = vector.extract_strided_slice %31 {offsets = [0, 0], sizes = [8, 8], strides = [1, 1]} : vector<8x32xf32> to vector<8x8xf32>
    %35 = vector.extract_strided_slice %32 {offsets = [0, 0], sizes = [8, 8], strides = [1, 1]} : vector<8x32xf32> to vector<8x8xf32>
    %36 = vector.extract_strided_slice %33 {offsets = [0, 0], sizes = [8, 8], strides = [1, 1]} : vector<8x32xf32> to vector<8x8xf32>
    "tpu.trace_start"() <{level = 10 : i32, message = "sk,tk->st"}> : () -> ()
    %cst_13 = arith.constant dense<0.000000e+00> : vector<8x8xf32>
    %37 = tpu.matmul %34, %35, %cst_13 {dimension_numbers = #tpu.dot_dimension_numbers<[1], [1], [0], [0], [0, 0, 1, 0], [], []>} : vector<8x8xf32>, vector<8x8xf32>, vector<8x8xf32> -> vector<8x8xf32>
    "tpu.trace_stop"() : () -> ()
    %38 = arith.addf %37, %6 : vector<8x8xf32>
    %cst_14 = arith.constant dense<0xFF800000> : vector<8xf32>
    %39 = vector.multi_reduction <maximumf>, %38, %cst_14 [1] : vector<8x8xf32> to vector<8xf32>
    %40 = vector.shape_cast %39 : vector<8xf32> to vector<8x1xf32>
    %41 = vector.broadcast %40 : vector<8x1xf32> to vector<8x8xf32>
    %42 = arith.subf %38, %41 : vector<8x8xf32>
    %43 = math.exp %42 : vector<8x8xf32>
    %cst_15 = arith.constant dense<0.000000e+00> : vector<8xf32>
    %44 = vector.multi_reduction <add>, %43, %cst_15 [1] : vector<8x8xf32> to vector<8xf32>
    %45 = vector.shape_cast %44 : vector<8xf32> to vector<8x1xf32>
    %46 = vector.broadcast %45 : vector<8x1xf32> to vector<8x8xf32>
    %47 = arith.divf %43, %46 : vector<8x8xf32>
    %cst_16 = arith.constant dense<0.000000e+00> : vector<8x8xf32>
    %48 = tpu.matmul %47, %36, %cst_16 {dimension_numbers = #tpu.dot_dimension_numbers<[1], [0], [0], [1], [0, 0, 1, 1], [], []>} : vector<8x8xf32>, vector<8x8xf32>, vector<8x8xf32> -> vector<8x8xf32>
    %49 = vector.extract_strided_slice %31 {offsets = [0, 8], sizes = [8, 8], strides = [1, 1]} : vector<8x32xf32> to vector<8x8xf32>
    %50 = vector.extract_strided_slice %32 {offsets = [0, 8], sizes = [8, 8], strides = [1, 1]} : vector<8x32xf32> to vector<8x8xf32>
    %51 = vector.extract_strided_slice %33 {offsets = [0, 8], sizes = [8, 8], strides = [1, 1]} : vector<8x32xf32> to vector<8x8xf32>
    "tpu.trace_start"() <{level = 10 : i32, message = "sk,tk->st"}> : () -> ()
    %cst_17 = arith.constant dense<0.000000e+00> : vector<8x8xf32>
    %52 = tpu.matmul %49, %50, %cst_17 {dimension_numbers = #tpu.dot_dimension_numbers<[1], [1], [0], [0], [0, 0, 1, 0], [], []>} : vector<8x8xf32>, vector<8x8xf32>, vector<8x8xf32> -> vector<8x8xf32>
    "tpu.trace_stop"() : () -> ()
    %53 = arith.addf %52, %6 : vector<8x8xf32>
    %cst_18 = arith.constant dense<0xFF800000> : vector<8xf32>
    %54 = vector.multi_reduction <maximumf>, %53, %cst_18 [1] : vector<8x8xf32> to vector<8xf32>
    %55 = vector.shape_cast %54 : vector<8xf32> to vector<8x1xf32>
    %56 = vector.broadcast %55 : vector<8x1xf32> to vector<8x8xf32>
    %57 = arith.subf %53, %56 : vector<8x8xf32>
    %58 = math.exp %57 : vector<8x8xf32>
    %cst_19 = arith.constant dense<0.000000e+00> : vector<8xf32>
    %59 = vector.multi_reduction <add>, %58, %cst_19 [1] : vector<8x8xf32> to vector<8xf32>
    %60 = vector.shape_cast %59 : vector<8xf32> to vector<8x1xf32>
    %61 = vector.broadcast %60 : vector<8x1xf32> to vector<8x8xf32>
    %62 = arith.divf %58, %61 : vector<8x8xf32>
    %cst_20 = arith.constant dense<0.000000e+00> : vector<8x8xf32>
    %63 = tpu.matmul %62, %51, %cst_20 {dimension_numbers = #tpu.dot_dimension_numbers<[1], [0], [0], [1], [0, 0, 1, 1], [], []>} : vector<8x8xf32>, vector<8x8xf32>, vector<8x8xf32> -> vector<8x8xf32>
    %64 = vector.extract_strided_slice %31 {offsets = [0, 16], sizes = [8, 8], strides = [1, 1]} : vector<8x32xf32> to vector<8x8xf32>
    %65 = vector.extract_strided_slice %32 {offsets = [0, 16], sizes = [8, 8], strides = [1, 1]} : vector<8x32xf32> to vector<8x8xf32>
    %66 = vector.extract_strided_slice %33 {offsets = [0, 16], sizes = [8, 8], strides = [1, 1]} : vector<8x32xf32> to vector<8x8xf32>
    "tpu.trace_start"() <{level = 10 : i32, message = "sk,tk->st"}> : () -> ()
    %cst_21 = arith.constant dense<0.000000e+00> : vector<8x8xf32>
    %67 = tpu.matmul %64, %65, %cst_21 {dimension_numbers = #tpu.dot_dimension_numbers<[1], [1], [0], [0], [0, 0, 1, 0], [], []>} : vector<8x8xf32>, vector<8x8xf32>, vector<8x8xf32> -> vector<8x8xf32>
    "tpu.trace_stop"() : () -> ()
    %68 = arith.addf %67, %6 : vector<8x8xf32>
    %cst_22 = arith.constant dense<0xFF800000> : vector<8xf32>
    %69 = vector.multi_reduction <maximumf>, %68, %cst_22 [1] : vector<8x8xf32> to vector<8xf32>
    %70 = vector.shape_cast %69 : vector<8xf32> to vector<8x1xf32>
    %71 = vector.broadcast %70 : vector<8x1xf32> to vector<8x8xf32>
    %72 = arith.subf %68, %71 : vector<8x8xf32>
    %73 = math.exp %72 : vector<8x8xf32>
    %cst_23 = arith.constant dense<0.000000e+00> : vector<8xf32>
    %74 = vector.multi_reduction <add>, %73, %cst_23 [1] : vector<8x8xf32> to vector<8xf32>
    %75 = vector.shape_cast %74 : vector<8xf32> to vector<8x1xf32>
    %76 = vector.broadcast %75 : vector<8x1xf32> to vector<8x8xf32>
    %77 = arith.divf %73, %76 : vector<8x8xf32>
    %cst_24 = arith.constant dense<0.000000e+00> : vector<8x8xf32>
    %78 = tpu.matmul %77, %66, %cst_24 {dimension_numbers = #tpu.dot_dimension_numbers<[1], [0], [0], [1], [0, 0, 1, 1], [], []>} : vector<8x8xf32>, vector<8x8xf32>, vector<8x8xf32> -> vector<8x8xf32>
    %79 = vector.extract_strided_slice %31 {offsets = [0, 24], sizes = [8, 8], strides = [1, 1]} : vector<8x32xf32> to vector<8x8xf32>
    %80 = vector.extract_strided_slice %32 {offsets = [0, 24], sizes = [8, 8], strides = [1, 1]} : vector<8x32xf32> to vector<8x8xf32>
    %81 = vector.extract_strided_slice %33 {offsets = [0, 24], sizes = [8, 8], strides = [1, 1]} : vector<8x32xf32> to vector<8x8xf32>
    "tpu.trace_start"() <{level = 10 : i32, message = "sk,tk->st"}> : () -> ()
    %cst_25 = arith.constant dense<0.000000e+00> : vector<8x8xf32>
    %82 = tpu.matmul %79, %80, %cst_25 {dimension_numbers = #tpu.dot_dimension_numbers<[1], [1], [0], [0], [0, 0, 1, 0], [], []>} : vector<8x8xf32>, vector<8x8xf32>, vector<8x8xf32> -> vector<8x8xf32>
    "tpu.trace_stop"() : () -> ()
    %83 = arith.addf %82, %6 : vector<8x8xf32>
    %cst_26 = arith.constant dense<0xFF800000> : vector<8xf32>
    %84 = vector.multi_reduction <maximumf>, %83, %cst_26 [1] : vector<8x8xf32> to vector<8xf32>
    %85 = vector.shape_cast %84 : vector<8xf32> to vector<8x1xf32>
    %86 = vector.broadcast %85 : vector<8x1xf32> to vector<8x8xf32>
    %87 = arith.subf %83, %86 : vector<8x8xf32>
    %88 = math.exp %87 : vector<8x8xf32>
    %cst_27 = arith.constant dense<0.000000e+00> : vector<8xf32>
    %89 = vector.multi_reduction <add>, %88, %cst_27 [1] : vector<8x8xf32> to vector<8xf32>
    %90 = vector.shape_cast %89 : vector<8xf32> to vector<8x1xf32>
    %91 = vector.broadcast %90 : vector<8x1xf32> to vector<8x8xf32>
    %92 = arith.divf %88, %91 : vector<8x8xf32>
    %cst_28 = arith.constant dense<0.000000e+00> : vector<8x8xf32>
    %93 = tpu.matmul %92, %81, %cst_28 {dimension_numbers = #tpu.dot_dimension_numbers<[1], [0], [0], [1], [0, 0, 1, 1], [], []>} : vector<8x8xf32>, vector<8x8xf32>, vector<8x8xf32> -> vector<8x8xf32>
    %94 = tpu.concatenate %48, %63, %78, %93 in 1 : vector<8x8xf32>, vector<8x8xf32>, vector<8x8xf32>, vector<8x8xf32> -> vector<8x32xf32>
    %c0_29 = arith.constant 0 : index
    %c0_30 = arith.constant 0 : index
    %c0_31 = arith.constant 0 : index
    %95 = vector.load %arg5[%c0_29, %c0_30, %c0_31] : memref<2x32x32xf32, #tpu.memory_space<vmem>>, vector<1x32x32xf32>
    %96 = vector.shape_cast %95 : vector<1x32x32xf32> to vector<32x32xf32>
    %cst_32 = arith.constant dense<0.000000e+00> : vector<8x32xf32>
    %97 = tpu.matmul %94, %96, %cst_32 {dimension_numbers = #tpu.dot_dimension_numbers<[1], [0], [0], [1], [0, 0, 1, 1], [], []>} : vector<8x32xf32>, vector<32x32xf32>, vector<8x32xf32> -> vector<8x32xf32>
    %98 = vector.shape_cast %12 : vector<32xf32> to vector<1x32xf32>
    %99 = vector.broadcast %98 : vector<1x32xf32> to vector<8x32xf32>
    %100 = arith.addf %97, %99 : vector<8x32xf32>
    %101 = arith.addf %5, %100 : vector<8x32xf32>
    %cst_33 = arith.constant dense<0.000000e+00> : vector<8xf32>
    %102 = vector.multi_reduction <add>, %101, %cst_33 [1] : vector<8x32xf32> to vector<8xf32>
    %103 = vector.shape_cast %102 : vector<8xf32> to vector<8x1xf32>
    %cst_34 = arith.constant 3.200000e+01 : f32
    %104 = vector.broadcast %cst_34 : f32 to vector<8x1xf32>
    %105 = arith.divf %103, %104 : vector<8x1xf32>
    %106 = vector.broadcast %105 : vector<8x1xf32> to vector<8x32xf32>
    %107 = arith.subf %101, %106 : vector<8x32xf32>
    %108 = arith.mulf %107, %107 : vector<8x32xf32>
    %cst_35 = arith.constant dense<0.000000e+00> : vector<8xf32>
    %109 = vector.multi_reduction <add>, %108, %cst_35 [1] : vector<8x32xf32> to vector<8xf32>
    %110 = vector.shape_cast %109 : vector<8xf32> to vector<8x1xf32>
    %cst_36 = arith.constant 3.200000e+01 : f32
    %111 = vector.broadcast %cst_36 : f32 to vector<8x1xf32>
    %112 = arith.divf %110, %111 : vector<8x1xf32>
    %113 = vector.broadcast %105 : vector<8x1xf32> to vector<8x32xf32>
    %114 = arith.subf %101, %113 : vector<8x32xf32>
    %cst_37 = arith.constant 9.99999974E-6 : f32
    %115 = vector.broadcast %cst_37 : f32 to vector<8x1xf32>
    %116 = arith.addf %112, %115 : vector<8x1xf32>
    %117 = math.rsqrt %116 : vector<8x1xf32>
    %118 = vector.broadcast %117 : vector<8x1xf32> to vector<8x32xf32>
    %119 = arith.mulf %114, %118 : vector<8x32xf32>
    %120 = vector.shape_cast %14 : vector<32xf32> to vector<1x32xf32>
    %121 = vector.broadcast %120 : vector<1x32xf32> to vector<8x32xf32>
    %122 = arith.mulf %119, %121 : vector<8x32xf32>
    %123 = vector.shape_cast %16 : vector<32xf32> to vector<1x32xf32>
    %124 = vector.broadcast %123 : vector<1x32xf32> to vector<8x32xf32>
    %125 = arith.addf %122, %124 : vector<8x32xf32>
    %c0_38 = arith.constant 0 : index
    %c0_39 = arith.constant 0 : index
    %c0_40 = arith.constant 0 : index
    %126 = vector.load %arg6[%c0_38, %c0_39, %c0_40] : memref<2x32x64xf32, #tpu.memory_space<vmem>>, vector<1x32x64xf32>
    %127 = vector.shape_cast %126 : vector<1x32x64xf32> to vector<32x64xf32>
    %cst_41 = arith.constant dense<0.000000e+00> : vector<8x64xf32>
    %128 = tpu.matmul %125, %127, %cst_41 {dimension_numbers = #tpu.dot_dimension_numbers<[1], [0], [0], [1], [0, 0, 1, 1], [], []>} : vector<8x32xf32>, vector<32x64xf32>, vector<8x64xf32> -> vector<8x64xf32>
    %129 = vector.shape_cast %18 : vector<64xf32> to vector<1x64xf32>
    %130 = vector.broadcast %129 : vector<1x64xf32> to vector<8x64xf32>
    %131 = arith.addf %128, %130 : vector<8x64xf32>
    %cst_42 = arith.constant 0.000000e+00 : f32
    %132 = vector.broadcast %cst_42 : f32 to vector<8x64xf32>
    %133 = arith.maximumf %131, %132 : vector<8x64xf32>
    %c0_43 = arith.constant 0 : index
    %c0_44 = arith.constant 0 : index
    %c0_45 = arith.constant 0 : index
    %134 = vector.load %arg7[%c0_43, %c0_44, %c0_45] : memref<2x64x32xf32, #tpu.memory_space<vmem>>, vector<1x64x32xf32>
    %135 = vector.shape_cast %134 : vector<1x64x32xf32> to vector<64x32xf32>
    %cst_46 = arith.constant dense<0.000000e+00> : vector<8x32xf32>
    %136 = tpu.matmul %133, %135, %cst_46 {dimension_numbers = #tpu.dot_dimension_numbers<[1], [0], [0], [1], [0, 0, 1, 1], [], []>} : vector<8x64xf32>, vector<64x32xf32>, vector<8x32xf32> -> vector<8x32xf32>
    %137 = vector.shape_cast %20 : vector<32xf32> to vector<1x32xf32>
    %138 = vector.broadcast %137 : vector<1x32xf32> to vector<8x32xf32>
    %139 = arith.addf %136, %138 : vector<8x32xf32>
    %140 = arith.addf %125, %139 : vector<8x32xf32>
    %cst_47 = arith.constant dense<0.000000e+00> : vector<8xf32>
    %141 = vector.multi_reduction <add>, %140, %cst_47 [1] : vector<8x32xf32> to vector<8xf32>
    %142 = vector.shape_cast %141 : vector<8xf32> to vector<8x1xf32>
    %cst_48 = arith.constant 3.200000e+01 : f32
    %143 = vector.broadcast %cst_48 : f32 to vector<8x1xf32>
    %144 = arith.divf %142, %143 : vector<8x1xf32>
    %145 = vector.broadcast %144 : vector<8x1xf32> to vector<8x32xf32>
    %146 = arith.subf %140, %145 : vector<8x32xf32>
    %147 = arith.mulf %146, %146 : vector<8x32xf32>
    %cst_49 = arith.constant dense<0.000000e+00> : vector<8xf32>
    %148 = vector.multi_reduction <add>, %147, %cst_49 [1] : vector<8x32xf32> to vector<8xf32>
    %149 = vector.shape_cast %148 : vector<8xf32> to vector<8x1xf32>
    %cst_50 = arith.constant 3.200000e+01 : f32
    %150 = vector.broadcast %cst_50 : f32 to vector<8x1xf32>
    %151 = arith.divf %149, %150 : vector<8x1xf32>
    %152 = vector.broadcast %144 : vector<8x1xf32> to vector<8x32xf32>
    %153 = arith.subf %140, %152 : vector<8x32xf32>
    %cst_51 = arith.constant 9.99999974E-6 : f32
    %154 = vector.broadcast %cst_51 : f32 to vector<8x1xf32>
    %155 = arith.addf %151, %154 : vector<8x1xf32>
    %156 = math.rsqrt %155 : vector<8x1xf32>
    %157 = vector.broadcast %156 : vector<8x1xf32> to vector<8x32xf32>
    %158 = arith.mulf %153, %157 : vector<8x32xf32>
    %159 = vector.shape_cast %22 : vector<32xf32> to vector<1x32xf32>
    %160 = vector.broadcast %159 : vector<1x32xf32> to vector<8x32xf32>
    %161 = arith.mulf %158, %160 : vector<8x32xf32>
    %162 = vector.shape_cast %24 : vector<32xf32> to vector<1x32xf32>
    %163 = vector.broadcast %162 : vector<1x32xf32> to vector<8x32xf32>
    %164 = arith.addf %161, %163 : vector<8x32xf32>
    %c1 = arith.constant 1 : index
    %c0_52 = arith.constant 0 : index
    %c0_53 = arith.constant 0 : index
    %165 = vector.load %arg8[%c1, %c0_52, %c0_53] : memref<2x8x128xf32, #tpu.memory_space<vmem>>, vector<1x8x128xf32>
    %166 = vector.shape_cast %165 : vector<1x8x128xf32> to vector<8x128xf32>
    %167 = vector.extract_strided_slice %166 {offsets = [0, 0], sizes = [1, 96], strides = [1, 1]} : vector<8x128xf32> to vector<1x96xf32>
    %168 = vector.shape_cast %167 : vector<1x96xf32> to vector<96xf32>
    %169 = vector.extract_strided_slice %166 {offsets = [1, 0], sizes = [1, 32], strides = [1, 1]} : vector<8x128xf32> to vector<1x32xf32>
    %170 = vector.shape_cast %169 : vector<1x32xf32> to vector<32xf32>
    %171 = vector.extract_strided_slice %166 {offsets = [2, 0], sizes = [1, 32], strides = [1, 1]} : vector<8x128xf32> to vector<1x32xf32>
    %172 = vector.shape_cast %171 : vector<1x32xf32> to vector<32xf32>
    %173 = vector.extract_strided_slice %166 {offsets = [3, 0], sizes = [1, 32], strides = [1, 1]} : vector<8x128xf32> to vector<1x32xf32>
    %174 = vector.shape_cast %173 : vector<1x32xf32> to vector<32xf32>
    %175 = vector.extract_strided_slice %166 {offsets = [4, 0], sizes = [1, 64], strides = [1, 1]} : vector<8x128xf32> to vector<1x64xf32>
    %176 = vector.shape_cast %175 : vector<1x64xf32> to vector<64xf32>
    %177 = vector.extract_strided_slice %166 {offsets = [5, 0], sizes = [1, 32], strides = [1, 1]} : vector<8x128xf32> to vector<1x32xf32>
    %178 = vector.shape_cast %177 : vector<1x32xf32> to vector<32xf32>
    %179 = vector.extract_strided_slice %166 {offsets = [6, 0], sizes = [1, 32], strides = [1, 1]} : vector<8x128xf32> to vector<1x32xf32>
    %180 = vector.shape_cast %179 : vector<1x32xf32> to vector<32xf32>
    %181 = vector.extract_strided_slice %166 {offsets = [7, 0], sizes = [1, 32], strides = [1, 1]} : vector<8x128xf32> to vector<1x32xf32>
    %182 = vector.shape_cast %181 : vector<1x32xf32> to vector<32xf32>
    %c1_54 = arith.constant 1 : index
    %c0_55 = arith.constant 0 : index
    %c0_56 = arith.constant 0 : index
    %183 = vector.load %arg4[%c1_54, %c0_55, %c0_56] : memref<2x32x96xf32, #tpu.memory_space<vmem>>, vector<1x32x96xf32>
    %184 = vector.shape_cast %183 : vector<1x32x96xf32> to vector<32x96xf32>
    %cst_57 = arith.constant dense<0.000000e+00> : vector<8x96xf32>
    %185 = tpu.matmul %164, %184, %cst_57 {dimension_numbers = #tpu.dot_dimension_numbers<[1], [0], [0], [1], [0, 0, 1, 1], [], []>} : vector<8x32xf32>, vector<32x96xf32>, vector<8x96xf32> -> vector<8x96xf32>
    %186 = vector.shape_cast %168 : vector<96xf32> to vector<1x96xf32>
    %187 = vector.broadcast %186 : vector<1x96xf32> to vector<8x96xf32>
    %188 = arith.addf %185, %187 : vector<8x96xf32>
    %189 = vector.extract_strided_slice %188 {offsets = [0, 0], sizes = [8, 32], strides = [1, 1]} : vector<8x96xf32> to vector<8x32xf32>
    %190 = vector.extract_strided_slice %188 {offsets = [0, 32], sizes = [8, 32], strides = [1, 1]} : vector<8x96xf32> to vector<8x32xf32>
    %191 = vector.extract_strided_slice %188 {offsets = [0, 64], sizes = [8, 32], strides = [1, 1]} : vector<8x96xf32> to vector<8x32xf32>
    %192 = vector.extract_strided_slice %189 {offsets = [0, 0], sizes = [8, 8], strides = [1, 1]} : vector<8x32xf32> to vector<8x8xf32>
    %193 = vector.extract_strided_slice %190 {offsets = [0, 0], sizes = [8, 8], strides = [1, 1]} : vector<8x32xf32> to vector<8x8xf32>
    %194 = vector.extract_strided_slice %191 {offsets = [0, 0], sizes = [8, 8], strides = [1, 1]} : vector<8x32xf32> to vector<8x8xf32>
    "tpu.trace_start"() <{level = 10 : i32, message = "sk,tk->st"}> : () -> ()
    %cst_58 = arith.constant dense<0.000000e+00> : vector<8x8xf32>
    %195 = tpu.matmul %192, %193, %cst_58 {dimension_numbers = #tpu.dot_dimension_numbers<[1], [1], [0], [0], [0, 0, 1, 0], [], []>} : vector<8x8xf32>, vector<8x8xf32>, vector<8x8xf32> -> vector<8x8xf32>
    "tpu.trace_stop"() : () -> ()
    %196 = arith.addf %195, %6 : vector<8x8xf32>
    %cst_59 = arith.constant dense<0xFF800000> : vector<8xf32>
    %197 = vector.multi_reduction <maximumf>, %196, %cst_59 [1] : vector<8x8xf32> to vector<8xf32>
    %198 = vector.shape_cast %197 : vector<8xf32> to vector<8x1xf32>
    %199 = vector.broadcast %198 : vector<8x1xf32> to vector<8x8xf32>
    %200 = arith.subf %196, %199 : vector<8x8xf32>
    %201 = math.exp %200 : vector<8x8xf32>
    %cst_60 = arith.constant dense<0.000000e+00> : vector<8xf32>
    %202 = vector.multi_reduction <add>, %201, %cst_60 [1] : vector<8x8xf32> to vector<8xf32>
    %203 = vector.shape_cast %202 : vector<8xf32> to vector<8x1xf32>
    %204 = vector.broadcast %203 : vector<8x1xf32> to vector<8x8xf32>
    %205 = arith.divf %201, %204 : vector<8x8xf32>
    %cst_61 = arith.constant dense<0.000000e+00> : vector<8x8xf32>
    %206 = tpu.matmul %205, %194, %cst_61 {dimension_numbers = #tpu.dot_dimension_numbers<[1], [0], [0], [1], [0, 0, 1, 1], [], []>} : vector<8x8xf32>, vector<8x8xf32>, vector<8x8xf32> -> vector<8x8xf32>
    %207 = vector.extract_strided_slice %189 {offsets = [0, 8], sizes = [8, 8], strides = [1, 1]} : vector<8x32xf32> to vector<8x8xf32>
    %208 = vector.extract_strided_slice %190 {offsets = [0, 8], sizes = [8, 8], strides = [1, 1]} : vector<8x32xf32> to vector<8x8xf32>
    %209 = vector.extract_strided_slice %191 {offsets = [0, 8], sizes = [8, 8], strides = [1, 1]} : vector<8x32xf32> to vector<8x8xf32>
    "tpu.trace_start"() <{level = 10 : i32, message = "sk,tk->st"}> : () -> ()
    %cst_62 = arith.constant dense<0.000000e+00> : vector<8x8xf32>
    %210 = tpu.matmul %207, %208, %cst_62 {dimension_numbers = #tpu.dot_dimension_numbers<[1], [1], [0], [0], [0, 0, 1, 0], [], []>} : vector<8x8xf32>, vector<8x8xf32>, vector<8x8xf32> -> vector<8x8xf32>
    "tpu.trace_stop"() : () -> ()
    %211 = arith.addf %210, %6 : vector<8x8xf32>
    %cst_63 = arith.constant dense<0xFF800000> : vector<8xf32>
    %212 = vector.multi_reduction <maximumf>, %211, %cst_63 [1] : vector<8x8xf32> to vector<8xf32>
    %213 = vector.shape_cast %212 : vector<8xf32> to vector<8x1xf32>
    %214 = vector.broadcast %213 : vector<8x1xf32> to vector<8x8xf32>
    %215 = arith.subf %211, %214 : vector<8x8xf32>
    %216 = math.exp %215 : vector<8x8xf32>
    %cst_64 = arith.constant dense<0.000000e+00> : vector<8xf32>
    %217 = vector.multi_reduction <add>, %216, %cst_64 [1] : vector<8x8xf32> to vector<8xf32>
    %218 = vector.shape_cast %217 : vector<8xf32> to vector<8x1xf32>
    %219 = vector.broadcast %218 : vector<8x1xf32> to vector<8x8xf32>
    %220 = arith.divf %216, %219 : vector<8x8xf32>
    %cst_65 = arith.constant dense<0.000000e+00> : vector<8x8xf32>
    %221 = tpu.matmul %220, %209, %cst_65 {dimension_numbers = #tpu.dot_dimension_numbers<[1], [0], [0], [1], [0, 0, 1, 1], [], []>} : vector<8x8xf32>, vector<8x8xf32>, vector<8x8xf32> -> vector<8x8xf32>
    %222 = vector.extract_strided_slice %189 {offsets = [0, 16], sizes = [8, 8], strides = [1, 1]} : vector<8x32xf32> to vector<8x8xf32>
    %223 = vector.extract_strided_slice %190 {offsets = [0, 16], sizes = [8, 8], strides = [1, 1]} : vector<8x32xf32> to vector<8x8xf32>
    %224 = vector.extract_strided_slice %191 {offsets = [0, 16], sizes = [8, 8], strides = [1, 1]} : vector<8x32xf32> to vector<8x8xf32>
    "tpu.trace_start"() <{level = 10 : i32, message = "sk,tk->st"}> : () -> ()
    %cst_66 = arith.constant dense<0.000000e+00> : vector<8x8xf32>
    %225 = tpu.matmul %222, %223, %cst_66 {dimension_numbers = #tpu.dot_dimension_numbers<[1], [1], [0], [0], [0, 0, 1, 0], [], []>} : vector<8x8xf32>, vector<8x8xf32>, vector<8x8xf32> -> vector<8x8xf32>
    "tpu.trace_stop"() : () -> ()
    %226 = arith.addf %225, %6 : vector<8x8xf32>
    %cst_67 = arith.constant dense<0xFF800000> : vector<8xf32>
    %227 = vector.multi_reduction <maximumf>, %226, %cst_67 [1] : vector<8x8xf32> to vector<8xf32>
    %228 = vector.shape_cast %227 : vector<8xf32> to vector<8x1xf32>
    %229 = vector.broadcast %228 : vector<8x1xf32> to vector<8x8xf32>
    %230 = arith.subf %226, %229 : vector<8x8xf32>
    %231 = math.exp %230 : vector<8x8xf32>
    %cst_68 = arith.constant dense<0.000000e+00> : vector<8xf32>
    %232 = vector.multi_reduction <add>, %231, %cst_68 [1] : vector<8x8xf32> to vector<8xf32>
    %233 = vector.shape_cast %232 : vector<8xf32> to vector<8x1xf32>
    %234 = vector.broadcast %233 : vector<8x1xf32> to vector<8x8xf32>
    %235 = arith.divf %231, %234 : vector<8x8xf32>
    %cst_69 = arith.constant dense<0.000000e+00> : vector<8x8xf32>
    %236 = tpu.matmul %235, %224, %cst_69 {dimension_numbers = #tpu.dot_dimension_numbers<[1], [0], [0], [1], [0, 0, 1, 1], [], []>} : vector<8x8xf32>, vector<8x8xf32>, vector<8x8xf32> -> vector<8x8xf32>
    %237 = vector.extract_strided_slice %189 {offsets = [0, 24], sizes = [8, 8], strides = [1, 1]} : vector<8x32xf32> to vector<8x8xf32>
    %238 = vector.extract_strided_slice %190 {offsets = [0, 24], sizes = [8, 8], strides = [1, 1]} : vector<8x32xf32> to vector<8x8xf32>
    %239 = vector.extract_strided_slice %191 {offsets = [0, 24], sizes = [8, 8], strides = [1, 1]} : vector<8x32xf32> to vector<8x8xf32>
    "tpu.trace_start"() <{level = 10 : i32, message = "sk,tk->st"}> : () -> ()
    %cst_70 = arith.constant dense<0.000000e+00> : vector<8x8xf32>
    %240 = tpu.matmul %237, %238, %cst_70 {dimension_numbers = #tpu.dot_dimension_numbers<[1], [1], [0], [0], [0, 0, 1, 0], [], []>} : vector<8x8xf32>, vector<8x8xf32>, vector<8x8xf32> -> vector<8x8xf32>
    "tpu.trace_stop"() : () -> ()
    %241 = arith.addf %240, %6 : vector<8x8xf32>
    %cst_71 = arith.constant dense<0xFF800000> : vector<8xf32>
    %242 = vector.multi_reduction <maximumf>, %241, %cst_71 [1] : vector<8x8xf32> to vector<8xf32>
    %243 = vector.shape_cast %242 : vector<8xf32> to vector<8x1xf32>
    %244 = vector.broadcast %243 : vector<8x1xf32> to vector<8x8xf32>
    %245 = arith.subf %241, %244 : vector<8x8xf32>
    %246 = math.exp %245 : vector<8x8xf32>
    %cst_72 = arith.constant dense<0.000000e+00> : vector<8xf32>
    %247 = vector.multi_reduction <add>, %246, %cst_72 [1] : vector<8x8xf32> to vector<8xf32>
    %248 = vector.shape_cast %247 : vector<8xf32> to vector<8x1xf32>
    %249 = vector.broadcast %248 : vector<8x1xf32> to vector<8x8xf32>
    %250 = arith.divf %246, %249 : vector<8x8xf32>
    %cst_73 = arith.constant dense<0.000000e+00> : vector<8x8xf32>
    %251 = tpu.matmul %250, %239, %cst_73 {dimension_numbers = #tpu.dot_dimension_numbers<[1], [0], [0], [1], [0, 0, 1, 1], [], []>} : vector<8x8xf32>, vector<8x8xf32>, vector<8x8xf32> -> vector<8x8xf32>
    %252 = tpu.concatenate %206, %221, %236, %251 in 1 : vector<8x8xf32>, vector<8x8xf32>, vector<8x8xf32>, vector<8x8xf32> -> vector<8x32xf32>
    %c1_74 = arith.constant 1 : index
    %c0_75 = arith.constant 0 : index
    %c0_76 = arith.constant 0 : index
    %253 = vector.load %arg5[%c1_74, %c0_75, %c0_76] : memref<2x32x32xf32, #tpu.memory_space<vmem>>, vector<1x32x32xf32>
    %254 = vector.shape_cast %253 : vector<1x32x32xf32> to vector<32x32xf32>
    %cst_77 = arith.constant dense<0.000000e+00> : vector<8x32xf32>
    %255 = tpu.matmul %252, %254, %cst_77 {dimension_numbers = #tpu.dot_dimension_numbers<[1], [0], [0], [1], [0, 0, 1, 1], [], []>} : vector<8x32xf32>, vector<32x32xf32>, vector<8x32xf32> -> vector<8x32xf32>
    %256 = vector.shape_cast %170 : vector<32xf32> to vector<1x32xf32>
    %257 = vector.broadcast %256 : vector<1x32xf32> to vector<8x32xf32>
    %258 = arith.addf %255, %257 : vector<8x32xf32>
    %259 = arith.addf %164, %258 : vector<8x32xf32>
    %cst_78 = arith.constant dense<0.000000e+00> : vector<8xf32>
    %260 = vector.multi_reduction <add>, %259, %cst_78 [1] : vector<8x32xf32> to vector<8xf32>
    %261 = vector.shape_cast %260 : vector<8xf32> to vector<8x1xf32>
    %cst_79 = arith.constant 3.200000e+01 : f32
    %262 = vector.broadcast %cst_79 : f32 to vector<8x1xf32>
    %263 = arith.divf %261, %262 : vector<8x1xf32>
    %264 = vector.broadcast %263 : vector<8x1xf32> to vector<8x32xf32>
    %265 = arith.subf %259, %264 : vector<8x32xf32>
    %266 = arith.mulf %265, %265 : vector<8x32xf32>
    %cst_80 = arith.constant dense<0.000000e+00> : vector<8xf32>
    %267 = vector.multi_reduction <add>, %266, %cst_80 [1] : vector<8x32xf32> to vector<8xf32>
    %268 = vector.shape_cast %267 : vector<8xf32> to vector<8x1xf32>
    %cst_81 = arith.constant 3.200000e+01 : f32
    %269 = vector.broadcast %cst_81 : f32 to vector<8x1xf32>
    %270 = arith.divf %268, %269 : vector<8x1xf32>
    %271 = vector.broadcast %263 : vector<8x1xf32> to vector<8x32xf32>
    %272 = arith.subf %259, %271 : vector<8x32xf32>
    %cst_82 = arith.constant 9.99999974E-6 : f32
    %273 = vector.broadcast %cst_82 : f32 to vector<8x1xf32>
    %274 = arith.addf %270, %273 : vector<8x1xf32>
    %275 = math.rsqrt %274 : vector<8x1xf32>
    %276 = vector.broadcast %275 : vector<8x1xf32> to vector<8x32xf32>
    %277 = arith.mulf %272, %276 : vector<8x32xf32>
    %278 = vector.shape_cast %172 : vector<32xf32> to vector<1x32xf32>
    %279 = vector.broadcast %278 : vector<1x32xf32> to vector<8x32xf32>
    %280 = arith.mulf %277, %279 : vector<8x32xf32>
    %281 = vector.shape_cast %174 : vector<32xf32> to vector<1x32xf32>
    %282 = vector.broadcast %281 : vector<1x32xf32> to vector<8x32xf32>
    %283 = arith.addf %280, %282 : vector<8x32xf32>
    %c1_83 = arith.constant 1 : index
    %c0_84 = arith.constant 0 : index
    %c0_85 = arith.constant 0 : index
    %284 = vector.load %arg6[%c1_83, %c0_84, %c0_85] : memref<2x32x64xf32, #tpu.memory_space<vmem>>, vector<1x32x64xf32>
    %285 = vector.shape_cast %284 : vector<1x32x64xf32> to vector<32x64xf32>
    %cst_86 = arith.constant dense<0.000000e+00> : vector<8x64xf32>
    %286 = tpu.matmul %283, %285, %cst_86 {dimension_numbers = #tpu.dot_dimension_numbers<[1], [0], [0], [1], [0, 0, 1, 1], [], []>} : vector<8x32xf32>, vector<32x64xf32>, vector<8x64xf32> -> vector<8x64xf32>
    %287 = vector.shape_cast %176 : vector<64xf32> to vector<1x64xf32>
    %288 = vector.broadcast %287 : vector<1x64xf32> to vector<8x64xf32>
    %289 = arith.addf %286, %288 : vector<8x64xf32>
    %cst_87 = arith.constant 0.000000e+00 : f32
    %290 = vector.broadcast %cst_87 : f32 to vector<8x64xf32>
    %291 = arith.maximumf %289, %290 : vector<8x64xf32>
    %c1_88 = arith.constant 1 : index
    %c0_89 = arith.constant 0 : index
    %c0_90 = arith.constant 0 : index
    %292 = vector.load %arg7[%c1_88, %c0_89, %c0_90] : memref<2x64x32xf32, #tpu.memory_space<vmem>>, vector<1x64x32xf32>
    %293 = vector.shape_cast %292 : vector<1x64x32xf32> to vector<64x32xf32>
    %cst_91 = arith.constant dense<0.000000e+00> : vector<8x32xf32>
    %294 = tpu.matmul %291, %293, %cst_91 {dimension_numbers = #tpu.dot_dimension_numbers<[1], [0], [0], [1], [0, 0, 1, 1], [], []>} : vector<8x64xf32>, vector<64x32xf32>, vector<8x32xf32> -> vector<8x32xf32>
    %295 = vector.shape_cast %178 : vector<32xf32> to vector<1x32xf32>
    %296 = vector.broadcast %295 : vector<1x32xf32> to vector<8x32xf32>
    %297 = arith.addf %294, %296 : vector<8x32xf32>
    %298 = arith.addf %283, %297 : vector<8x32xf32>
    %cst_92 = arith.constant dense<0.000000e+00> : vector<8xf32>
    %299 = vector.multi_reduction <add>, %298, %cst_92 [1] : vector<8x32xf32> to vector<8xf32>
    %300 = vector.shape_cast %299 : vector<8xf32> to vector<8x1xf32>
    %cst_93 = arith.constant 3.200000e+01 : f32
    %301 = vector.broadcast %cst_93 : f32 to vector<8x1xf32>
    %302 = arith.divf %300, %301 : vector<8x1xf32>
    %303 = vector.broadcast %302 : vector<8x1xf32> to vector<8x32xf32>
    %304 = arith.subf %298, %303 : vector<8x32xf32>
    %305 = arith.mulf %304, %304 : vector<8x32xf32>
    %cst_94 = arith.constant dense<0.000000e+00> : vector<8xf32>
    %306 = vector.multi_reduction <add>, %305, %cst_94 [1] : vector<8x32xf32> to vector<8xf32>
    %307 = vector.shape_cast %306 : vector<8xf32> to vector<8x1xf32>
    %cst_95 = arith.constant 3.200000e+01 : f32
    %308 = vector.broadcast %cst_95 : f32 to vector<8x1xf32>
    %309 = arith.divf %307, %308 : vector<8x1xf32>
    %310 = vector.broadcast %302 : vector<8x1xf32> to vector<8x32xf32>
    %311 = arith.subf %298, %310 : vector<8x32xf32>
    %cst_96 = arith.constant 9.99999974E-6 : f32
    %312 = vector.broadcast %cst_96 : f32 to vector<8x1xf32>
    %313 = arith.addf %309, %312 : vector<8x1xf32>
    %314 = math.rsqrt %313 : vector<8x1xf32>
    %315 = vector.broadcast %314 : vector<8x1xf32> to vector<8x32xf32>
    %316 = arith.mulf %311, %315 : vector<8x32xf32>
    %317 = vector.shape_cast %180 : vector<32xf32> to vector<1x32xf32>
    %318 = vector.broadcast %317 : vector<1x32xf32> to vector<8x32xf32>
    %319 = arith.mulf %316, %318 : vector<8x32xf32>
    %320 = vector.shape_cast %182 : vector<32xf32> to vector<1x32xf32>
    %321 = vector.broadcast %320 : vector<1x32xf32> to vector<8x32xf32>
    %322 = arith.addf %319, %321 : vector<8x32xf32>
    %c0_97 = arith.constant 0 : index
    %c0_98 = arith.constant 0 : index
    %323 = vector.load %arg9[%c0_97, %c0_98] : memref<32x128xf32, #tpu.memory_space<vmem>>, vector<32x128xf32>
    %cst_99 = arith.constant dense<0.000000e+00> : vector<8x128xf32>
    %324 = tpu.matmul %322, %323, %cst_99 {dimension_numbers = #tpu.dot_dimension_numbers<[1], [0], [0], [1], [0, 0, 1, 1], [], []>} : vector<8x32xf32>, vector<32x128xf32>, vector<8x128xf32> -> vector<8x128xf32>
    %c0_100 = arith.constant 0 : index
    %c0_101 = arith.constant 0 : index
    %325 = vector.load %arg10[%c0_100, %c0_101] : memref<1x128xf32, #tpu.memory_space<vmem>>, vector<1x128xf32>
    %326 = vector.broadcast %325 : vector<1x128xf32> to vector<8x128xf32>
    %327 = arith.addf %324, %326 : vector<8x128xf32>
    %c0_102 = arith.constant 0 : index
    %c0_103 = arith.constant 0 : index
    %c0_104 = arith.constant 0 : index
    %328 = vector.load %arg11[%c0_102, %c0_103, %c0_104] : memref<1x8x128xf32, #tpu.memory_space<vmem>>, vector<1x8x128xf32>
    %329 = vector.shape_cast %328 : vector<1x8x128xf32> to vector<8x128xf32>
    %330 = vector.shape_cast %327 : vector<8x128xf32> to vector<1x8x128xf32>
    tpu.vector_store %arg11[%c0_102, %c0_103, %c0_104], %330 {strides = array<i32>} : memref<1x8x128xf32, #tpu.memory_space<vmem>>, vector<1x8x128xf32>,
    return
  }
  func.func @transform_0(%arg0: i32) -> (i32, i32, i32) {
    %c0_i32 = arith.constant 0 : i32
    %c0_i32_0 = arith.constant 0 : i32
    %c0_i32_1 = arith.constant 0 : i32
    return %arg0, %c0_i32, %c0_i32_0 : i32, i32, i32
  }
  func.func @transform_1(%arg0: i32) -> (i32, i32) {
    %c0_i32 = arith.constant 0 : i32
    %c0_i32_0 = arith.constant 0 : i32
    %c0_i32_1 = arith.constant 0 : i32
    return %c0_i32, %c0_i32_0 : i32, i32
  }
  func.func @transform_2(%arg0: i32) -> (i32, i32) {
    %c0_i32 = arith.constant 0 : i32
    %c0_i32_0 = arith.constant 0 : i32
    %c0_i32_1 = arith.constant 0 : i32
    return %c0_i32, %c0_i32_0 : i32, i32
  }
  func.func @transform_3(%arg0: i32) -> (i32, i32, i32) {
    %c0_i32 = arith.constant 0 : i32
    %c0_i32_0 = arith.constant 0 : i32
    %c0_i32_1 = arith.constant 0 : i32
    %c0_i32_2 = arith.constant 0 : i32
    return %c0_i32, %c0_i32_0, %c0_i32_1 : i32, i32, i32
  }
  func.func @transform_4(%arg0: i32) -> (i32, i32, i32) {
    %c0_i32 = arith.constant 0 : i32
    %c0_i32_0 = arith.constant 0 : i32
    %c0_i32_1 = arith.constant 0 : i32
    %c0_i32_2 = arith.constant 0 : i32
    return %c0_i32, %c0_i32_0, %c0_i32_1 : i32, i32, i32
  }
  func.func @transform_5(%arg0: i32) -> (i32, i32, i32) {
    %c0_i32 = arith.constant 0 : i32
    %c0_i32_0 = arith.constant 0 : i32
    %c0_i32_1 = arith.constant 0 : i32
    %c0_i32_2 = arith.constant 0 : i32
    return %c0_i32, %c0_i32_0, %c0_i32_1 : i32, i32, i32
  }
  func.func @transform_6(%arg0: i32) -> (i32, i32, i32) {
    %c0_i32 = arith.constant 0 : i32
    %c0_i32_0 = arith.constant 0 : i32
    %c0_i32_1 = arith.constant 0 : i32
    %c0_i32_2 = arith.constant 0 : i32
    return %c0_i32, %c0_i32_0, %c0_i32_1 : i32, i32, i32
  }
  func.func @transform_7(%arg0: i32) -> (i32, i32, i32) {
    %c0_i32 = arith.constant 0 : i32
    %c0_i32_0 = arith.constant 0 : i32
    %c0_i32_1 = arith.constant 0 : i32
    %c0_i32_2 = arith.constant 0 : i32
    return %c0_i32, %c0_i32_0, %c0_i32_1 : i32, i32, i32
  }
  func.func @transform_8(%arg0: i32) -> (i32, i32) {
    %c0_i32 = arith.constant 0 : i32
    %c0_i32_0 = arith.constant 0 : i32
    %c0_i32_1 = arith.constant 0 : i32
    return %c0_i32, %c0_i32_0 : i32, i32
  }
  func.func @transform_9(%arg0: i32) -> (i32, i32) {
    %c0_i32 = arith.constant 0 : i32
    %c0_i32_0 = arith.constant 0 : i32
    %c0_i32_1 = arith.constant 0 : i32
    return %c0_i32, %c0_i32_0 : i32, i32
  }
  func.func @transform_10(%arg0: i32) -> (i32, i32, i32) {
    %c0_i32 = arith.constant 0 : i32
    %c0_i32_0 = arith.constant 0 : i32
    %c0_i32_1 = arith.constant 0 : i32
    return %arg0, %c0_i32, %c0_i32_0 : i32, i32, i32
  }
}

</mosaic_0001>

<llo_original>
// kernel: transformer_forward.1
$region0: #{transformer_forward.1}
  #allocation0 [shape = 'u32[]', space=smem, size = 0x4, offset = 0x4, fixed_abs, tag = 'smem constant byte address 0x4 - core index']
  #allocation1 [shape = 'u32[144,128]{1,0:T(1,128)}', space=vmem, size = 0x12000, scoped, tag = 'internal scratch']
  %s0 = inlined_call_operand.vmem [shape: f32[2,8,32], index: 0, kind: input, shape index: {}]
  %s1 = inlined_call_operand.vmem [shape: f32[8,32], index: 1, kind: input, shape index: {}]
  %s2 = inlined_call_operand.vmem [shape: f32[8,8], index: 2, kind: input, shape index: {}]
  %s3 = inlined_call_operand.vmem [shape: f32[2,32,96], index: 3, kind: input, shape index: {}]
  %s4 = inlined_call_operand.vmem [shape: f32[2,32,32], index: 4, kind: input, shape index: {}]
  %s5 = inlined_call_operand.vmem [shape: f32[2,32,64], index: 5, kind: input, shape index: {}]
  %s6 = inlined_call_operand.vmem [shape: f32[2,64,32], index: 6, kind: input, shape index: {}]
  %s7 = inlined_call_operand.vmem [shape: f32[2,8,128], index: 7, kind: input, shape index: {}]
  %s8 = inlined_call_operand.vmem [shape: f32[32,128], index: 8, kind: input, shape index: {}]
  %s9 = inlined_call_operand.vmem [shape: f32[1,128], index: 9, kind: input, shape index: {}]
  %s10 = inlined_call_operand.vmem [shape: f32[2,8,128], index: 10, kind: output, shape index: {}]
  %s11 = sld [smem:[#allocation0]]
  $region73: #{transformer_forward.1} parent=0
    _
  %s13 = ssub.s32 1, %s11
  %s14 = scalar_select 0, %s13, %s11
  loop: start=0, step=1, limit=4
  $region2: #{transformer_forward.1} parent=0 // loop_pre_header
    _
  $region3: #{transformer_forward.1} parent=0 // loop_header
    %s16 = sphi 0, %s20
    %p17 = scmp.ge.s32.totalorder %s16, 4
    %s26 = sphi 0, %s28
    %s29 = sphi 0, %s26
    %s30 = sphi 0, %s29
    %s46 = sphi 0, %s30
    %s50 = sphi 0, %s50
    %s52 = sphi 0, %s50
    %s53 = sphi 0, %s52
    %s67 = sphi 0, %s53
    %s71 = sphi 0, %s71
    %s73 = sphi 0, %s71
    %s74 = sphi 0, %s73
    %s88 = sphi 0, %s74
    %s92 = sphi 0, %s92
    %s94 = sphi 0, %s92
    %s95 = sphi 0, %s94
    %s109 = sphi 0, %s95
    %s113 = sphi 0, %s113
    %s115 = sphi 0, %s113
    %s116 = sphi 0, %s115
    %s130 = sphi 0, %s116
    %s134 = sphi 0, %s134
    %s136 = sphi 0, %s134
    %s137 = sphi 0, %s136
    %s151 = sphi 0, %s137
    %s155 = sphi 0, %s155
    %s157 = sphi 0, %s155
    %s158 = sphi 0, %s157
    %s172 = sphi 0, %s158
    %s176 = sphi 0, %s176
    %s178 = sphi 0, %s176
    %s179 = sphi 0, %s178
    %s193 = sphi 0, %s179
    %s197 = sphi 0, %s197
    %s199 = sphi 0, %s197
    %s200 = sphi 0, %s199
    %s214 = sphi 0, %s200
    %s218 = sphi 0, %s218
    %s220 = sphi 0, %s218
    %s221 = sphi 0, %s220
    %s235 = sphi 0, %s221
    %s241 = sphi 0, %s243
    %s244 = sphi 0, %s241
    %s245 = sphi 0, %s244
    %s261 = sphi 0, %s245
  $region4: #{transformer_forward.1} parent=0 // loop_header_branch
    %19 = sbr.rel (%p17) target = $region8
  $region5: #{transformer_forward.1} parent=0 // loop_body
    %s21 = ssub.s32 %s16, 1
    %s22 = ssub.s32 %s16, 2
    %s23 = sadd.s32 %s16, 1
    %s24 = ssub.s32 %s16, %s23
    %p25 = scmp.eq.s32.totalorder %s24, 0
    %s27 = sadd.s32 %s26, 1
    %s28 = scalar_select %p25, %s26, %s27
    %p31 = pneg %p25
    %p32 = scmp.eq.s32.totalorder %s16, 1
    %p33 = por %p31, %p32
    %p34 = scmp.ne.s32.totalorder %s26, %s29
    %p35 = scmp.eq.s32.totalorder %s16, 0
    %p36 = por %p34, %p35
    %p37 = scmp.ne.s32.totalorder %s26, %s29
    %p38 = scmp.eq.s32.totalorder %s21, 1
    %p39 = por %p37, %p38
    %p40 = scmp.ne.s32.totalorder %s29, %s30
    %p41 = scmp.eq.s32.totalorder %s21, 0
    %p42 = por %p40, %p41
    %p43 = scmp.ne.s32.totalorder %s29, %s30
    %p44 = scmp.eq.s32.totalorder %s22, 1
    %p45 = por %p43, %p44
    %p47 = scmp.ne.s32.totalorder %s30, %s46
    %p48 = scmp.eq.s32.totalorder %s22, 0
    %p49 = por %p47, %p48
    %s51 = sadd.s32 %s50, 1
    %p54 = scmp.eq.s32.totalorder %s16, 1
    %p55 = scmp.ne.s32.totalorder %s50, %s52
    %p56 = scmp.eq.s32.totalorder %s16, 0
    %p57 = por %p55, %p56
    %p58 = scmp.ne.s32.totalorder %s50, %s52
    %p59 = scmp.eq.s32.totalorder %s21, 1
    %p60 = por %p58, %p59
    %p61 = scmp.ne.s32.totalorder %s52, %s53
    %p62 = scmp.eq.s32.totalorder %s21, 0
    %p63 = por %p61, %p62
    %p64 = scmp.ne.s32.totalorder %s52, %s53
    %p65 = scmp.eq.s32.totalorder %s22, 1
    %p66 = por %p64, %p65
    %p68 = scmp.ne.s32.totalorder %s53, %s67
    %p69 = scmp.eq.s32.totalorder %s22, 0
    %p70 = por %p68, %p69
    %s72 = sadd.s32 %s71, 1
    %p75 = scmp.eq.s32.totalorder %s16, 1
    %p76 = scmp.ne.s32.totalorder %s71, %s73
    %p77 = scmp.eq.s32.totalorder %s16, 0
    %p78 = por %p76, %p77
    %p79 = scmp.ne.s32.totalorder %s71, %s73
    %p80 = scmp.eq.s32.totalorder %s21, 1
    %p81 = por %p79, %p80
    %p82 = scmp.ne.s32.totalorder %s73, %s74
    %p83 = scmp.eq.s32.totalorder %s21, 0
    %p84 = por %p82, %p83
    %p85 = scmp.ne.s32.totalorder %s73, %s74
    %p86 = scmp.eq.s32.totalorder %s22, 1
    %p87 = por %p85, %p86
    %p89 = scmp.ne.s32.totalorder %s74, %s88
    %p90 = scmp.eq.s32.totalorder %s22, 0
    %p91 = por %p89, %p90
    %s93 = sadd.s32 %s92, 1
    %p96 = scmp.eq.s32.totalorder %s16, 1
    %p97 = scmp.ne.s32.totalorder %s92, %s94
    %p98 = scmp.eq.s32.totalorder %s16, 0
    %p99 = por %p97, %p98
    %p100 = scmp.ne.s32.totalorder %s92, %s94
    %p101 = scmp.eq.s32.totalorder %s21, 1
    %p102 = por %p100, %p101
    %p103 = scmp.ne.s32.totalorder %s94, %s95
    %p104 = scmp.eq.s32.totalorder %s21, 0
    %p105 = por %p103, %p104
    %p106 = scmp.ne.s32.totalorder %s94, %s95
    %p107 = scmp.eq.s32.totalorder %s22, 1
    %p108 = por %p106, %p107
    %p110 = scmp.ne.s32.totalorder %s95, %s109
    %p111 = scmp.eq.s32.totalorder %s22, 0
    %p112 = por %p110, %p111
    %s114 = sadd.s32 %s113, 1
    %p117 = scmp.eq.s32.totalorder %s16, 1
    %p118 = scmp.ne.s32.totalorder %s113, %s115
    %p119 = scmp.eq.s32.totalorder %s16, 0
    %p120 = por %p118, %p119
    %p121 = scmp.ne.s32.totalorder %s113, %s115
    %p122 = scmp.eq.s32.totalorder %s21, 1
    %p123 = por %p121, %p122
    %p124 = scmp.ne.s32.totalorder %s115, %s116
    %p125 = scmp.eq.s32.totalorder %s21, 0
    %p126 = por %p124, %p125
    %p127 = scmp.ne.s32.totalorder %s115, %s116
    %p128 = scmp.eq.s32.totalorder %s22, 1
    %p129 = por %p127, %p128
    %p131 = scmp.ne.s32.totalorder %s116, %s130
    %p132 = scmp.eq.s32.totalorder %s22, 0
    %p133 = por %p131, %p132
    %s135 = sadd.s32 %s134, 1
    %p138 = scmp.eq.s32.totalorder %s16, 1
    %p139 = scmp.ne.s32.totalorder %s134, %s136
    %p140 = scmp.eq.s32.totalorder %s16, 0
    %p141 = por %p139, %p140
    %p142 = scmp.ne.s32.totalorder %s134, %s136
    %p143 = scmp.eq.s32.totalorder %s21, 1
    %p144 = por %p142, %p143
    %p145 = scmp.ne.s32.totalorder %s136, %s137
    %p146 = scmp.eq.s32.totalorder %s21, 0
    %p147 = por %p145, %p146
    %p148 = scmp.ne.s32.totalorder %s136, %s137
    %p149 = scmp.eq.s32.totalorder %s22, 1
    %p150 = por %p148, %p149
    %p152 = scmp.ne.s32.totalorder %s137, %s151
    %p153 = scmp.eq.s32.totalorder %s22, 0
    %p154 = por %p152, %p153
    %s156 = sadd.s32 %s155, 1
    %p159 = scmp.eq.s32.totalorder %s16, 1
    %p160 = scmp.ne.s32.totalorder %s155, %s157
    %p161 = scmp.eq.s32.totalorder %s16, 0
    %p162 = por %p160, %p161
    %p163 = scmp.ne.s32.totalorder %s155, %s157
    %p164 = scmp.eq.s32.totalorder %s21, 1
    %p165 = por %p163, %p164
    %p166 = scmp.ne.s32.totalorder %s157, %s158
    %p167 = scmp.eq.s32.totalorder %s21, 0
    %p168 = por %p166, %p167
    %p169 = scmp.ne.s32.totalorder %s157, %s158
    %p170 = scmp.eq.s32.totalorder %s22, 1
    %p171 = por %p169, %p170
    %p173 = scmp.ne.s32.totalorder %s158, %s172
    %p174 = scmp.eq.s32.totalorder %s22, 0
    %p175 = por %p173, %p174
    %s177 = sadd.s32 %s176, 1
    %p180 = scmp.eq.s32.totalorder %s16, 1
    %p181 = scmp.ne.s32.totalorder %s176, %s178
    %p182 = scmp.eq.s32.totalorder %s16, 0
    %p183 = por %p181, %p182
    %p184 = scmp.ne.s32.totalorder %s176, %s178
    %p185 = scmp.eq.s32.totalorder %s21, 1
    %p186 = por %p184, %p185
    %p187 = scmp.ne.s32.totalorder %s178, %s179
    %p188 = scmp.eq.s32.totalorder %s21, 0
    %p189 = por %p187, %p188
    %p190 = scmp.ne.s32.totalorder %s178, %s179
    %p191 = scmp.eq.s32.totalorder %s22, 1
    %p192 = por %p190, %p191
    %p194 = scmp.ne.s32.totalorder %s179, %s193
    %p195 = scmp.eq.s32.totalorder %s22, 0
    %p196 = por %p194, %p195
    %s198 = sadd.s32 %s197, 1
    %p201 = scmp.eq.s32.totalorder %s16, 1
    %p202 = scmp.ne.s32.totalorder %s197, %s199
    %p203 = scmp.eq.s32.totalorder %s16, 0
    %p204 = por %p202, %p203
    %p205 = scmp.ne.s32.totalorder %s197, %s199
    %p206 = scmp.eq.s32.totalorder %s21, 1
    %p207 = por %p205, %p206
    %p208 = scmp.ne.s32.totalorder %s199, %s200
    %p209 = scmp.eq.s32.totalorder %s21, 0
    %p210 = por %p208, %p209
    %p211 = scmp.ne.s32.totalorder %s199, %s200
    %p212 = scmp.eq.s32.totalorder %s22, 1
    %p213 = por %p211, %p212
    %p215 = scmp.ne.s32.totalorder %s200, %s214
    %p216 = scmp.eq.s32.totalorder %s22, 0
    %p217 = por %p215, %p216
    %s219 = sadd.s32 %s218, 1
    %p222 = scmp.eq.s32.totalorder %s16, 1
    %p223 = scmp.ne.s32.totalorder %s218, %s220
    %p224 = scmp.eq.s32.totalorder %s16, 0
    %p225 = por %p223, %p224
    %p226 = scmp.ne.s32.totalorder %s218, %s220
    %p227 = scmp.eq.s32.totalorder %s21, 1
    %p228 = por %p226, %p227
    %p229 = scmp.ne.s32.totalorder %s220, %s221
    %p230 = scmp.eq.s32.totalorder %s21, 0
    %p231 = por %p229, %p230
    %p232 = scmp.ne.s32.totalorder %s220, %s221
    %p233 = scmp.eq.s32.totalorder %s22, 1
    %p234 = por %p232, %p233
    %p236 = scmp.ne.s32.totalorder %s221, %s235
    %p237 = scmp.eq.s32.totalorder %s22, 0
    %p238 = por %p236, %p237
    %s239 = ssub.s32 %s16, %s23
    %p240 = scmp.eq.s32.totalorder %s239, 0
    %s242 = sadd.s32 %s241, 1
    %s243 = scalar_select %p240, %s241, %s242
    %p246 = pneg %p240
    %p247 = scmp.eq.s32.totalorder %s16, 1
    %p248 = por %p246, %p247
    %p249 = scmp.ne.s32.totalorder %s241, %s244
    %p250 = scmp.eq.s32.totalorder %s16, 0
    %p251 = por %p249, %p250
    %p252 = scmp.ne.s32.totalorder %s241, %s244
    %p253 = scmp.eq.s32.totalorder %s21, 1
    %p254 = por %p252, %p253
    %p255 = scmp.ne.s32.totalorder %s244, %s245
    %p256 = scmp.eq.s32.totalorder %s21, 0
    %p257 = por %p255, %p256
    %p258 = scmp.ne.s32.totalorder %s244, %s245
    %p259 = scmp.eq.s32.totalorder %s22, 1
    %p260 = por %p258, %p259
    %p262 = scmp.ne.s32.totalorder %s245, %s261
    %p263 = scmp.eq.s32.totalorder %s22, 0
    %p264 = por %p262, %p263
    %p265 = scmp.le.s32.totalorder 1, %s16
    %p266 = scmp.lt.s32.totalorder %s16, 3
    %p267 = pnand %p265, %p266
    %p268 = pneg %p267
    // Predicated region
    $region9: #{transformer_forward.1} parent=5 // pred_check
      _
    $region10: #{transformer_forward.1} parent=5 // pred_check_branch
      %270 = sbr.rel (%p267) target = $region12
    $region11: #{transformer_forward.1} parent=5 // pred_region
      %s271 = ssub.s32 %s16, 1
      // Predicated region
      $region13: #{transformer_forward.1} parent=11 // pred_check
        %p272 = pneg %p63
      $region14: #{transformer_forward.1} parent=11 // pred_check_branch
        %274 = sbr.rel (%p272) target = $region16
      $region15: #{transformer_forward.1} parent=11 // pred_region
        _
      $region16: #{transformer_forward.1} parent=11 // pred_fallthru
        _
      // Predicated region
      $region17: #{transformer_forward.1} parent=11 // pred_check
        %p275 = pneg %p84
      $region18: #{transformer_forward.1} parent=11 // pred_check_branch
        %277 = sbr.rel (%p275) target = $region20
      $region19: #{transformer_forward.1} parent=11 // pred_region
        _
      $region20: #{transformer_forward.1} parent=11 // pred_fallthru
        _
      // Predicated region
      $region21: #{transformer_forward.1} parent=11 // pred_check
        %p278 = pneg %p105
      $region22: #{transformer_forward.1} parent=11 // pred_check_branch
        %280 = sbr.rel (%p278) target = $region24
      $region23: #{transformer_forward.1} parent=11 // pred_region
        _
      $region24: #{transformer_forward.1} parent=11 // pred_fallthru
        _
      // Predicated region
      $region25: #{transformer_forward.1} parent=11 // pred_check
        %p281 = pneg %p126
      $region26: #{transformer_forward.1} parent=11 // pred_check_branch
        %283 = sbr.rel (%p281) target = $region28
      $region27: #{transformer_forward.1} parent=11 // pred_region
        _
      $region28: #{transformer_forward.1} parent=11 // pred_fallthru
        _
      // Predicated region
      $region29: #{transformer_forward.1} parent=11 // pred_check
        %p284 = pneg %p147
      $region30: #{transformer_forward.1} parent=11 // pred_check_branch
        %286 = sbr.rel (%p284) target = $region32
      $region31: #{transformer_forward.1} parent=11 // pred_region
        _
      $region32: #{transformer_forward.1} parent=11 // pred_fallthru
        _
      // Predicated region
      $region33: #{transformer_forward.1} parent=11 // pred_check
        %p287 = pneg %p168
      $region34: #{transformer_forward.1} parent=11 // pred_check_branch
        %289 = sbr.rel (%p287) target = $region36
      $region35: #{transformer_forward.1} parent=11 // pred_region
        _
      $region36: #{transformer_forward.1} parent=11 // pred_fallthru
        _
      // Predicated region
      $region37: #{transformer_forward.1} parent=11 // pred_check
        %p290 = pneg %p189
      $region38: #{transformer_forward.1} parent=11 // pred_check_branch
        %292 = sbr.rel (%p290) target = $region40
      $region39: #{transformer_forward.1} parent=11 // pred_region
        _
      $region40: #{transformer_forward.1} parent=11 // pred_fallthru
        _
      // Predicated region
      $region41: #{transformer_forward.1} parent=11 // pred_check
        %p293 = pneg %p210
      $region42: #{transformer_forward.1} parent=11 // pred_check_branch
        %295 = sbr.rel (%p293) target = $region44
      $region43: #{transformer_forward.1} parent=11 // pred_region
        _
      $region44: #{transformer_forward.1} parent=11 // pred_fallthru
        _
      // Predicated region
      $region45: #{transformer_forward.1} parent=11 // pred_check
        %p296 = pneg %p231
      $region46: #{transformer_forward.1} parent=11 // pred_check_branch
        %298 = sbr.rel (%p296) target = $region48
      $region47: #{transformer_forward.1} parent=11 // pred_region
        _
      $region48: #{transformer_forward.1} parent=11 // pred_fallthru
        _
    $region12: #{transformer_forward.1} parent=5 // pred_fallthru
      _
    %p299 = scmp.lt.s32.totalorder %s16, 2
    // Predicated region
    $region49: #{transformer_forward.1} parent=5 // pred_check
      %p300 = pneg %p299
    $region50: #{transformer_forward.1} parent=5 // pred_check_branch
      %302 = sbr.rel (%p300) target = $region52
    $region51: #{transformer_forward.1} parent=5 // pred_region
      // Predicated region
      $region53: #{transformer_forward.1} parent=51 // pred_check
        %p303 = pneg %p36
      $region54: #{transformer_forward.1} parent=51 // pred_check_branch
        %305 = sbr.rel (%p303) target = $region56
      $region55: #{transformer_forward.1} parent=51 // pred_region
        %p306 = scmp.lt.s32.totalorder %s16, 1
        %s307 = scalar_select %p306, %s16, 1
        %s308 = smul.addr %s307, 8
        %s309 = scalar_lea.vmem %s0, %s308
      $region56: #{transformer_forward.1} parent=51 // pred_fallthru
        _
    $region52: #{transformer_forward.1} parent=5 // pred_fallthru
      _
    %p310 = scmp.le.s32.totalorder 1, %s16
    %p311 = scmp.lt.s32.totalorder %s16, 3
    %p312 = pnand %p310, %p311
    %p313 = pneg %p312
    // Predicated region
    $region57: #{transformer_forward.1} parent=5 // pred_check
      _
    $region58: #{transformer_forward.1} parent=5 // pred_check_branch
      %315 = sbr.rel (%p312) target = $region60
    $region59: #{transformer_forward.1} parent=5 // pred_region
      %s316 = ssub.s32 %s16, 1
      %p317 = scmp.lt.s32.totalorder %s21, 1
      %s318 = scalar_select %p317, %s21, 1
      %s319 = smul.addr %s318, 8
      %s320 = scalar_lea.vmem %s0, %s319
      %p321 = pneg %p42
      %p322 = pneg %p39
      %p323 = pneg %p63
      %p324 = pneg %p60
      %p325 = pneg %p84
      %p326 = pneg %p81
      %p327 = pneg %p105
      %p328 = pneg %p102
      %p329 = pneg %p126
      %p330 = pneg %p123
      %p331 = pneg %p147
      %p332 = pneg %p144
      %p333 = pneg %p168
      %p334 = pneg %p165
      %p335 = pneg %p189
      %p336 = pneg %p186
      %p337 = pneg %p210
      %p338 = pneg %p207
      %p339 = pneg %p231
      %p340 = pneg %p228
      %p341 = pneg %p257
      %p342 = pneg %p254
      %p343 = scmp.lt.s32.totalorder %s21, 1
      %s344 = scalar_select %p343, %s21, 1
      %s345 = smul.addr %s344, 8
      %s346 = scalar_lea.vmem %s10, %s345
      %p347 = scmp.lt.s32.totalorder %s21, 1
      %s348 = scalar_select %p347, %s21, 1
      %s349 = smul.addr %s348, 8
      %s350 = scalar_lea.vmem %s0, %s349
      %p351 = scmp.lt.s32.totalorder %s21, 1
      %s352 = scalar_select %p351, %s21, 1
      %s353 = smul.addr %s352, 8
      %s354 = scalar_lea.vmem %s10, %s353
      %v355 = vld [vmem:[%s350] sm:$0xff]
      %v356 = vmul.f32 %v355, 5.656854
      %v357 = vld [vmem:[%s1] sm:$0xff]
      %v358 = vadd.f32 %v356, %v357
      %v359 = vld [vmem:[%s2] sm:$0xff]
      %v360 = vld [vmem:[%s7] sm:$0xff]
      %v361 = vld [vmem:[%s3] sm:$0xff]
      %v362 = vld [vmem:[%s3 + $0x8] sm:$0xff]
      %v363 = vld [vmem:[%s3 + $0x10] sm:$0xff]
      %v364 = vld [vmem:[%s3 + $0x18] sm:$0xff]
      %v365 = vlaneseq
      %v366 = vshrl.u32 %v365, 7
      %v367 = vsub.s32 0, %v366
      %v368 = vrot.slane %v360, %v367
      %vm369 = vcmask 261120
      %v371 = vsel %vm369, %v358, 0
      %373 = vmatprep.subr.mxu0 0.0
      %374 = vmatpush1.msra.mxu0 0.0
      %375 = vmatprep.subr.mxu0 0.0
      %376 = vmatpush1.msra.mxu0 0.0
      %377 = vmatprep.subr.mxu0 0.0
      %378 = vmatpush1.msra.mxu0 0.0
      %379 = vmatprep.subr.mxu0 0.0
      %380 = vmatpush1.msra.mxu0 0.0
      %381 = vmatprep.subr.mxu0 0.0
      %382 = vmatpush1.msra.mxu0 0.0
      %383 = vmatprep.subr.mxu0 0.0
      %384 = vmatpush1.msra.mxu0 0.0
      %385 = vmatprep.subr.mxu0 0.0
      %386 = vmatpush1.msra.mxu0 0.0
      %387 = vmatprep.subr.mxu0 0.0
      %388 = vmatpush1.msra.mxu0 0.0
      %389 = vmatprep.subr.mxu0 0.0
      %390 = vmatpush1.msra.mxu0 0.0
      %391 = vmatprep.subr.mxu0 0.0
      %392 = vmatpush1.msra.mxu0 0.0
      %393 = vmatprep.subr.mxu0 0.0
      %394 = vmatpush1.msra.mxu0 0.0
      %395 = vmatprep.subr.mxu0 0.0
      %396 = vmatpush1.msra.mxu0 0.0
      %397 = vmatprep.subr.mxu0 0.0
      %398 = vmatpush1.msra.mxu0 %v364
      %399 = vmatprep.subr.mxu0 0.0
      %400 = vmatpush1.msra.mxu0 %v363
      %401 = vmatprep.subr.mxu0 0.0
      %402 = vmatpush1.msra.mxu0 %v362
      %403 = vmatprep.subr.mxu0 0.0
      %404 = vmatpush1.msra.mxu0 %v361
      %405 = vmatprep.subr.mxu0 0.0
      %406 = vmatpush2.msra.mxu0 0.0
      %407 = vmatprep.subr.mxu0 0.0
      %408 = vmatpush2.msra.mxu0 0.0
      %409 = vmatprep.subr.mxu0 0.0
      %410 = vmatpush2.msra.mxu0 0.0
      %411 = vmatprep.subr.mxu0 0.0
      %412 = vmatpush2.msra.mxu0 0.0
      %413 = vmatprep.subr.mxu0 0.0
      %414 = vmatpush2.msra.mxu0 0.0
      %415 = vmatprep.subr.mxu0 0.0
      %416 = vmatpush2.msra.mxu0 0.0
      %417 = vmatprep.subr.mxu0 0.0
      %418 = vmatpush2.msra.mxu0 0.0
      %419 = vmatprep.subr.mxu0 0.0
      %420 = vmatpush2.msra.mxu0 0.0
      %421 = vmatprep.subr.mxu0 0.0
      %422 = vmatpush2.msra.mxu0 0.0
      %423 = vmatprep.subr.mxu0 0.0
      %424 = vmatpush2.msra.mxu0 0.0
      %425 = vmatprep.subr.mxu0 0.0
      %426 = vmatpush2.msra.mxu0 0.0
      %427 = vmatprep.subr.mxu0 0.0
      %428 = vmatpush2.msra.mxu0 0.0
      %429 = vmatprep.subr.mxu0 0.0
      %430 = vmatpush2.msra.mxu0 0.0
      %431 = vmatprep.subr.mxu0 0.0
      %432 = vmatpush2.msra.mxu0 0.0
      %433 = vmatprep.subr.mxu0 0.0
      %434 = vmatpush2.msra.mxu0 0.0
      %435 = vmatprep.subr.mxu0 0.0
      %436 = vmatpush2.msra.mxu0 0.0
      %437 = vmatprep.mubr.f32.mxu0 0.0
      %438 = vmatmul.mubr.f32.gmra.mxu0 %v371
      %v439 = vpop.f32.mrf.mxu0
      %v440 = vadd.f32 %v368, %v439
      %v441 = vpop.f32.mrf.mxu0
      %442 = vdwg.mxu0
      %444 = vrot.lane.b32.xlu0 %v440, 96
      %v445 = vpop.permute.xlu0 %444
      %vm446 = vcmask 64512
      %v447 = vsel %vm446, %v440, 0
      %v449 = vsel %vm446, %v445, 0
      %451 = vmatprep.subr.mxu0 0.0
      %452 = vmatpush1.xpose.msra.mxu0 0.0
      %453 = vmatprep.subr.mxu0 0.0
      %454 = vmatpush1.xpose.msra.mxu0 0.0
      %455 = vmatprep.subr.mxu0 0.0
      %456 = vmatpush1.xpose.msra.mxu0 0.0
      %457 = vmatprep.subr.mxu0 0.0
      %458 = vmatpush1.xpose.msra.mxu0 0.0
      %459 = vmatprep.subr.mxu0 0.0
      %460 = vmatpush1.xpose.msra.mxu0 0.0
      %461 = vmatprep.subr.mxu0 0.0
      %462 = vmatpush1.xpose.msra.mxu0 0.0
      %463 = vmatprep.subr.mxu0 0.0
      %464 = vmatpush1.xpose.msra.mxu0 0.0
      %465 = vmatprep.subr.mxu0 0.0
      %466 = vmatpush1.xpose.msra.mxu0 0.0
      %467 = vmatprep.subr.mxu0 0.0
      %468 = vmatpush1.xpose.msra.mxu0 0.0
      %469 = vmatprep.subr.mxu0 0.0
      %470 = vmatpush1.xpose.msra.mxu0 0.0
      %471 = vmatprep.subr.mxu0 0.0
      %472 = vmatpush1.xpose.msra.mxu0 0.0
      %473 = vmatprep.subr.mxu0 0.0
      %474 = vmatpush1.xpose.msra.mxu0 0.0
      %475 = vmatprep.subr.mxu0 0.0
      %476 = vmatpush1.xpose.msra.mxu0 0.0
      %477 = vmatprep.subr.mxu0 0.0
      %478 = vmatpush1.xpose.msra.mxu0 0.0
      %479 = vmatprep.subr.mxu0 0.0
      %480 = vmatpush1.xpose.msra.mxu0 0.0
      %481 = vmatprep.subr.mxu0 0.0
      %482 = vmatpush1.xpose.msra.mxu0 %v449
      %483 = vmatprep.subr.mxu0 0.0
      %484 = vmatpush2.xpose.msra.mxu0 0.0
      %485 = vmatprep.subr.mxu0 0.0
      %486 = vmatpush2.xpose.msra.mxu0 0.0
      %487 = vmatprep.subr.mxu0 0.0
      %488 = vmatpush2.xpose.msra.mxu0 0.0
      %489 = vmatprep.subr.mxu0 0.0
      %490 = vmatpush2.xpose.msra.mxu0 0.0
      %491 = vmatprep.subr.mxu0 0.0
      %492 = vmatpush2.xpose.msra.mxu0 0.0
      %493 = vmatprep.subr.mxu0 0.0
      %494 = vmatpush2.xpose.msra.mxu0 0.0
      %495 = vmatprep.subr.mxu0 0.0
      %496 = vmatpush2.xpose.msra.mxu0 0.0
      %497 = vmatprep.subr.mxu0 0.0
      %498 = vmatpush2.xpose.msra.mxu0 0.0
      %499 = vmatprep.subr.mxu0 0.0
      %500 = vmatpush2.xpose.msra.mxu0 0.0
      %501 = vmatprep.subr.mxu0 0.0
      %502 = vmatpush2.xpose.msra.mxu0 0.0
      %503 = vmatprep.subr.mxu0 0.0
      %504 = vmatpush2.xpose.msra.mxu0 0.0
      %505 = vmatprep.subr.mxu0 0.0
      %506 = vmatpush2.xpose.msra.mxu0 0.0
      %507 = vmatprep.subr.mxu0 0.0
      %508 = vmatpush2.xpose.msra.mxu0 0.0
      %509 = vmatprep.subr.mxu0 0.0
      %510 = vmatpush2.xpose.msra.mxu0 0.0
      %511 = vmatprep.subr.mxu0 0.0
      %512 = vmatpush2.xpose.msra.mxu0 0.0
      %513 = vmatprep.subr.mxu0 0.0
      %514 = vmatpush2.xpose.msra.mxu0 0.0
      %515 = vmatprep.mubr.f32.mxu0 0.0
      %516 = vmatmul.mubr.f32.gmra.mxu0 %v447
      %v517 = vpop.f32.mrf.mxu0
      %v518 = vadd.f32 %v359, %v517
      %v519 = vpop.f32.mrf.mxu0
      %520 = vdwg.mxu0
      %v521 = vsel %vm446, %v518, -inf
      %522 = vmax.xlane.f32.xlu0 %v521
      %v523 = vpop.xlane.xlu0 %522
      %v524 = vsub.f32 %v518, %v523
      %v525 = vmul.f32 %v524, 1.442695
      %v526 = vpow.pop %v525
      %v527 = vsel %vm446, %v526, 0.0
      %528 = vadd.xlane.f32.xlu0 %v527
      %v529 = vpop.xlane.xlu0 %528
      %v530 = vrcp.pop %v529
      %v531 = vmul.f32 %v526, %v530
      %532 = vrot.lane.b32.xlu0 %v440, 64
      %v533 = vpop.permute.xlu0 %532
      %v536 = vsel %vm446, %v531, 0
      %538 = vmatprep.subr.mxu0 0.0
      %539 = vmatpush1.msra.mxu0 0.0
      %540 = vmatprep.subr.mxu0 0.0
      %541 = vmatpush1.msra.mxu0 0.0
      %542 = vmatprep.subr.mxu0 0.0
      %543 = vmatpush1.msra.mxu0 0.0
      %544 = vmatprep.subr.mxu0 0.0
      %545 = vmatpush1.msra.mxu0 0.0
      %546 = vmatprep.subr.mxu0 0.0
      %547 = vmatpush1.msra.mxu0 0.0
      %548 = vmatprep.subr.mxu0 0.0
      %549 = vmatpush1.msra.mxu0 0.0
      %550 = vmatprep.subr.mxu0 0.0
      %551 = vmatpush1.msra.mxu0 0.0
      %552 = vmatprep.subr.mxu0 0.0
      %553 = vmatpush1.msra.mxu0 0.0
      %554 = vmatprep.subr.mxu0 0.0
      %555 = vmatpush1.msra.mxu0 0.0
      %556 = vmatprep.subr.mxu0 0.0
      %557 = vmatpush1.msra.mxu0 0.0
      %558 = vmatprep.subr.mxu0 0.0
      %559 = vmatpush1.msra.mxu0 0.0
      %560 = vmatprep.subr.mxu0 0.0
      %561 = vmatpush1.msra.mxu0 0.0
      %562 = vmatprep.subr.mxu0 0.0
      %563 = vmatpush1.msra.mxu0 0.0
      %564 = vmatprep.subr.mxu0 0.0
      %565 = vmatpush1.msra.mxu0 0.0
      %566 = vmatprep.subr.mxu0 0.0
      %567 = vmatpush1.msra.mxu0 0.0
      %568 = vmatprep.subr.mxu0 0.0
      %569 = vmatpush1.msra.mxu0 %v533
      %570 = vmatprep.subr.mxu0 0.0
      %571 = vmatpush2.msra.mxu0 0.0
      %572 = vmatprep.subr.mxu0 0.0
      %573 = vmatpush2.msra.mxu0 0.0
      %574 = vmatprep.subr.mxu0 0.0
      %575 = vmatpush2.msra.mxu0 0.0
      %576 = vmatprep.subr.mxu0 0.0
      %577 = vmatpush2.msra.mxu0 0.0
      %578 = vmatprep.subr.mxu0 0.0
      %579 = vmatpush2.msra.mxu0 0.0
      %580 = vmatprep.subr.mxu0 0.0
      %581 = vmatpush2.msra.mxu0 0.0
      %582 = vmatprep.subr.mxu0 0.0
      %583 = vmatpush2.msra.mxu0 0.0
      %584 = vmatprep.subr.mxu0 0.0
      %585 = vmatpush2.msra.mxu0 0.0
      %586 = vmatprep.subr.mxu0 0.0
      %587 = vmatpush2.msra.mxu0 0.0
      %588 = vmatprep.subr.mxu0 0.0
      %589 = vmatpush2.msra.mxu0 0.0
      %590 = vmatprep.subr.mxu0 0.0
      %591 = vmatpush2.msra.mxu0 0.0
      %592 = vmatprep.subr.mxu0 0.0
      %593 = vmatpush2.msra.mxu0 0.0
      %594 = vmatprep.subr.mxu0 0.0
      %595 = vmatpush2.msra.mxu0 0.0
      %596 = vmatprep.subr.mxu0 0.0
      %597 = vmatpush2.msra.mxu0 0.0
      %598 = vmatprep.subr.mxu0 0.0
      %599 = vmatpush2.msra.mxu0 0.0
      %600 = vmatprep.subr.mxu0 0.0
      %601 = vmatpush2.msra.mxu0 0.0
      %602 = vmatprep.mubr.f32.mxu0 0.0
      %603 = vmatmul.mubr.f32.gmra.mxu0 %v536
      %v604 = vpop.f32.mrf.mxu0
      %v605 = vadd.f32 0.0, %v604
      %v606 = vpop.f32.mrf.mxu0
      %607 = vdwg.mxu0
      %608 = vrot.lane.b32.xlu0 %v440, 120
      %v609 = vpop.permute.xlu0 %608
      %610 = vrot.lane.b32.xlu0 %v440, 88
      %v611 = vpop.permute.xlu0 %610
      %v612 = vsel %vm446, %v609, 0
      %v614 = vsel %vm446, %v611, 0
      %616 = vmatprep.subr.mxu0 0.0
      %617 = vmatpush1.xpose.msra.mxu0 0.0
      %618 = vmatprep.subr.mxu0 0.0
      %619 = vmatpush1.xpose.msra.mxu0 0.0
      %620 = vmatprep.subr.mxu0 0.0
      %621 = vmatpush1.xpose.msra.mxu0 0.0
      %622 = vmatprep.subr.mxu0 0.0
      %623 = vmatpush1.xpose.msra.mxu0 0.0
      %624 = vmatprep.subr.mxu0 0.0
      %625 = vmatpush1.xpose.msra.mxu0 0.0
      %626 = vmatprep.subr.mxu0 0.0
      %627 = vmatpush1.xpose.msra.mxu0 0.0
      %628 = vmatprep.subr.mxu0 0.0
      %629 = vmatpush1.xpose.msra.mxu0 0.0
      %630 = vmatprep.subr.mxu0 0.0
      %631 = vmatpush1.xpose.msra.mxu0 0.0
      %632 = vmatprep.subr.mxu0 0.0
      %633 = vmatpush1.xpose.msra.mxu0 0.0
      %634 = vmatprep.subr.mxu0 0.0
      %635 = vmatpush1.xpose.msra.mxu0 0.0
      %636 = vmatprep.subr.mxu0 0.0
      %637 = vmatpush1.xpose.msra.mxu0 0.0
      %638 = vmatprep.subr.mxu0 0.0
      %639 = vmatpush1.xpose.msra.mxu0 0.0
      %640 = vmatprep.subr.mxu0 0.0
      %641 = vmatpush1.xpose.msra.mxu0 0.0
      %642 = vmatprep.subr.mxu0 0.0
      %643 = vmatpush1.xpose.msra.mxu0 0.0
      %644 = vmatprep.subr.mxu0 0.0
      %645 = vmatpush1.xpose.msra.mxu0 0.0
      %646 = vmatprep.subr.mxu0 0.0
      %647 = vmatpush1.xpose.msra.mxu0 %v614
      %648 = vmatprep.subr.mxu0 0.0
      %649 = vmatpush2.xpose.msra.mxu0 0.0
      %650 = vmatprep.subr.mxu0 0.0
      %651 = vmatpush2.xpose.msra.mxu0 0.0
      %652 = vmatprep.subr.mxu0 0.0
      %653 = vmatpush2.xpose.msra.mxu0 0.0
      %654 = vmatprep.subr.mxu0 0.0
      %655 = vmatpush2.xpose.msra.mxu0 0.0
      %656 = vmatprep.subr.mxu0 0.0
      %657 = vmatpush2.xpose.msra.mxu0 0.0
      %658 = vmatprep.subr.mxu0 0.0
      %659 = vmatpush2.xpose.msra.mxu0 0.0
      %660 = vmatprep.subr.mxu0 0.0
      %661 = vmatpush2.xpose.msra.mxu0 0.0
      %662 = vmatprep.subr.mxu0 0.0
      %663 = vmatpush2.xpose.msra.mxu0 0.0
      %664 = vmatprep.subr.mxu0 0.0
      %665 = vmatpush2.xpose.msra.mxu0 0.0
      %666 = vmatprep.subr.mxu0 0.0
      %667 = vmatpush2.xpose.msra.mxu0 0.0
      %668 = vmatprep.subr.mxu0 0.0
      %669 = vmatpush2.xpose.msra.mxu0 0.0
      %670 = vmatprep.subr.mxu0 0.0
      %671 = vmatpush2.xpose.msra.mxu0 0.0
      %672 = vmatprep.subr.mxu0 0.0
      %673 = vmatpush2.xpose.msra.mxu0 0.0
      %674 = vmatprep.subr.mxu0 0.0
      %675 = vmatpush2.xpose.msra.mxu0 0.0
      %676 = vmatprep.subr.mxu0 0.0
      %677 = vmatpush2.xpose.msra.mxu0 0.0
      %678 = vmatprep.subr.mxu0 0.0
      %679 = vmatpush2.xpose.msra.mxu0 0.0
      %680 = vmatprep.mubr.f32.mxu0 0.0
      %681 = vmatmul.mubr.f32.gmra.mxu0 %v612
      %v682 = vpop.f32.mrf.mxu0
      %v683 = vadd.f32 %v359, %v682
      %v684 = vpop.f32.mrf.mxu0
      %685 = vdwg.mxu0
      %v686 = vsel %vm446, %v683, -inf
      %687 = vmax.xlane.f32.xlu0 %v686
      %v688 = vpop.xlane.xlu0 %687
      %v689 = vsub.f32 %v683, %v688
      %v690 = vmul.f32 %v689, 1.442695
      %v691 = vpow.pop %v690
      %v692 = vsel %vm446, %v691, 0.0
      %693 = vadd.xlane.f32.xlu0 %v692
      %v694 = vpop.xlane.xlu0 %693
      %v695 = vrcp.pop %v694
      %v696 = vmul.f32 %v691, %v695
      %697 = vrot.lane.b32.xlu0 %v440, 56
      %v698 = vpop.permute.xlu0 %697
      %v701 = vsel %vm446, %v696, 0
      %703 = vmatprep.subr.mxu0 0.0
      %704 = vmatpush1.msra.mxu0 0.0
      %705 = vmatprep.subr.mxu0 0.0
      %706 = vmatpush1.msra.mxu0 0.0
      %707 = vmatprep.subr.mxu0 0.0
      %708 = vmatpush1.msra.mxu0 0.0
      %709 = vmatprep.subr.mxu0 0.0
      %710 = vmatpush1.msra.mxu0 0.0
      %711 = vmatprep.subr.mxu0 0.0
      %712 = vmatpush1.msra.mxu0 0.0
      %713 = vmatprep.subr.mxu0 0.0
      %714 = vmatpush1.msra.mxu0 0.0
      %715 = vmatprep.subr.mxu0 0.0
      %716 = vmatpush1.msra.mxu0 0.0
      %717 = vmatprep.subr.mxu0 0.0
      %718 = vmatpush1.msra.mxu0 0.0
      %719 = vmatprep.subr.mxu0 0.0
      %720 = vmatpush1.msra.mxu0 0.0
      %721 = vmatprep.subr.mxu0 0.0
      %722 = vmatpush1.msra.mxu0 0.0
      %723 = vmatprep.subr.mxu0 0.0
      %724 = vmatpush1.msra.mxu0 0.0
      %725 = vmatprep.subr.mxu0 0.0
      %726 = vmatpush1.msra.mxu0 0.0
      %727 = vmatprep.subr.mxu0 0.0
      %728 = vmatpush1.msra.mxu0 0.0
      %729 = vmatprep.subr.mxu0 0.0
      %730 = vmatpush1.msra.mxu0 0.0
      %731 = vmatprep.subr.mxu0 0.0
      %732 = vmatpush1.msra.mxu0 0.0
      %733 = vmatprep.subr.mxu0 0.0
      %734 = vmatpush1.msra.mxu0 %v698
      %735 = vmatprep.subr.mxu0 0.0
      %736 = vmatpush2.msra.mxu0 0.0
      %737 = vmatprep.subr.mxu0 0.0
      %738 = vmatpush2.msra.mxu0 0.0
      %739 = vmatprep.subr.mxu0 0.0
      %740 = vmatpush2.msra.mxu0 0.0
      %741 = vmatprep.subr.mxu0 0.0
      %742 = vmatpush2.msra.mxu0 0.0
      %743 = vmatprep.subr.mxu0 0.0
      %744 = vmatpush2.msra.mxu0 0.0
      %745 = vmatprep.subr.mxu0 0.0
      %746 = vmatpush2.msra.mxu0 0.0
      %747 = vmatprep.subr.mxu0 0.0
      %748 = vmatpush2.msra.mxu0 0.0
      %749 = vmatprep.subr.mxu0 0.0
      %750 = vmatpush2.msra.mxu0 0.0
      %751 = vmatprep.subr.mxu0 0.0
      %752 = vmatpush2.msra.mxu0 0.0
      %753 = vmatprep.subr.mxu0 0.0
      %754 = vmatpush2.msra.mxu0 0.0
      %755 = vmatprep.subr.mxu0 0.0
      %756 = vmatpush2.msra.mxu0 0.0
      %757 = vmatprep.subr.mxu0 0.0
      %758 = vmatpush2.msra.mxu0 0.0
      %759 = vmatprep.subr.mxu0 0.0
      %760 = vmatpush2.msra.mxu0 0.0
      %761 = vmatprep.subr.mxu0 0.0
      %762 = vmatpush2.msra.mxu0 0.0
      %763 = vmatprep.subr.mxu0 0.0
      %764 = vmatpush2.msra.mxu0 0.0
      %765 = vmatprep.subr.mxu0 0.0
      %766 = vmatpush2.msra.mxu0 0.0
      %767 = vmatprep.mubr.f32.mxu0 0.0
      %768 = vmatmul.mubr.f32.gmra.mxu0 %v701
      %v769 = vpop.f32.mrf.mxu0
      %v770 = vadd.f32 0.0, %v769
      %v771 = vpop.f32.mrf.mxu0
      %772 = vdwg.mxu0
      %773 = vrot.lane.b32.xlu0 %v440, 112
      %v774 = vpop.permute.xlu0 %773
      %775 = vrot.lane.b32.xlu0 %v440, 80
      %v776 = vpop.permute.xlu0 %775
      %v777 = vsel %vm446, %v774, 0
      %v779 = vsel %vm446, %v776, 0
      %781 = vmatprep.subr.mxu0 0.0
      %782 = vmatpush1.xpose.msra.mxu0 0.0
      %783 = vmatprep.subr.mxu0 0.0
      %784 = vmatpush1.xpose.msra.mxu0 0.0
      %785 = vmatprep.subr.mxu0 0.0
      %786 = vmatpush1.xpose.msra.mxu0 0.0
      %787 = vmatprep.subr.mxu0 0.0
      %788 = vmatpush1.xpose.msra.mxu0 0.0
      %789 = vmatprep.subr.mxu0 0.0
      %790 = vmatpush1.xpose.msra.mxu0 0.0
      %791 = vmatprep.subr.mxu0 0.0
      %792 = vmatpush1.xpose.msra.mxu0 0.0
      %793 = vmatprep.subr.mxu0 0.0
      %794 = vmatpush1.xpose.msra.mxu0 0.0
      %795 = vmatprep.subr.mxu0 0.0
      %796 = vmatpush1.xpose.msra.mxu0 0.0
      %797 = vmatprep.subr.mxu0 0.0
      %798 = vmatpush1.xpose.msra.mxu0 0.0
      %799 = vmatprep.subr.mxu0 0.0
      %800 = vmatpush1.xpose.msra.mxu0 0.0
      %801 = vmatprep.subr.mxu0 0.0
      %802 = vmatpush1.xpose.msra.mxu0 0.0
      %803 = vmatprep.subr.mxu0 0.0
      %804 = vmatpush1.xpose.msra.mxu0 0.0
      %805 = vmatprep.subr.mxu0 0.0
      %806 = vmatpush1.xpose.msra.mxu0 0.0
      %807 = vmatprep.subr.mxu0 0.0
      %808 = vmatpush1.xpose.msra.mxu0 0.0
      %809 = vmatprep.subr.mxu0 0.0
      %810 = vmatpush1.xpose.msra.mxu0 0.0
      %811 = vmatprep.subr.mxu0 0.0
      %812 = vmatpush1.xpose.msra.mxu0 %v779
      %813 = vmatprep.subr.mxu0 0.0
      %814 = vmatpush2.xpose.msra.mxu0 0.0
      %815 = vmatprep.subr.mxu0 0.0
      %816 = vmatpush2.xpose.msra.mxu0 0.0
      %817 = vmatprep.subr.mxu0 0.0
      %818 = vmatpush2.xpose.msra.mxu0 0.0
      %819 = vmatprep.subr.mxu0 0.0
      %820 = vmatpush2.xpose.msra.mxu0 0.0
      %821 = vmatprep.subr.mxu0 0.0
      %822 = vmatpush2.xpose.msra.mxu0 0.0
      %823 = vmatprep.subr.mxu0 0.0
      %824 = vmatpush2.xpose.msra.mxu0 0.0
      %825 = vmatprep.subr.mxu0 0.0
      %826 = vmatpush2.xpose.msra.mxu0 0.0
      %827 = vmatprep.subr.mxu0 0.0
      %828 = vmatpush2.xpose.msra.mxu0 0.0
      %829 = vmatprep.subr.mxu0 0.0
      %830 = vmatpush2.xpose.msra.mxu0 0.0
      %831 = vmatprep.subr.mxu0 0.0
      %832 = vmatpush2.xpose.msra.mxu0 0.0
      %833 = vmatprep.subr.mxu0 0.0
      %834 = vmatpush2.xpose.msra.mxu0 0.0
      %835 = vmatprep.subr.mxu0 0.0
      %836 = vmatpush2.xpose.msra.mxu0 0.0
      %837 = vmatprep.subr.mxu0 0.0
      %838 = vmatpush2.xpose.msra.mxu0 0.0
      %839 = vmatprep.subr.mxu0 0.0
      %840 = vmatpush2.xpose.msra.mxu0 0.0
      %841 = vmatprep.subr.mxu0 0.0
      %842 = vmatpush2.xpose.msra.mxu0 0.0
      %843 = vmatprep.subr.mxu0 0.0
      %844 = vmatpush2.xpose.msra.mxu0 0.0
      %845 = vmatprep.mubr.f32.mxu0 0.0
      %846 = vmatmul.mubr.f32.gmra.mxu0 %v777
      %v847 = vpop.f32.mrf.mxu0
      %v848 = vadd.f32 %v359, %v847
      %v849 = vpop.f32.mrf.mxu0
      %850 = vdwg.mxu0
      %v851 = vsel %vm446, %v848, -inf
      %852 = vmax.xlane.f32.xlu0 %v851
      %v853 = vpop.xlane.xlu0 %852
      %v854 = vsub.f32 %v848, %v853
      %v855 = vmul.f32 %v854, 1.442695
      %v856 = vpow.pop %v855
      %v857 = vsel %vm446, %v856, 0.0
      %858 = vadd.xlane.f32.xlu0 %v857
      %v859 = vpop.xlane.xlu0 %858
      %v860 = vrcp.pop %v859
      %v861 = vmul.f32 %v856, %v860
      %862 = vrot.lane.b32.xlu0 %v440, 48
      %v863 = vpop.permute.xlu0 %862
      %v866 = vsel %vm446, %v861, 0
      %868 = vmatprep.subr.mxu0 0.0
      %869 = vmatpush1.msra.mxu0 0.0
      %870 = vmatprep.subr.mxu0 0.0
      %871 = vmatpush1.msra.mxu0 0.0
      %872 = vmatprep.subr.mxu0 0.0
      %873 = vmatpush1.msra.mxu0 0.0
      %874 = vmatprep.subr.mxu0 0.0
      %875 = vmatpush1.msra.mxu0 0.0
      %876 = vmatprep.subr.mxu0 0.0
      %877 = vmatpush1.msra.mxu0 0.0
      %878 = vmatprep.subr.mxu0 0.0
      %879 = vmatpush1.msra.mxu0 0.0
      %880 = vmatprep.subr.mxu0 0.0
      %881 = vmatpush1.msra.mxu0 0.0
      %882 = vmatprep.subr.mxu0 0.0
      %883 = vmatpush1.msra.mxu0 0.0
      %884 = vmatprep.subr.mxu0 0.0
      %885 = vmatpush1.msra.mxu0 0.0
      %886 = vmatprep.subr.mxu0 0.0
      %887 = vmatpush1.msra.mxu0 0.0
      %888 = vmatprep.subr.mxu0 0.0
      %889 = vmatpush1.msra.mxu0 0.0
      %890 = vmatprep.subr.mxu0 0.0
      %891 = vmatpush1.msra.mxu0 0.0
      %892 = vmatprep.subr.mxu0 0.0
      %893 = vmatpush1.msra.mxu0 0.0
      %894 = vmatprep.subr.mxu0 0.0
      %895 = vmatpush1.msra.mxu0 0.0
      %896 = vmatprep.subr.mxu0 0.0
      %897 = vmatpush1.msra.mxu0 0.0
      %898 = vmatprep.subr.mxu0 0.0
      %899 = vmatpush1.msra.mxu0 %v863
      %900 = vmatprep.subr.mxu0 0.0
      %901 = vmatpush2.msra.mxu0 0.0
      %902 = vmatprep.subr.mxu0 0.0
      %903 = vmatpush2.msra.mxu0 0.0
      %904 = vmatprep.subr.mxu0 0.0
      %905 = vmatpush2.msra.mxu0 0.0
      %906 = vmatprep.subr.mxu0 0.0
      %907 = vmatpush2.msra.mxu0 0.0
      %908 = vmatprep.subr.mxu0 0.0
      %909 = vmatpush2.msra.mxu0 0.0
      %910 = vmatprep.subr.mxu0 0.0
      %911 = vmatpush2.msra.mxu0 0.0
      %912 = vmatprep.subr.mxu0 0.0
      %913 = vmatpush2.msra.mxu0 0.0
      %914 = vmatprep.subr.mxu0 0.0
      %915 = vmatpush2.msra.mxu0 0.0
      %916 = vmatprep.subr.mxu0 0.0
      %917 = vmatpush2.msra.mxu0 0.0
      %918 = vmatprep.subr.mxu0 0.0
      %919 = vmatpush2.msra.mxu0 0.0
      %920 = vmatprep.subr.mxu0 0.0
      %921 = vmatpush2.msra.mxu0 0.0
      %922 = vmatprep.subr.mxu0 0.0
      %923 = vmatpush2.msra.mxu0 0.0
      %924 = vmatprep.subr.mxu0 0.0
      %925 = vmatpush2.msra.mxu0 0.0
      %926 = vmatprep.subr.mxu0 0.0
      %927 = vmatpush2.msra.mxu0 0.0
      %928 = vmatprep.subr.mxu0 0.0
      %929 = vmatpush2.msra.mxu0 0.0
      %930 = vmatprep.subr.mxu0 0.0
      %931 = vmatpush2.msra.mxu0 0.0
      %932 = vmatprep.mubr.f32.mxu0 0.0
      %933 = vmatmul.mubr.f32.gmra.mxu0 %v866
      %v934 = vpop.f32.mrf.mxu0
      %v935 = vadd.f32 0.0, %v934
      %v936 = vpop.f32.mrf.mxu0
      %937 = vdwg.mxu0
      %938 = vrot.lane.b32.xlu0 %v440, 104
      %v939 = vpop.permute.xlu0 %938
      %940 = vrot.lane.b32.xlu0 %v440, 72
      %v941 = vpop.permute.xlu0 %940
      %v942 = vsel %vm446, %v939, 0
      %v944 = vsel %vm446, %v941, 0
      %946 = vmatprep.subr.mxu0 0.0
      %947 = vmatpush1.xpose.msra.mxu0 0.0
      %948 = vmatprep.subr.mxu0 0.0
      %949 = vmatpush1.xpose.msra.mxu0 0.0
      %950 = vmatprep.subr.mxu0 0.0
      %951 = vmatpush1.xpose.msra.mxu0 0.0
      %952 = vmatprep.subr.mxu0 0.0
      %953 = vmatpush1.xpose.msra.mxu0 0.0
      %954 = vmatprep.subr.mxu0 0.0
      %955 = vmatpush1.xpose.msra.mxu0 0.0
      %956 = vmatprep.subr.mxu0 0.0
      %957 = vmatpush1.xpose.msra.mxu0 0.0
      %958 = vmatprep.subr.mxu0 0.0
      %959 = vmatpush1.xpose.msra.mxu0 0.0
      %960 = vmatprep.subr.mxu0 0.0
      %961 = vmatpush1.xpose.msra.mxu0 0.0
      %962 = vmatprep.subr.mxu0 0.0
      %963 = vmatpush1.xpose.msra.mxu0 0.0
      %964 = vmatprep.subr.mxu0 0.0
      %965 = vmatpush1.xpose.msra.mxu0 0.0
      %966 = vmatprep.subr.mxu0 0.0
      %967 = vmatpush1.xpose.msra.mxu0 0.0
      %968 = vmatprep.subr.mxu0 0.0
      %969 = vmatpush1.xpose.msra.mxu0 0.0
      %970 = vmatprep.subr.mxu0 0.0
      %971 = vmatpush1.xpose.msra.mxu0 0.0
      %972 = vmatprep.subr.mxu0 0.0
      %973 = vmatpush1.xpose.msra.mxu0 0.0
      %974 = vmatprep.subr.mxu0 0.0
      %975 = vmatpush1.xpose.msra.mxu0 0.0
      %976 = vmatprep.subr.mxu0 0.0
      %977 = vmatpush1.xpose.msra.mxu0 %v944
      %978 = vmatprep.subr.mxu0 0.0
      %979 = vmatpush2.xpose.msra.mxu0 0.0
      %980 = vmatprep.subr.mxu0 0.0
      %981 = vmatpush2.xpose.msra.mxu0 0.0
      %982 = vmatprep.subr.mxu0 0.0
      %983 = vmatpush2.xpose.msra.mxu0 0.0
      %984 = vmatprep.subr.mxu0 0.0
      %985 = vmatpush2.xpose.msra.mxu0 0.0
      %986 = vmatprep.subr.mxu0 0.0
      %987 = vmatpush2.xpose.msra.mxu0 0.0
      %988 = vmatprep.subr.mxu0 0.0
      %989 = vmatpush2.xpose.msra.mxu0 0.0
      %990 = vmatprep.subr.mxu0 0.0
      %991 = vmatpush2.xpose.msra.mxu0 0.0
      %992 = vmatprep.subr.mxu0 0.0
      %993 = vmatpush2.xpose.msra.mxu0 0.0
      %994 = vmatprep.subr.mxu0 0.0
      %995 = vmatpush2.xpose.msra.mxu0 0.0
      %996 = vmatprep.subr.mxu0 0.0
      %997 = vmatpush2.xpose.msra.mxu0 0.0
      %998 = vmatprep.subr.mxu0 0.0
      %999 = vmatpush2.xpose.msra.mxu0 0.0
      %1000 = vmatprep.subr.mxu0 0.0
      %1001 = vmatpush2.xpose.msra.mxu0 0.0
      %1002 = vmatprep.subr.mxu0 0.0
      %1003 = vmatpush2.xpose.msra.mxu0 0.0
      %1004 = vmatprep.subr.mxu0 0.0
      %1005 = vmatpush2.xpose.msra.mxu0 0.0
      %1006 = vmatprep.subr.mxu0 0.0
      %1007 = vmatpush2.xpose.msra.mxu0 0.0
      %1008 = vmatprep.subr.mxu0 0.0
      %1009 = vmatpush2.xpose.msra.mxu0 0.0
      %1010 = vmatprep.mubr.f32.mxu0 0.0
      %1011 = vmatmul.mubr.f32.gmra.mxu0 %v942
      %v1012 = vpop.f32.mrf.mxu0
      %v1013 = vadd.f32 %v359, %v1012
      %v1014 = vpop.f32.mrf.mxu0
      %1015 = vdwg.mxu0
      %v1016 = vsel %vm446, %v1013, -inf
      %1017 = vmax.xlane.f32.xlu0 %v1016
      %v1018 = vpop.xlane.xlu0 %1017
      %v1019 = vsub.f32 %v1013, %v1018
      %v1020 = vmul.f32 %v1019, 1.442695
      %v1021 = vpow.pop %v1020
      %v1022 = vsel %vm446, %v1021, 0.0
      %1023 = vadd.xlane.f32.xlu0 %v1022
      %v1024 = vpop.xlane.xlu0 %1023
      %v1025 = vrcp.pop %v1024
      %v1026 = vmul.f32 %v1021, %v1025
      %1027 = vrot.lane.b32.xlu0 %v440, 40
      %v1028 = vpop.permute.xlu0 %1027
      %v1031 = vsel %vm446, %v1026, 0
      %1033 = vmatprep.subr.mxu0 0.0
      %1034 = vmatpush1.msra.mxu0 0.0
      %1035 = vmatprep.subr.mxu0 0.0
      %1036 = vmatpush1.msra.mxu0 0.0
      %1037 = vmatprep.subr.mxu0 0.0
      %1038 = vmatpush1.msra.mxu0 0.0
      %1039 = vmatprep.subr.mxu0 0.0
      %1040 = vmatpush1.msra.mxu0 0.0
      %1041 = vmatprep.subr.mxu0 0.0
      %1042 = vmatpush1.msra.mxu0 0.0
      %1043 = vmatprep.subr.mxu0 0.0
      %1044 = vmatpush1.msra.mxu0 0.0
      %1045 = vmatprep.subr.mxu0 0.0
      %1046 = vmatpush1.msra.mxu0 0.0
      %1047 = vmatprep.subr.mxu0 0.0
      %1048 = vmatpush1.msra.mxu0 0.0
      %1049 = vmatprep.subr.mxu0 0.0
      %1050 = vmatpush1.msra.mxu0 0.0
      %1051 = vmatprep.subr.mxu0 0.0
      %1052 = vmatpush1.msra.mxu0 0.0
      %1053 = vmatprep.subr.mxu0 0.0
      %1054 = vmatpush1.msra.mxu0 0.0
      %1055 = vmatprep.subr.mxu0 0.0
      %1056 = vmatpush1.msra.mxu0 0.0
      %1057 = vmatprep.subr.mxu0 0.0
      %1058 = vmatpush1.msra.mxu0 0.0
      %1059 = vmatprep.subr.mxu0 0.0
      %1060 = vmatpush1.msra.mxu0 0.0
      %1061 = vmatprep.subr.mxu0 0.0
      %1062 = vmatpush1.msra.mxu0 0.0
      %1063 = vmatprep.subr.mxu0 0.0
      %1064 = vmatpush1.msra.mxu0 %v1028
      %1065 = vmatprep.subr.mxu0 0.0
      %1066 = vmatpush2.msra.mxu0 0.0
      %1067 = vmatprep.subr.mxu0 0.0
      %1068 = vmatpush2.msra.mxu0 0.0
      %1069 = vmatprep.subr.mxu0 0.0
      %1070 = vmatpush2.msra.mxu0 0.0
      %1071 = vmatprep.subr.mxu0 0.0
      %1072 = vmatpush2.msra.mxu0 0.0
      %1073 = vmatprep.subr.mxu0 0.0
      %1074 = vmatpush2.msra.mxu0 0.0
      %1075 = vmatprep.subr.mxu0 0.0
      %1076 = vmatpush2.msra.mxu0 0.0
      %1077 = vmatprep.subr.mxu0 0.0
      %1078 = vmatpush2.msra.mxu0 0.0
      %1079 = vmatprep.subr.mxu0 0.0
      %1080 = vmatpush2.msra.mxu0 0.0
      %1081 = vmatprep.subr.mxu0 0.0
      %1082 = vmatpush2.msra.mxu0 0.0
      %1083 = vmatprep.subr.mxu0 0.0
      %1084 = vmatpush2.msra.mxu0 0.0
      %1085 = vmatprep.subr.mxu0 0.0
      %1086 = vmatpush2.msra.mxu0 0.0
      %1087 = vmatprep.subr.mxu0 0.0
      %1088 = vmatpush2.msra.mxu0 0.0
      %1089 = vmatprep.subr.mxu0 0.0
      %1090 = vmatpush2.msra.mxu0 0.0
      %1091 = vmatprep.subr.mxu0 0.0
      %1092 = vmatpush2.msra.mxu0 0.0
      %1093 = vmatprep.subr.mxu0 0.0
      %1094 = vmatpush2.msra.mxu0 0.0
      %1095 = vmatprep.subr.mxu0 0.0
      %1096 = vmatpush2.msra.mxu0 0.0
      %1097 = vmatprep.mubr.f32.mxu0 0.0
      %1098 = vmatmul.mubr.f32.gmra.mxu0 %v1031
      %v1099 = vpop.f32.mrf.mxu0
      %v1100 = vadd.f32 0.0, %v1099
      %v1101 = vpop.f32.mrf.mxu0
      %1102 = vdwg.mxu0
      %1104 = vrot.lane.b32.xlu0 %v770, 8
      %v1105 = vpop.permute.xlu0 %1104
      %1108 = vrot.lane.b32.xlu0 %v935, 16
      %v1109 = vpop.permute.xlu0 %1108
      %1112 = vrot.lane.b32.xlu0 %v1100, 24
      %v1113 = vpop.permute.xlu0 %1112
      %v1115 = vsel %vm446, %v605, %v1105
      %vm1116 = vcmask 130048
      %v1117 = vsel %vm1116, %v1115, %v1109
      %vm1118 = vcmask 195584
      %v1119 = vsel %vm1118, %v1117, %v1113
      %v1120 = vld [vmem:[%s4] sm:$0xff]
      %v1121 = vld [vmem:[%s4 + $0x8] sm:$0xff]
      %v1122 = vld [vmem:[%s4 + $0x10] sm:$0xff]
      %v1123 = vld [vmem:[%s4 + $0x18] sm:$0xff]
      %v1124 = vlaneseq
      %v1125 = vshrl.u32 %v1124, 7
      %v1126 = vsub.s32 1, %v1125
      %v1127 = vrot.slane %v360, %v1126
      %v1129 = vsel %vm369, %v1119, 0
      %1131 = vmatprep.subr.mxu0 0.0
      %1132 = vmatpush1.msra.mxu0 0.0
      %1133 = vmatprep.subr.mxu0 0.0
      %1134 = vmatpush1.msra.mxu0 0.0
      %1135 = vmatprep.subr.mxu0 0.0
      %1136 = vmatpush1.msra.mxu0 0.0
      %1137 = vmatprep.subr.mxu0 0.0
      %1138 = vmatpush1.msra.mxu0 0.0
      %1139 = vmatprep.subr.mxu0 0.0
      %1140 = vmatpush1.msra.mxu0 0.0
      %1141 = vmatprep.subr.mxu0 0.0
      %1142 = vmatpush1.msra.mxu0 0.0
      %1143 = vmatprep.subr.mxu0 0.0
      %1144 = vmatpush1.msra.mxu0 0.0
      %1145 = vmatprep.subr.mxu0 0.0
      %1146 = vmatpush1.msra.mxu0 0.0
      %1147 = vmatprep.subr.mxu0 0.0
      %1148 = vmatpush1.msra.mxu0 0.0
      %1149 = vmatprep.subr.mxu0 0.0
      %1150 = vmatpush1.msra.mxu0 0.0
      %1151 = vmatprep.subr.mxu0 0.0
      %1152 = vmatpush1.msra.mxu0 0.0
      %1153 = vmatprep.subr.mxu0 0.0
      %1154 = vmatpush1.msra.mxu0 0.0
      %1155 = vmatprep.subr.mxu0 0.0
      %1156 = vmatpush1.msra.mxu0 %v1123
      %1157 = vmatprep.subr.mxu0 0.0
      %1158 = vmatpush1.msra.mxu0 %v1122
      %1159 = vmatprep.subr.mxu0 0.0
      %1160 = vmatpush1.msra.mxu0 %v1121
      %1161 = vmatprep.subr.mxu0 0.0
      %1162 = vmatpush1.msra.mxu0 %v1120
      %1163 = vmatprep.subr.mxu0 0.0
      %1164 = vmatpush2.msra.mxu0 0.0
      %1165 = vmatprep.subr.mxu0 0.0
      %1166 = vmatpush2.msra.mxu0 0.0
      %1167 = vmatprep.subr.mxu0 0.0
      %1168 = vmatpush2.msra.mxu0 0.0
      %1169 = vmatprep.subr.mxu0 0.0
      %1170 = vmatpush2.msra.mxu0 0.0
      %1171 = vmatprep.subr.mxu0 0.0
      %1172 = vmatpush2.msra.mxu0 0.0
      %1173 = vmatprep.subr.mxu0 0.0
      %1174 = vmatpush2.msra.mxu0 0.0
      %1175 = vmatprep.subr.mxu0 0.0
      %1176 = vmatpush2.msra.mxu0 0.0
      %1177 = vmatprep.subr.mxu0 0.0
      %1178 = vmatpush2.msra.mxu0 0.0
      %1179 = vmatprep.subr.mxu0 0.0
      %1180 = vmatpush2.msra.mxu0 0.0
      %1181 = vmatprep.subr.mxu0 0.0
      %1182 = vmatpush2.msra.mxu0 0.0
      %1183 = vmatprep.subr.mxu0 0.0
      %1184 = vmatpush2.msra.mxu0 0.0
      %1185 = vmatprep.subr.mxu0 0.0
      %1186 = vmatpush2.msra.mxu0 0.0
      %1187 = vmatprep.subr.mxu0 0.0
      %1188 = vmatpush2.msra.mxu0 0.0
      %1189 = vmatprep.subr.mxu0 0.0
      %1190 = vmatpush2.msra.mxu0 0.0
      %1191 = vmatprep.subr.mxu0 0.0
      %1192 = vmatpush2.msra.mxu0 0.0
      %1193 = vmatprep.subr.mxu0 0.0
      %1194 = vmatpush2.msra.mxu0 0.0
      %1195 = vmatprep.mubr.f32.mxu0 0.0
      %1196 = vmatmul.mubr.f32.gmra.mxu0 %v1129
      %v1197 = vpop.f32.mrf.mxu0
      %v1198 = vadd.f32 %v1127, %v1197
      %v1199 = vpop.f32.mrf.mxu0
      %1200 = vdwg.mxu0
      %v1201 = vadd.f32 %v358, %v1198
      %v1202 = vsel %vm369, %v1201, 0.0
      %1203 = vadd.xlane.f32.xlu0 %v1202
      %v1204 = vpop.xlane.xlu0 %1203
      %v1205 = vrcp.pop 32.0
      %v1206 = vmul.f32 %v1204, %v1205
      %v1207 = vsub.f32 %v1201, %v1206
      %v1208 = vmul.f32 %v1207, %v1207
      %v1209 = vsel %vm369, %v1208, 0.0
      %1210 = vadd.xlane.f32.xlu0 %v1209
      %v1211 = vpop.xlane.xlu0 %1210
      %v1212 = vmul.f32 %v1211, %v1205
      %v1213 = vadd.f32 %v1212, 1e-05
      %v1214 = vrsqrt.pop %v1213
      %v1215 = vmul.f32 %v1207, %v1214
      %v1216 = vlaneseq
      %v1217 = vshrl.u32 %v1216, 7
      %v1218 = vsub.s32 2, %v1217
      %v1219 = vrot.slane %v360, %v1218
      %v1220 = vmul.f32 %v1215, %v1219
      %v1221 = vlaneseq
      %v1222 = vshrl.u32 %v1221, 7
      %v1223 = vsub.s32 3, %v1222
      %v1224 = vrot.slane %v360, %v1223
      %v1225 = vadd.f32 %v1220, %v1224
      %v1226 = vld [vmem:[%s5] sm:$0xff]
      %v1227 = vld [vmem:[%s5 + $0x8] sm:$0xff]
      %v1228 = vld [vmem:[%s5 + $0x10] sm:$0xff]
      %v1229 = vld [vmem:[%s5 + $0x18] sm:$0xff]
      %v1230 = vlaneseq
      %v1231 = vshrl.u32 %v1230, 7
      %v1232 = vsub.s32 4, %v1231
      %v1233 = vrot.slane %v360, %v1232
      %v1235 = vsel %vm369, %v1225, 0
      %1237 = vmatprep.subr.mxu0 0.0
      %1238 = vmatpush1.msra.mxu0 0.0
      %1239 = vmatprep.subr.mxu0 0.0
      %1240 = vmatpush1.msra.mxu0 0.0
      %1241 = vmatprep.subr.mxu0 0.0
      %1242 = vmatpush1.msra.mxu0 0.0
      %1243 = vmatprep.subr.mxu0 0.0
      %1244 = vmatpush1.msra.mxu0 0.0
      %1245 = vmatprep.subr.mxu0 0.0
      %1246 = vmatpush1.msra.mxu0 0.0
      %1247 = vmatprep.subr.mxu0 0.0
      %1248 = vmatpush1.msra.mxu0 0.0
      %1249 = vmatprep.subr.mxu0 0.0
      %1250 = vmatpush1.msra.mxu0 0.0
      %1251 = vmatprep.subr.mxu0 0.0
      %1252 = vmatpush1.msra.mxu0 0.0
      %1253 = vmatprep.subr.mxu0 0.0
      %1254 = vmatpush1.msra.mxu0 0.0
      %1255 = vmatprep.subr.mxu0 0.0
      %1256 = vmatpush1.msra.mxu0 0.0
      %1257 = vmatprep.subr.mxu0 0.0
      %1258 = vmatpush1.msra.mxu0 0.0
      %1259 = vmatprep.subr.mxu0 0.0
      %1260 = vmatpush1.msra.mxu0 0.0
      %1261 = vmatprep.subr.mxu0 0.0
      %1262 = vmatpush1.msra.mxu0 %v1229
      %1263 = vmatprep.subr.mxu0 0.0
      %1264 = vmatpush1.msra.mxu0 %v1228
      %1265 = vmatprep.subr.mxu0 0.0
      %1266 = vmatpush1.msra.mxu0 %v1227
      %1267 = vmatprep.subr.mxu0 0.0
      %1268 = vmatpush1.msra.mxu0 %v1226
      %1269 = vmatprep.subr.mxu0 0.0
      %1270 = vmatpush2.msra.mxu0 0.0
      %1271 = vmatprep.subr.mxu0 0.0
      %1272 = vmatpush2.msra.mxu0 0.0
      %1273 = vmatprep.subr.mxu0 0.0
      %1274 = vmatpush2.msra.mxu0 0.0
      %1275 = vmatprep.subr.mxu0 0.0
      %1276 = vmatpush2.msra.mxu0 0.0
      %1277 = vmatprep.subr.mxu0 0.0
      %1278 = vmatpush2.msra.mxu0 0.0
      %1279 = vmatprep.subr.mxu0 0.0
      %1280 = vmatpush2.msra.mxu0 0.0
      %1281 = vmatprep.subr.mxu0 0.0
      %1282 = vmatpush2.msra.mxu0 0.0
      %1283 = vmatprep.subr.mxu0 0.0
      %1284 = vmatpush2.msra.mxu0 0.0
      %1285 = vmatprep.subr.mxu0 0.0
      %1286 = vmatpush2.msra.mxu0 0.0
      %1287 = vmatprep.subr.mxu0 0.0
      %1288 = vmatpush2.msra.mxu0 0.0
      %1289 = vmatprep.subr.mxu0 0.0
      %1290 = vmatpush2.msra.mxu0 0.0
      %1291 = vmatprep.subr.mxu0 0.0
      %1292 = vmatpush2.msra.mxu0 0.0
      %1293 = vmatprep.subr.mxu0 0.0
      %1294 = vmatpush2.msra.mxu0 0.0
      %1295 = vmatprep.subr.mxu0 0.0
      %1296 = vmatpush2.msra.mxu0 0.0
      %1297 = vmatprep.subr.mxu0 0.0
      %1298 = vmatpush2.msra.mxu0 0.0
      %1299 = vmatprep.subr.mxu0 0.0
      %1300 = vmatpush2.msra.mxu0 0.0
      %1301 = vmatprep.mubr.f32.mxu0 0.0
      %1302 = vmatmul.mubr.f32.gmra.mxu0 %v1235
      %v1303 = vpop.f32.mrf.mxu0
      %v1304 = vadd.f32 %v1233, %v1303
      %v1305 = vpop.f32.mrf.mxu0
      %1306 = vdwg.mxu0
      %v1307 = vmax.f32 %v1304, 0.0
      %v1308 = vld [vmem:[%s6] sm:$0xff]
      %v1309 = vld [vmem:[%s6 + $0x8] sm:$0xff]
      %v1310 = vld [vmem:[%s6 + $0x10] sm:$0xff]
      %v1311 = vld [vmem:[%s6 + $0x18] sm:$0xff]
      %v1312 = vld [vmem:[%s6 + $0x20] sm:$0xff]
      %v1313 = vld [vmem:[%s6 + $0x28] sm:$0xff]
      %v1314 = vld [vmem:[%s6 + $0x30] sm:$0xff]
      %v1315 = vld [vmem:[%s6 + $0x38] sm:$0xff]
      %v1316 = vlaneseq
      %v1317 = vshrl.u32 %v1316, 7
      %v1318 = vsub.s32 5, %v1317
      %v1319 = vrot.slane %v360, %v1318
      %vm1320 = vcmask 523264
      %v1322 = vsel %vm1320, %v1307, 0
      %1324 = vmatprep.subr.mxu0 0.0
      %1325 = vmatpush1.msra.mxu0 0.0
      %1326 = vmatprep.subr.mxu0 0.0
      %1327 = vmatpush1.msra.mxu0 0.0
      %1328 = vmatprep.subr.mxu0 0.0
      %1329 = vmatpush1.msra.mxu0 0.0
      %1330 = vmatprep.subr.mxu0 0.0
      %1331 = vmatpush1.msra.mxu0 0.0
      %1332 = vmatprep.subr.mxu0 0.0
      %1333 = vmatpush1.msra.mxu0 0.0
      %1334 = vmatprep.subr.mxu0 0.0
      %1335 = vmatpush1.msra.mxu0 0.0
      %1336 = vmatprep.subr.mxu0 0.0
      %1337 = vmatpush1.msra.mxu0 0.0
      %1338 = vmatprep.subr.mxu0 0.0
      %1339 = vmatpush1.msra.mxu0 0.0
      %1340 = vmatprep.subr.mxu0 0.0
      %1341 = vmatpush1.msra.mxu0 %v1315
      %1342 = vmatprep.subr.mxu0 0.0
      %1343 = vmatpush1.msra.mxu0 %v1314
      %1344 = vmatprep.subr.mxu0 0.0
      %1345 = vmatpush1.msra.mxu0 %v1313
      %1346 = vmatprep.subr.mxu0 0.0
      %1347 = vmatpush1.msra.mxu0 %v1312
      %1348 = vmatprep.subr.mxu0 0.0
      %1349 = vmatpush1.msra.mxu0 %v1311
      %1350 = vmatprep.subr.mxu0 0.0
      %1351 = vmatpush1.msra.mxu0 %v1310
      %1352 = vmatprep.subr.mxu0 0.0
      %1353 = vmatpush1.msra.mxu0 %v1309
      %1354 = vmatprep.subr.mxu0 0.0
      %1355 = vmatpush1.msra.mxu0 %v1308
      %1356 = vmatprep.subr.mxu0 0.0
      %1357 = vmatpush2.msra.mxu0 0.0
      %1358 = vmatprep.subr.mxu0 0.0
      %1359 = vmatpush2.msra.mxu0 0.0
      %1360 = vmatprep.subr.mxu0 0.0
      %1361 = vmatpush2.msra.mxu0 0.0
      %1362 = vmatprep.subr.mxu0 0.0
      %1363 = vmatpush2.msra.mxu0 0.0
      %1364 = vmatprep.subr.mxu0 0.0
      %1365 = vmatpush2.msra.mxu0 0.0
      %1366 = vmatprep.subr.mxu0 0.0
      %1367 = vmatpush2.msra.mxu0 0.0
      %1368 = vmatprep.subr.mxu0 0.0
      %1369 = vmatpush2.msra.mxu0 0.0
      %1370 = vmatprep.subr.mxu0 0.0
      %1371 = vmatpush2.msra.mxu0 0.0
      %1372 = vmatprep.subr.mxu0 0.0
      %1373 = vmatpush2.msra.mxu0 0.0
      %1374 = vmatprep.subr.mxu0 0.0
      %1375 = vmatpush2.msra.mxu0 0.0
      %1376 = vmatprep.subr.mxu0 0.0
      %1377 = vmatpush2.msra.mxu0 0.0
      %1378 = vmatprep.subr.mxu0 0.0
      %1379 = vmatpush2.msra.mxu0 0.0
      %1380 = vmatprep.subr.mxu0 0.0
      %1381 = vmatpush2.msra.mxu0 0.0
      %1382 = vmatprep.subr.mxu0 0.0
      %1383 = vmatpush2.msra.mxu0 0.0
      %1384 = vmatprep.subr.mxu0 0.0
      %1385 = vmatpush2.msra.mxu0 0.0
      %1386 = vmatprep.subr.mxu0 0.0
      %1387 = vmatpush2.msra.mxu0 0.0
      %1388 = vmatprep.mubr.f32.mxu0 0.0
      %1389 = vmatmul.mubr.f32.gmra.mxu0 %v1322
      %v1390 = vpop.f32.mrf.mxu0
      %v1391 = vadd.f32 %v1319, %v1390
      %v1392 = vpop.f32.mrf.mxu0
      %1393 = vdwg.mxu0
      %v1394 = vadd.f32 %v1225, %v1391
      %v1395 = vsel %vm369, %v1394, 0.0
      %1396 = vadd.xlane.f32.xlu0 %v1395
      %v1397 = vpop.xlane.xlu0 %1396
      %v1398 = vmul.f32 %v1397, %v1205
      %v1399 = vsub.f32 %v1394, %v1398
      %v1400 = vmul.f32 %v1399, %v1399
      %v1401 = vsel %vm369, %v1400, 0.0
      %1402 = vadd.xlane.f32.xlu0 %v1401
      %v1403 = vpop.xlane.xlu0 %1402
      %v1404 = vmul.f32 %v1403, %v1205
      %v1405 = vadd.f32 %v1404, 1e-05
      %v1406 = vrsqrt.pop %v1405
      %v1407 = vmul.f32 %v1399, %v1406
      %v1408 = vlaneseq
      %v1409 = vshrl.u32 %v1408, 7
      %v1410 = vsub.s32 6, %v1409
      %v1411 = vrot.slane %v360, %v1410
      %v1412 = vmul.f32 %v1407, %v1411
      %v1413 = vlaneseq
      %v1414 = vshrl.u32 %v1413, 7
      %v1415 = vsub.s32 7, %v1414
      %v1416 = vrot.slane %v360, %v1415
      %v1417 = vadd.f32 %v1412, %v1416
      %s1418 = scalar_lea.vmem %s7, 8
      %v1419 = vld [vmem:[%s1418] sm:$0xff]
      %s1420 = scalar_lea.vmem %s3, 32
      %v1421 = vld [vmem:[%s1420] sm:$0xff]
      %v1422 = vld [vmem:[%s1420 + $0x8] sm:$0xff]
      %v1423 = vld [vmem:[%s1420 + $0x10] sm:$0xff]
      %v1424 = vld [vmem:[%s1420 + $0x18] sm:$0xff]
      %v1425 = vlaneseq
      %v1426 = vshrl.u32 %v1425, 7
      %v1427 = vsub.s32 0, %v1426
      %v1428 = vrot.slane %v1419, %v1427
      %v1430 = vsel %vm369, %v1417, 0
      %1432 = vmatprep.subr.mxu0 0.0
      %1433 = vmatpush1.msra.mxu0 0.0
      %1434 = vmatprep.subr.mxu0 0.0
      %1435 = vmatpush1.msra.mxu0 0.0
      %1436 = vmatprep.subr.mxu0 0.0
      %1437 = vmatpush1.msra.mxu0 0.0
      %1438 = vmatprep.subr.mxu0 0.0
      %1439 = vmatpush1.msra.mxu0 0.0
      %1440 = vmatprep.subr.mxu0 0.0
      %1441 = vmatpush1.msra.mxu0 0.0
      %1442 = vmatprep.subr.mxu0 0.0
      %1443 = vmatpush1.msra.mxu0 0.0
      %1444 = vmatprep.subr.mxu0 0.0
      %1445 = vmatpush1.msra.mxu0 0.0
      %1446 = vmatprep.subr.mxu0 0.0
      %1447 = vmatpush1.msra.mxu0 0.0
      %1448 = vmatprep.subr.mxu0 0.0
      %1449 = vmatpush1.msra.mxu0 0.0
      %1450 = vmatprep.subr.mxu0 0.0
      %1451 = vmatpush1.msra.mxu0 0.0
      %1452 = vmatprep.subr.mxu0 0.0
      %1453 = vmatpush1.msra.mxu0 0.0
      %1454 = vmatprep.subr.mxu0 0.0
      %1455 = vmatpush1.msra.mxu0 0.0
      %1456 = vmatprep.subr.mxu0 0.0
      %1457 = vmatpush1.msra.mxu0 %v1424
      %1458 = vmatprep.subr.mxu0 0.0
      %1459 = vmatpush1.msra.mxu0 %v1423
      %1460 = vmatprep.subr.mxu0 0.0
      %1461 = vmatpush1.msra.mxu0 %v1422
      %1462 = vmatprep.subr.mxu0 0.0
      %1463 = vmatpush1.msra.mxu0 %v1421
      %1464 = vmatprep.subr.mxu0 0.0
      %1465 = vmatpush2.msra.mxu0 0.0
      %1466 = vmatprep.subr.mxu0 0.0
      %1467 = vmatpush2.msra.mxu0 0.0
      %1468 = vmatprep.subr.mxu0 0.0
      %1469 = vmatpush2.msra.mxu0 0.0
      %1470 = vmatprep.subr.mxu0 0.0
      %1471 = vmatpush2.msra.mxu0 0.0
      %1472 = vmatprep.subr.mxu0 0.0
      %1473 = vmatpush2.msra.mxu0 0.0
      %1474 = vmatprep.subr.mxu0 0.0
      %1475 = vmatpush2.msra.mxu0 0.0
      %1476 = vmatprep.subr.mxu0 0.0
      %1477 = vmatpush2.msra.mxu0 0.0
      %1478 = vmatprep.subr.mxu0 0.0
      %1479 = vmatpush2.msra.mxu0 0.0
      %1480 = vmatprep.subr.mxu0 0.0
      %1481 = vmatpush2.msra.mxu0 0.0
      %1482 = vmatprep.subr.mxu0 0.0
      %1483 = vmatpush2.msra.mxu0 0.0
      %1484 = vmatprep.subr.mxu0 0.0
      %1485 = vmatpush2.msra.mxu0 0.0
      %1486 = vmatprep.subr.mxu0 0.0
      %1487 = vmatpush2.msra.mxu0 0.0
      %1488 = vmatprep.subr.mxu0 0.0
      %1489 = vmatpush2.msra.mxu0 0.0
      %1490 = vmatprep.subr.mxu0 0.0
      %1491 = vmatpush2.msra.mxu0 0.0
      %1492 = vmatprep.subr.mxu0 0.0
      %1493 = vmatpush2.msra.mxu0 0.0
      %1494 = vmatprep.subr.mxu0 0.0
      %1495 = vmatpush2.msra.mxu0 0.0
      %1496 = vmatprep.mubr.f32.mxu0 0.0
      %1497 = vmatmul.mubr.f32.gmra.mxu0 %v1430
      %v1498 = vpop.f32.mrf.mxu0
      %v1499 = vadd.f32 %v1428, %v1498
      %v1500 = vpop.f32.mrf.mxu0
      %1501 = vdwg.mxu0
      %1503 = vrot.lane.b32.xlu0 %v1499, 96
      %v1504 = vpop.permute.xlu0 %1503
      %v1505 = vsel %vm446, %v1499, 0
      %v1507 = vsel %vm446, %v1504, 0
      %1509 = vmatprep.subr.mxu0 0.0
      %1510 = vmatpush1.xpose.msra.mxu0 0.0
      %1511 = vmatprep.subr.mxu0 0.0
      %1512 = vmatpush1.xpose.msra.mxu0 0.0
      %1513 = vmatprep.subr.mxu0 0.0
      %1514 = vmatpush1.xpose.msra.mxu0 0.0
      %1515 = vmatprep.subr.mxu0 0.0
      %1516 = vmatpush1.xpose.msra.mxu0 0.0
      %1517 = vmatprep.subr.mxu0 0.0
      %1518 = vmatpush1.xpose.msra.mxu0 0.0
      %1519 = vmatprep.subr.mxu0 0.0
      %1520 = vmatpush1.xpose.msra.mxu0 0.0
      %1521 = vmatprep.subr.mxu0 0.0
      %1522 = vmatpush1.xpose.msra.mxu0 0.0
      %1523 = vmatprep.subr.mxu0 0.0
      %1524 = vmatpush1.xpose.msra.mxu0 0.0
      %1525 = vmatprep.subr.mxu0 0.0
      %1526 = vmatpush1.xpose.msra.mxu0 0.0
      %1527 = vmatprep.subr.mxu0 0.0
      %1528 = vmatpush1.xpose.msra.mxu0 0.0
      %1529 = vmatprep.subr.mxu0 0.0
      %1530 = vmatpush1.xpose.msra.mxu0 0.0
      %1531 = vmatprep.subr.mxu0 0.0
      %1532 = vmatpush1.xpose.msra.mxu0 0.0
      %1533 = vmatprep.subr.mxu0 0.0
      %1534 = vmatpush1.xpose.msra.mxu0 0.0
      %1535 = vmatprep.subr.mxu0 0.0
      %1536 = vmatpush1.xpose.msra.mxu0 0.0
      %1537 = vmatprep.subr.mxu0 0.0
      %1538 = vmatpush1.xpose.msra.mxu0 0.0
      %1539 = vmatprep.subr.mxu0 0.0
      %1540 = vmatpush1.xpose.msra.mxu0 %v1507
      %1541 = vmatprep.subr.mxu0 0.0
      %1542 = vmatpush2.xpose.msra.mxu0 0.0
      %1543 = vmatprep.subr.mxu0 0.0
      %1544 = vmatpush2.xpose.msra.mxu0 0.0
      %1545 = vmatprep.subr.mxu0 0.0
      %1546 = vmatpush2.xpose.msra.mxu0 0.0
      %1547 = vmatprep.subr.mxu0 0.0
      %1548 = vmatpush2.xpose.msra.mxu0 0.0
      %1549 = vmatprep.subr.mxu0 0.0
      %1550 = vmatpush2.xpose.msra.mxu0 0.0
      %1551 = vmatprep.subr.mxu0 0.0
      %1552 = vmatpush2.xpose.msra.mxu0 0.0
      %1553 = vmatprep.subr.mxu0 0.0
      %1554 = vmatpush2.xpose.msra.mxu0 0.0
      %1555 = vmatprep.subr.mxu0 0.0
      %1556 = vmatpush2.xpose.msra.mxu0 0.0
      %1557 = vmatprep.subr.mxu0 0.0
      %1558 = vmatpush2.xpose.msra.mxu0 0.0
      %1559 = vmatprep.subr.mxu0 0.0
      %1560 = vmatpush2.xpose.msra.mxu0 0.0
      %1561 = vmatprep.subr.mxu0 0.0
      %1562 = vmatpush2.xpose.msra.mxu0 0.0
      %1563 = vmatprep.subr.mxu0 0.0
      %1564 = vmatpush2.xpose.msra.mxu0 0.0
      %1565 = vmatprep.subr.mxu0 0.0
      %1566 = vmatpush2.xpose.msra.mxu0 0.0
      %1567 = vmatprep.subr.mxu0 0.0
      %1568 = vmatpush2.xpose.msra.mxu0 0.0
      %1569 = vmatprep.subr.mxu0 0.0
      %1570 = vmatpush2.xpose.msra.mxu0 0.0
      %1571 = vmatprep.subr.mxu0 0.0
      %1572 = vmatpush2.xpose.msra.mxu0 0.0
      %1573 = vmatprep.mubr.f32.mxu0 0.0
      %1574 = vmatmul.mubr.f32.gmra.mxu0 %v1505
      %v1575 = vpop.f32.mrf.mxu0
      %v1576 = vadd.f32 %v359, %v1575
      %v1577 = vpop.f32.mrf.mxu0
      %1578 = vdwg.mxu0
      %v1579 = vsel %vm446, %v1576, -inf
      %1580 = vmax.xlane.f32.xlu0 %v1579
      %v1581 = vpop.xlane.xlu0 %1580
      %v1582 = vsub.f32 %v1576, %v1581
      %v1583 = vmul.f32 %v1582, 1.442695
      %v1584 = vpow.pop %v1583
      %v1585 = vsel %vm446, %v1584, 0.0
      %1586 = vadd.xlane.f32.xlu0 %v1585
      %v1587 = vpop.xlane.xlu0 %1586
      %v1588 = vrcp.pop %v1587
      %v1589 = vmul.f32 %v1584, %v1588
      %1590 = vrot.lane.b32.xlu0 %v1499, 64
      %v1591 = vpop.permute.xlu0 %1590
      %v1594 = vsel %vm446, %v1589, 0
      %1596 = vmatprep.subr.mxu0 0.0
      %1597 = vmatpush1.msra.mxu0 0.0
      %1598 = vmatprep.subr.mxu0 0.0
      %1599 = vmatpush1.msra.mxu0 0.0
      %1600 = vmatprep.subr.mxu0 0.0
      %1601 = vmatpush1.msra.mxu0 0.0
      %1602 = vmatprep.subr.mxu0 0.0
      %1603 = vmatpush1.msra.mxu0 0.0
      %1604 = vmatprep.subr.mxu0 0.0
      %1605 = vmatpush1.msra.mxu0 0.0
      %1606 = vmatprep.subr.mxu0 0.0
      %1607 = vmatpush1.msra.mxu0 0.0
      %1608 = vmatprep.subr.mxu0 0.0
      %1609 = vmatpush1.msra.mxu0 0.0
      %1610 = vmatprep.subr.mxu0 0.0
      %1611 = vmatpush1.msra.mxu0 0.0
      %1612 = vmatprep.subr.mxu0 0.0
      %1613 = vmatpush1.msra.mxu0 0.0
      %1614 = vmatprep.subr.mxu0 0.0
      %1615 = vmatpush1.msra.mxu0 0.0
      %1616 = vmatprep.subr.mxu0 0.0
      %1617 = vmatpush1.msra.mxu0 0.0
      %1618 = vmatprep.subr.mxu0 0.0
      %1619 = vmatpush1.msra.mxu0 0.0
      %1620 = vmatprep.subr.mxu0 0.0
      %1621 = vmatpush1.msra.mxu0 0.0
      %1622 = vmatprep.subr.mxu0 0.0
      %1623 = vmatpush1.msra.mxu0 0.0
      %1624 = vmatprep.subr.mxu0 0.0
      %1625 = vmatpush1.msra.mxu0 0.0
      %1626 = vmatprep.subr.mxu0 0.0
      %1627 = vmatpush1.msra.mxu0 %v1591
      %1628 = vmatprep.subr.mxu0 0.0
      %1629 = vmatpush2.msra.mxu0 0.0
      %1630 = vmatprep.subr.mxu0 0.0
      %1631 = vmatpush2.msra.mxu0 0.0
      %1632 = vmatprep.subr.mxu0 0.0
      %1633 = vmatpush2.msra.mxu0 0.0
      %1634 = vmatprep.subr.mxu0 0.0
      %1635 = vmatpush2.msra.mxu0 0.0
      %1636 = vmatprep.subr.mxu0 0.0
      %1637 = vmatpush2.msra.mxu0 0.0
      %1638 = vmatprep.subr.mxu0 0.0
      %1639 = vmatpush2.msra.mxu0 0.0
      %1640 = vmatprep.subr.mxu0 0.0
      %1641 = vmatpush2.msra.mxu0 0.0
      %1642 = vmatprep.subr.mxu0 0.0
      %1643 = vmatpush2.msra.mxu0 0.0
      %1644 = vmatprep.subr.mxu0 0.0
      %1645 = vmatpush2.msra.mxu0 0.0
      %1646 = vmatprep.subr.mxu0 0.0
      %1647 = vmatpush2.msra.mxu0 0.0
      %1648 = vmatprep.subr.mxu0 0.0
      %1649 = vmatpush2.msra.mxu0 0.0
      %1650 = vmatprep.subr.mxu0 0.0
      %1651 = vmatpush2.msra.mxu0 0.0
      %1652 = vmatprep.subr.mxu0 0.0
      %1653 = vmatpush2.msra.mxu0 0.0
      %1654 = vmatprep.subr.mxu0 0.0
      %1655 = vmatpush2.msra.mxu0 0.0
      %1656 = vmatprep.subr.mxu0 0.0
      %1657 = vmatpush2.msra.mxu0 0.0
      %1658 = vmatprep.subr.mxu0 0.0
      %1659 = vmatpush2.msra.mxu0 0.0
      %1660 = vmatprep.mubr.f32.mxu0 0.0
      %1661 = vmatmul.mubr.f32.gmra.mxu0 %v1594
      %v1662 = vpop.f32.mrf.mxu0
      %v1663 = vadd.f32 0.0, %v1662
      %v1664 = vpop.f32.mrf.mxu0
      %1665 = vdwg.mxu0
      %1666 = vrot.lane.b32.xlu0 %v1499, 120
      %v1667 = vpop.permute.xlu0 %1666
      %1668 = vrot.lane.b32.xlu0 %v1499, 88
      %v1669 = vpop.permute.xlu0 %1668
      %v1670 = vsel %vm446, %v1667, 0
      %v1672 = vsel %vm446, %v1669, 0
      %1674 = vmatprep.subr.mxu0 0.0
      %1675 = vmatpush1.xpose.msra.mxu0 0.0
      %1676 = vmatprep.subr.mxu0 0.0
      %1677 = vmatpush1.xpose.msra.mxu0 0.0
      %1678 = vmatprep.subr.mxu0 0.0
      %1679 = vmatpush1.xpose.msra.mxu0 0.0
      %1680 = vmatprep.subr.mxu0 0.0
      %1681 = vmatpush1.xpose.msra.mxu0 0.0
      %1682 = vmatprep.subr.mxu0 0.0
      %1683 = vmatpush1.xpose.msra.mxu0 0.0
      %1684 = vmatprep.subr.mxu0 0.0
      %1685 = vmatpush1.xpose.msra.mxu0 0.0
      %1686 = vmatprep.subr.mxu0 0.0
      %1687 = vmatpush1.xpose.msra.mxu0 0.0
      %1688 = vmatprep.subr.mxu0 0.0
      %1689 = vmatpush1.xpose.msra.mxu0 0.0
      %1690 = vmatprep.subr.mxu0 0.0
      %1691 = vmatpush1.xpose.msra.mxu0 0.0
      %1692 = vmatprep.subr.mxu0 0.0
      %1693 = vmatpush1.xpose.msra.mxu0 0.0
      %1694 = vmatprep.subr.mxu0 0.0
      %1695 = vmatpush1.xpose.msra.mxu0 0.0
      %1696 = vmatprep.subr.mxu0 0.0
      %1697 = vmatpush1.xpose.msra.mxu0 0.0
      %1698 = vmatprep.subr.mxu0 0.0
      %1699 = vmatpush1.xpose.msra.mxu0 0.0
      %1700 = vmatprep.subr.mxu0 0.0
      %1701 = vmatpush1.xpose.msra.mxu0 0.0
      %1702 = vmatprep.subr.mxu0 0.0
      %1703 = vmatpush1.xpose.msra.mxu0 0.0
      %1704 = vmatprep.subr.mxu0 0.0
      %1705 = vmatpush1.xpose.msra.mxu0 %v1672
      %1706 = vmatprep.subr.mxu0 0.0
      %1707 = vmatpush2.xpose.msra.mxu0 0.0
      %1708 = vmatprep.subr.mxu0 0.0
      %1709 = vmatpush2.xpose.msra.mxu0 0.0
      %1710 = vmatprep.subr.mxu0 0.0
      %1711 = vmatpush2.xpose.msra.mxu0 0.0
      %1712 = vmatprep.subr.mxu0 0.0
      %1713 = vmatpush2.xpose.msra.mxu0 0.0
      %1714 = vmatprep.subr.mxu0 0.0
      %1715 = vmatpush2.xpose.msra.mxu0 0.0
      %1716 = vmatprep.subr.mxu0 0.0
      %1717 = vmatpush2.xpose.msra.mxu0 0.0
      %1718 = vmatprep.subr.mxu0 0.0
      %1719 = vmatpush2.xpose.msra.mxu0 0.0
      %1720 = vmatprep.subr.mxu0 0.0
      %1721 = vmatpush2.xpose.msra.mxu0 0.0
      %1722 = vmatprep.subr.mxu0 0.0
      %1723 = vmatpush2.xpose.msra.mxu0 0.0
      %1724 = vmatprep.subr.mxu0 0.0
      %1725 = vmatpush2.xpose.msra.mxu0 0.0
      %1726 = vmatprep.subr.mxu0 0.0
      %1727 = vmatpush2.xpose.msra.mxu0 0.0
      %1728 = vmatprep.subr.mxu0 0.0
      %1729 = vmatpush2.xpose.msra.mxu0 0.0
      %1730 = vmatprep.subr.mxu0 0.0
      %1731 = vmatpush2.xpose.msra.mxu0 0.0
      %1732 = vmatprep.subr.mxu0 0.0
      %1733 = vmatpush2.xpose.msra.mxu0 0.0
      %1734 = vmatprep.subr.mxu0 0.0
      %1735 = vmatpush2.xpose.msra.mxu0 0.0
      %1736 = vmatprep.subr.mxu0 0.0
      %1737 = vmatpush2.xpose.msra.mxu0 0.0
      %1738 = vmatprep.mubr.f32.mxu0 0.0
      %1739 = vmatmul.mubr.f32.gmra.mxu0 %v1670
      %v1740 = vpop.f32.mrf.mxu0
      %v1741 = vadd.f32 %v359, %v1740
      %v1742 = vpop.f32.mrf.mxu0
      %1743 = vdwg.mxu0
      %v1744 = vsel %vm446, %v1741, -inf
      %1745 = vmax.xlane.f32.xlu0 %v1744
      %v1746 = vpop.xlane.xlu0 %1745
      %v1747 = vsub.f32 %v1741, %v1746
      %v1748 = vmul.f32 %v1747, 1.442695
      %v1749 = vpow.pop %v1748
      %v1750 = vsel %vm446, %v1749, 0.0
      %1751 = vadd.xlane.f32.xlu0 %v1750
      %v1752 = vpop.xlane.xlu0 %1751
      %v1753 = vrcp.pop %v1752
      %v1754 = vmul.f32 %v1749, %v1753
      %1755 = vrot.lane.b32.xlu0 %v1499, 56
      %v1756 = vpop.permute.xlu0 %1755
      %v1759 = vsel %vm446, %v1754, 0
      %1761 = vmatprep.subr.mxu0 0.0
      %1762 = vmatpush1.msra.mxu0 0.0
      %1763 = vmatprep.subr.mxu0 0.0
      %1764 = vmatpush1.msra.mxu0 0.0
      %1765 = vmatprep.subr.mxu0 0.0
      %1766 = vmatpush1.msra.mxu0 0.0
      %1767 = vmatprep.subr.mxu0 0.0
      %1768 = vmatpush1.msra.mxu0 0.0
      %1769 = vmatprep.subr.mxu0 0.0
      %1770 = vmatpush1.msra.mxu0 0.0
      %1771 = vmatprep.subr.mxu0 0.0
      %1772 = vmatpush1.msra.mxu0 0.0
      %1773 = vmatprep.subr.mxu0 0.0
      %1774 = vmatpush1.msra.mxu0 0.0
      %1775 = vmatprep.subr.mxu0 0.0
      %1776 = vmatpush1.msra.mxu0 0.0
      %1777 = vmatprep.subr.mxu0 0.0
      %1778 = vmatpush1.msra.mxu0 0.0
      %1779 = vmatprep.subr.mxu0 0.0
      %1780 = vmatpush1.msra.mxu0 0.0
      %1781 = vmatprep.subr.mxu0 0.0
      %1782 = vmatpush1.msra.mxu0 0.0
      %1783 = vmatprep.subr.mxu0 0.0
      %1784 = vmatpush1.msra.mxu0 0.0
      %1785 = vmatprep.subr.mxu0 0.0
      %1786 = vmatpush1.msra.mxu0 0.0
      %1787 = vmatprep.subr.mxu0 0.0
      %1788 = vmatpush1.msra.mxu0 0.0
      %1789 = vmatprep.subr.mxu0 0.0
      %1790 = vmatpush1.msra.mxu0 0.0
      %1791 = vmatprep.subr.mxu0 0.0
      %1792 = vmatpush1.msra.mxu0 %v1756
      %1793 = vmatprep.subr.mxu0 0.0
      %1794 = vmatpush2.msra.mxu0 0.0
      %1795 = vmatprep.subr.mxu0 0.0
      %1796 = vmatpush2.msra.mxu0 0.0
      %1797 = vmatprep.subr.mxu0 0.0
      %1798 = vmatpush2.msra.mxu0 0.0
      %1799 = vmatprep.subr.mxu0 0.0
      %1800 = vmatpush2.msra.mxu0 0.0
      %1801 = vmatprep.subr.mxu0 0.0
      %1802 = vmatpush2.msra.mxu0 0.0
      %1803 = vmatprep.subr.mxu0 0.0
      %1804 = vmatpush2.msra.mxu0 0.0
      %1805 = vmatprep.subr.mxu0 0.0
      %1806 = vmatpush2.msra.mxu0 0.0
      %1807 = vmatprep.subr.mxu0 0.0
      %1808 = vmatpush2.msra.mxu0 0.0
      %1809 = vmatprep.subr.mxu0 0.0
      %1810 = vmatpush2.msra.mxu0 0.0
      %1811 = vmatprep.subr.mxu0 0.0
      %1812 = vmatpush2.msra.mxu0 0.0
      %1813 = vmatprep.subr.mxu0 0.0
      %1814 = vmatpush2.msra.mxu0 0.0
      %1815 = vmatprep.subr.mxu0 0.0
      %1816 = vmatpush2.msra.mxu0 0.0
      %1817 = vmatprep.subr.mxu0 0.0
      %1818 = vmatpush2.msra.mxu0 0.0
      %1819 = vmatprep.subr.mxu0 0.0
      %1820 = vmatpush2.msra.mxu0 0.0
      %1821 = vmatprep.subr.mxu0 0.0
      %1822 = vmatpush2.msra.mxu0 0.0
      %1823 = vmatprep.subr.mxu0 0.0
      %1824 = vmatpush2.msra.mxu0 0.0
      %1825 = vmatprep.mubr.f32.mxu0 0.0
      %1826 = vmatmul.mubr.f32.gmra.mxu0 %v1759
      %v1827 = vpop.f32.mrf.mxu0
      %v1828 = vadd.f32 0.0, %v1827
      %v1829 = vpop.f32.mrf.mxu0
      %1830 = vdwg.mxu0
      %1831 = vrot.lane.b32.xlu0 %v1499, 112
      %v1832 = vpop.permute.xlu0 %1831
      %1833 = vrot.lane.b32.xlu0 %v1499, 80
      %v1834 = vpop.permute.xlu0 %1833
      %v1835 = vsel %vm446, %v1832, 0
      %v1837 = vsel %vm446, %v1834, 0
      %1839 = vmatprep.subr.mxu0 0.0
      %1840 = vmatpush1.xpose.msra.mxu0 0.0
      %1841 = vmatprep.subr.mxu0 0.0
      %1842 = vmatpush1.xpose.msra.mxu0 0.0
      %1843 = vmatprep.subr.mxu0 0.0
      %1844 = vmatpush1.xpose.msra.mxu0 0.0
      %1845 = vmatprep.subr.mxu0 0.0
      %1846 = vmatpush1.xpose.msra.mxu0 0.0
      %1847 = vmatprep.subr.mxu0 0.0
      %1848 = vmatpush1.xpose.msra.mxu0 0.0
      %1849 = vmatprep.subr.mxu0 0.0
      %1850 = vmatpush1.xpose.msra.mxu0 0.0
      %1851 = vmatprep.subr.mxu0 0.0
      %1852 = vmatpush1.xpose.msra.mxu0 0.0
      %1853 = vmatprep.subr.mxu0 0.0
      %1854 = vmatpush1.xpose.msra.mxu0 0.0
      %1855 = vmatprep.subr.mxu0 0.0
      %1856 = vmatpush1.xpose.msra.mxu0 0.0
      %1857 = vmatprep.subr.mxu0 0.0
      %1858 = vmatpush1.xpose.msra.mxu0 0.0
      %1859 = vmatprep.subr.mxu0 0.0
      %1860 = vmatpush1.xpose.msra.mxu0 0.0
      %1861 = vmatprep.subr.mxu0 0.0
      %1862 = vmatpush1.xpose.msra.mxu0 0.0
      %1863 = vmatprep.subr.mxu0 0.0
      %1864 = vmatpush1.xpose.msra.mxu0 0.0
      %1865 = vmatprep.subr.mxu0 0.0
      %1866 = vmatpush1.xpose.msra.mxu0 0.0
      %1867 = vmatprep.subr.mxu0 0.0
      %1868 = vmatpush1.xpose.msra.mxu0 0.0
      %1869 = vmatprep.subr.mxu0 0.0
      %1870 = vmatpush1.xpose.msra.mxu0 %v1837
      %1871 = vmatprep.subr.mxu0 0.0
      %1872 = vmatpush2.xpose.msra.mxu0 0.0
      %1873 = vmatprep.subr.mxu0 0.0
      %1874 = vmatpush2.xpose.msra.mxu0 0.0
      %1875 = vmatprep.subr.mxu0 0.0
      %1876 = vmatpush2.xpose.msra.mxu0 0.0
      %1877 = vmatprep.subr.mxu0 0.0
      %1878 = vmatpush2.xpose.msra.mxu0 0.0
      %1879 = vmatprep.subr.mxu0 0.0
      %1880 = vmatpush2.xpose.msra.mxu0 0.0
      %1881 = vmatprep.subr.mxu0 0.0
      %1882 = vmatpush2.xpose.msra.mxu0 0.0
      %1883 = vmatprep.subr.mxu0 0.0
      %1884 = vmatpush2.xpose.msra.mxu0 0.0
      %1885 = vmatprep.subr.mxu0 0.0
      %1886 = vmatpush2.xpose.msra.mxu0 0.0
      %1887 = vmatprep.subr.mxu0 0.0
      %1888 = vmatpush2.xpose.msra.mxu0 0.0
      %1889 = vmatprep.subr.mxu0 0.0
      %1890 = vmatpush2.xpose.msra.mxu0 0.0
      %1891 = vmatprep.subr.mxu0 0.0
      %1892 = vmatpush2.xpose.msra.mxu0 0.0
      %1893 = vmatprep.subr.mxu0 0.0
      %1894 = vmatpush2.xpose.msra.mxu0 0.0
      %1895 = vmatprep.subr.mxu0 0.0
      %1896 = vmatpush2.xpose.msra.mxu0 0.0
      %1897 = vmatprep.subr.mxu0 0.0
      %1898 = vmatpush2.xpose.msra.mxu0 0.0
      %1899 = vmatprep.subr.mxu0 0.0
      %1900 = vmatpush2.xpose.msra.mxu0 0.0
      %1901 = vmatprep.subr.mxu0 0.0
      %1902 = vmatpush2.xpose.msra.mxu0 0.0
      %1903 = vmatprep.mubr.f32.mxu0 0.0
      %1904 = vmatmul.mubr.f32.gmra.mxu0 %v1835
      %v1905 = vpop.f32.mrf.mxu0
      %v1906 = vadd.f32 %v359, %v1905
      %v1907 = vpop.f32.mrf.mxu0
      %1908 = vdwg.mxu0
      %v1909 = vsel %vm446, %v1906, -inf
      %1910 = vmax.xlane.f32.xlu0 %v1909
      %v1911 = vpop.xlane.xlu0 %1910
      %v1912 = vsub.f32 %v1906, %v1911
      %v1913 = vmul.f32 %v1912, 1.442695
      %v1914 = vpow.pop %v1913
      %v1915 = vsel %vm446, %v1914, 0.0
      %1916 = vadd.xlane.f32.xlu0 %v1915
      %v1917 = vpop.xlane.xlu0 %1916
      %v1918 = vrcp.pop %v1917
      %v1919 = vmul.f32 %v1914, %v1918
      %1920 = vrot.lane.b32.xlu0 %v1499, 48
      %v1921 = vpop.permute.xlu0 %1920
      %v1924 = vsel %vm446, %v1919, 0
      %1926 = vmatprep.subr.mxu0 0.0
      %1927 = vmatpush1.msra.mxu0 0.0
      %1928 = vmatprep.subr.mxu0 0.0
      %1929 = vmatpush1.msra.mxu0 0.0
      %1930 = vmatprep.subr.mxu0 0.0
      %1931 = vmatpush1.msra.mxu0 0.0
      %1932 = vmatprep.subr.mxu0 0.0
      %1933 = vmatpush1.msra.mxu0 0.0
      %1934 = vmatprep.subr.mxu0 0.0
      %1935 = vmatpush1.msra.mxu0 0.0
      %1936 = vmatprep.subr.mxu0 0.0
      %1937 = vmatpush1.msra.mxu0 0.0
      %1938 = vmatprep.subr.mxu0 0.0
      %1939 = vmatpush1.msra.mxu0 0.0
      %1940 = vmatprep.subr.mxu0 0.0
      %1941 = vmatpush1.msra.mxu0 0.0
      %1942 = vmatprep.subr.mxu0 0.0
      %1943 = vmatpush1.msra.mxu0 0.0
      %1944 = vmatprep.subr.mxu0 0.0
      %1945 = vmatpush1.msra.mxu0 0.0
      %1946 = vmatprep.subr.mxu0 0.0
      %1947 = vmatpush1.msra.mxu0 0.0
      %1948 = vmatprep.subr.mxu0 0.0
      %1949 = vmatpush1.msra.mxu0 0.0
      %1950 = vmatprep.subr.mxu0 0.0
      %1951 = vmatpush1.msra.mxu0 0.0
      %1952 = vmatprep.subr.mxu0 0.0
      %1953 = vmatpush1.msra.mxu0 0.0
      %1954 = vmatprep.subr.mxu0 0.0
      %1955 = vmatpush1.msra.mxu0 0.0
      %1956 = vmatprep.subr.mxu0 0.0
      %1957 = vmatpush1.msra.mxu0 %v1921
      %1958 = vmatprep.subr.mxu0 0.0
      %1959 = vmatpush2.msra.mxu0 0.0
      %1960 = vmatprep.subr.mxu0 0.0
      %1961 = vmatpush2.msra.mxu0 0.0
      %1962 = vmatprep.subr.mxu0 0.0
      %1963 = vmatpush2.msra.mxu0 0.0
      %1964 = vmatprep.subr.mxu0 0.0
      %1965 = vmatpush2.msra.mxu0 0.0
      %1966 = vmatprep.subr.mxu0 0.0
      %1967 = vmatpush2.msra.mxu0 0.0
      %1968 = vmatprep.subr.mxu0 0.0
      %1969 = vmatpush2.msra.mxu0 0.0
      %1970 = vmatprep.subr.mxu0 0.0
      %1971 = vmatpush2.msra.mxu0 0.0
      %1972 = vmatprep.subr.mxu0 0.0
      %1973 = vmatpush2.msra.mxu0 0.0
      %1974 = vmatprep.subr.mxu0 0.0
      %1975 = vmatpush2.msra.mxu0 0.0
      %1976 = vmatprep.subr.mxu0 0.0
      %1977 = vmatpush2.msra.mxu0 0.0
      %1978 = vmatprep.subr.mxu0 0.0
      %1979 = vmatpush2.msra.mxu0 0.0
      %1980 = vmatprep.subr.mxu0 0.0
      %1981 = vmatpush2.msra.mxu0 0.0
      %1982 = vmatprep.subr.mxu0 0.0
      %1983 = vmatpush2.msra.mxu0 0.0
      %1984 = vmatprep.subr.mxu0 0.0
      %1985 = vmatpush2.msra.mxu0 0.0
      %1986 = vmatprep.subr.mxu0 0.0
      %1987 = vmatpush2.msra.mxu0 0.0
      %1988 = vmatprep.subr.mxu0 0.0
      %1989 = vmatpush2.msra.mxu0 0.0
      %1990 = vmatprep.mubr.f32.mxu0 0.0
      %1991 = vmatmul.mubr.f32.gmra.mxu0 %v1924
      %v1992 = vpop.f32.mrf.mxu0
      %v1993 = vadd.f32 0.0, %v1992
      %v1994 = vpop.f32.mrf.mxu0
      %1995 = vdwg.mxu0
      %1996 = vrot.lane.b32.xlu0 %v1499, 104
      %v1997 = vpop.permute.xlu0 %1996
      %1998 = vrot.lane.b32.xlu0 %v1499, 72
      %v1999 = vpop.permute.xlu0 %1998
      %v2000 = vsel %vm446, %v1997, 0
      %v2002 = vsel %vm446, %v1999, 0
      %2004 = vmatprep.subr.mxu0 0.0
      %2005 = vmatpush1.xpose.msra.mxu0 0.0
      %2006 = vmatprep.subr.mxu0 0.0
      %2007 = vmatpush1.xpose.msra.mxu0 0.0
      %2008 = vmatprep.subr.mxu0 0.0
      %2009 = vmatpush1.xpose.msra.mxu0 0.0
      %2010 = vmatprep.subr.mxu0 0.0
      %2011 = vmatpush1.xpose.msra.mxu0 0.0
      %2012 = vmatprep.subr.mxu0 0.0
      %2013 = vmatpush1.xpose.msra.mxu0 0.0
      %2014 = vmatprep.subr.mxu0 0.0
      %2015 = vmatpush1.xpose.msra.mxu0 0.0
      %2016 = vmatprep.subr.mxu0 0.0
      %2017 = vmatpush1.xpose.msra.mxu0 0.0
      %2018 = vmatprep.subr.mxu0 0.0
      %2019 = vmatpush1.xpose.msra.mxu0 0.0
      %2020 = vmatprep.subr.mxu0 0.0
      %2021 = vmatpush1.xpose.msra.mxu0 0.0
      %2022 = vmatprep.subr.mxu0 0.0
      %2023 = vmatpush1.xpose.msra.mxu0 0.0
      %2024 = vmatprep.subr.mxu0 0.0
      %2025 = vmatpush1.xpose.msra.mxu0 0.0
      %2026 = vmatprep.subr.mxu0 0.0
      %2027 = vmatpush1.xpose.msra.mxu0 0.0
      %2028 = vmatprep.subr.mxu0 0.0
      %2029 = vmatpush1.xpose.msra.mxu0 0.0
      %2030 = vmatprep.subr.mxu0 0.0
      %2031 = vmatpush1.xpose.msra.mxu0 0.0
      %2032 = vmatprep.subr.mxu0 0.0
      %2033 = vmatpush1.xpose.msra.mxu0 0.0
      %2034 = vmatprep.subr.mxu0 0.0
      %2035 = vmatpush1.xpose.msra.mxu0 %v2002
      %2036 = vmatprep.subr.mxu0 0.0
      %2037 = vmatpush2.xpose.msra.mxu0 0.0
      %2038 = vmatprep.subr.mxu0 0.0
      %2039 = vmatpush2.xpose.msra.mxu0 0.0
      %2040 = vmatprep.subr.mxu0 0.0
      %2041 = vmatpush2.xpose.msra.mxu0 0.0
      %2042 = vmatprep.subr.mxu0 0.0
      %2043 = vmatpush2.xpose.msra.mxu0 0.0
      %2044 = vmatprep.subr.mxu0 0.0
      %2045 = vmatpush2.xpose.msra.mxu0 0.0
      %2046 = vmatprep.subr.mxu0 0.0
      %2047 = vmatpush2.xpose.msra.mxu0 0.0
      %2048 = vmatprep.subr.mxu0 0.0
      %2049 = vmatpush2.xpose.msra.mxu0 0.0
      %2050 = vmatprep.subr.mxu0 0.0
      %2051 = vmatpush2.xpose.msra.mxu0 0.0
      %2052 = vmatprep.subr.mxu0 0.0
      %2053 = vmatpush2.xpose.msra.mxu0 0.0
      %2054 = vmatprep.subr.mxu0 0.0
      %2055 = vmatpush2.xpose.msra.mxu0 0.0
      %2056 = vmatprep.subr.mxu0 0.0
      %2057 = vmatpush2.xpose.msra.mxu0 0.0
      %2058 = vmatprep.subr.mxu0 0.0
      %2059 = vmatpush2.xpose.msra.mxu0 0.0
      %2060 = vmatprep.subr.mxu0 0.0
      %2061 = vmatpush2.xpose.msra.mxu0 0.0
      %2062 = vmatprep.subr.mxu0 0.0
      %2063 = vmatpush2.xpose.msra.mxu0 0.0
      %2064 = vmatprep.subr.mxu0 0.0
      %2065 = vmatpush2.xpose.msra.mxu0 0.0
      %2066 = vmatprep.subr.mxu0 0.0
      %2067 = vmatpush2.xpose.msra.mxu0 0.0
      %2068 = vmatprep.mubr.f32.mxu0 0.0
      %2069 = vmatmul.mubr.f32.gmra.mxu0 %v2000
      %v2070 = vpop.f32.mrf.mxu0
      %v2071 = vadd.f32 %v359, %v2070
      %v2072 = vpop.f32.mrf.mxu0
      %2073 = vdwg.mxu0
      %v2074 = vsel %vm446, %v2071, -inf
      %2075 = vmax.xlane.f32.xlu0 %v2074
      %v2076 = vpop.xlane.xlu0 %2075
      %v2077 = vsub.f32 %v2071, %v2076
      %v2078 = vmul.f32 %v2077, 1.442695
      %v2079 = vpow.pop %v2078
      %v2080 = vsel %vm446, %v2079, 0.0
      %2081 = vadd.xlane.f32.xlu0 %v2080
      %v2082 = vpop.xlane.xlu0 %2081
      %v2083 = vrcp.pop %v2082
      %v2084 = vmul.f32 %v2079, %v2083
      %2085 = vrot.lane.b32.xlu0 %v1499, 40
      %v2086 = vpop.permute.xlu0 %2085
      %v2089 = vsel %vm446, %v2084, 0
      %2091 = vmatprep.subr.mxu0 0.0
      %2092 = vmatpush1.msra.mxu0 0.0
      %2093 = vmatprep.subr.mxu0 0.0
      %2094 = vmatpush1.msra.mxu0 0.0
      %2095 = vmatprep.subr.mxu0 0.0
      %2096 = vmatpush1.msra.mxu0 0.0
      %2097 = vmatprep.subr.mxu0 0.0
      %2098 = vmatpush1.msra.mxu0 0.0
      %2099 = vmatprep.subr.mxu0 0.0
      %2100 = vmatpush1.msra.mxu0 0.0
      %2101 = vmatprep.subr.mxu0 0.0
      %2102 = vmatpush1.msra.mxu0 0.0
      %2103 = vmatprep.subr.mxu0 0.0
      %2104 = vmatpush1.msra.mxu0 0.0
      %2105 = vmatprep.subr.mxu0 0.0
      %2106 = vmatpush1.msra.mxu0 0.0
      %2107 = vmatprep.subr.mxu0 0.0
      %2108 = vmatpush1.msra.mxu0 0.0
      %2109 = vmatprep.subr.mxu0 0.0
      %2110 = vmatpush1.msra.mxu0 0.0
      %2111 = vmatprep.subr.mxu0 0.0
      %2112 = vmatpush1.msra.mxu0 0.0
      %2113 = vmatprep.subr.mxu0 0.0
      %2114 = vmatpush1.msra.mxu0 0.0
      %2115 = vmatprep.subr.mxu0 0.0
      %2116 = vmatpush1.msra.mxu0 0.0
      %2117 = vmatprep.subr.mxu0 0.0
      %2118 = vmatpush1.msra.mxu0 0.0
      %2119 = vmatprep.subr.mxu0 0.0
      %2120 = vmatpush1.msra.mxu0 0.0
      %2121 = vmatprep.subr.mxu0 0.0
      %2122 = vmatpush1.msra.mxu0 %v2086
      %2123 = vmatprep.subr.mxu0 0.0
      %2124 = vmatpush2.msra.mxu0 0.0
      %2125 = vmatprep.subr.mxu0 0.0
      %2126 = vmatpush2.msra.mxu0 0.0
      %2127 = vmatprep.subr.mxu0 0.0
      %2128 = vmatpush2.msra.mxu0 0.0
      %2129 = vmatprep.subr.mxu0 0.0
      %2130 = vmatpush2.msra.mxu0 0.0
      %2131 = vmatprep.subr.mxu0 0.0
      %2132 = vmatpush2.msra.mxu0 0.0
      %2133 = vmatprep.subr.mxu0 0.0
      %2134 = vmatpush2.msra.mxu0 0.0
      %2135 = vmatprep.subr.mxu0 0.0
      %2136 = vmatpush2.msra.mxu0 0.0
      %2137 = vmatprep.subr.mxu0 0.0
      %2138 = vmatpush2.msra.mxu0 0.0
      %2139 = vmatprep.subr.mxu0 0.0
      %2140 = vmatpush2.msra.mxu0 0.0
      %2141 = vmatprep.subr.mxu0 0.0
      %2142 = vmatpush2.msra.mxu0 0.0
      %2143 = vmatprep.subr.mxu0 0.0
      %2144 = vmatpush2.msra.mxu0 0.0
      %2145 = vmatprep.subr.mxu0 0.0
      %2146 = vmatpush2.msra.mxu0 0.0
      %2147 = vmatprep.subr.mxu0 0.0
      %2148 = vmatpush2.msra.mxu0 0.0
      %2149 = vmatprep.subr.mxu0 0.0
      %2150 = vmatpush2.msra.mxu0 0.0
      %2151 = vmatprep.subr.mxu0 0.0
      %2152 = vmatpush2.msra.mxu0 0.0
      %2153 = vmatprep.subr.mxu0 0.0
      %2154 = vmatpush2.msra.mxu0 0.0
      %2155 = vmatprep.mubr.f32.mxu0 0.0
      %2156 = vmatmul.mubr.f32.gmra.mxu0 %v2089
      %v2157 = vpop.f32.mrf.mxu0
      %v2158 = vadd.f32 0.0, %v2157
      %v2159 = vpop.f32.mrf.mxu0
      %2160 = vdwg.mxu0
      %2162 = vrot.lane.b32.xlu0 %v1828, 8
      %v2163 = vpop.permute.xlu0 %2162
      %2166 = vrot.lane.b32.xlu0 %v1993, 16
      %v2167 = vpop.permute.xlu0 %2166
      %2170 = vrot.lane.b32.xlu0 %v2158, 24
      %v2171 = vpop.permute.xlu0 %2170
      %v2173 = vsel %vm446, %v1663, %v2163
      %v2174 = vsel %vm1116, %v2173, %v2167
      %v2175 = vsel %vm1118, %v2174, %v2171
      %s2176 = scalar_lea.vmem %s4, 32
      %v2177 = vld [vmem:[%s2176] sm:$0xff]
      %v2178 = vld [vmem:[%s2176 + $0x8] sm:$0xff]
      %v2179 = vld [vmem:[%s2176 + $0x10] sm:$0xff]
      %v2180 = vld [vmem:[%s2176 + $0x18] sm:$0xff]
      %v2181 = vlaneseq
      %v2182 = vshrl.u32 %v2181, 7
      %v2183 = vsub.s32 1, %v2182
      %v2184 = vrot.slane %v1419, %v2183
      %v2186 = vsel %vm369, %v2175, 0
      %2188 = vmatprep.subr.mxu0 0.0
      %2189 = vmatpush1.msra.mxu0 0.0
      %2190 = vmatprep.subr.mxu0 0.0
      %2191 = vmatpush1.msra.mxu0 0.0
      %2192 = vmatprep.subr.mxu0 0.0
      %2193 = vmatpush1.msra.mxu0 0.0
      %2194 = vmatprep.subr.mxu0 0.0
      %2195 = vmatpush1.msra.mxu0 0.0
      %2196 = vmatprep.subr.mxu0 0.0
      %2197 = vmatpush1.msra.mxu0 0.0
      %2198 = vmatprep.subr.mxu0 0.0
      %2199 = vmatpush1.msra.mxu0 0.0
      %2200 = vmatprep.subr.mxu0 0.0
      %2201 = vmatpush1.msra.mxu0 0.0
      %2202 = vmatprep.subr.mxu0 0.0
      %2203 = vmatpush1.msra.mxu0 0.0
      %2204 = vmatprep.subr.mxu0 0.0
      %2205 = vmatpush1.msra.mxu0 0.0
      %2206 = vmatprep.subr.mxu0 0.0
      %2207 = vmatpush1.msra.mxu0 0.0
      %2208 = vmatprep.subr.mxu0 0.0
      %2209 = vmatpush1.msra.mxu0 0.0
      %2210 = vmatprep.subr.mxu0 0.0
      %2211 = vmatpush1.msra.mxu0 0.0
      %2212 = vmatprep.subr.mxu0 0.0
      %2213 = vmatpush1.msra.mxu0 %v2180
      %2214 = vmatprep.subr.mxu0 0.0
      %2215 = vmatpush1.msra.mxu0 %v2179
      %2216 = vmatprep.subr.mxu0 0.0
      %2217 = vmatpush1.msra.mxu0 %v2178
      %2218 = vmatprep.subr.mxu0 0.0
      %2219 = vmatpush1.msra.mxu0 %v2177
      %2220 = vmatprep.subr.mxu0 0.0
      %2221 = vmatpush2.msra.mxu0 0.0
      %2222 = vmatprep.subr.mxu0 0.0
      %2223 = vmatpush2.msra.mxu0 0.0
      %2224 = vmatprep.subr.mxu0 0.0
      %2225 = vmatpush2.msra.mxu0 0.0
      %2226 = vmatprep.subr.mxu0 0.0
      %2227 = vmatpush2.msra.mxu0 0.0
      %2228 = vmatprep.subr.mxu0 0.0
      %2229 = vmatpush2.msra.mxu0 0.0
      %2230 = vmatprep.subr.mxu0 0.0
      %2231 = vmatpush2.msra.mxu0 0.0
      %2232 = vmatprep.subr.mxu0 0.0
      %2233 = vmatpush2.msra.mxu0 0.0
      %2234 = vmatprep.subr.mxu0 0.0
      %2235 = vmatpush2.msra.mxu0 0.0
      %2236 = vmatprep.subr.mxu0 0.0
      %2237 = vmatpush2.msra.mxu0 0.0
      %2238 = vmatprep.subr.mxu0 0.0
      %2239 = vmatpush2.msra.mxu0 0.0
      %2240 = vmatprep.subr.mxu0 0.0
      %2241 = vmatpush2.msra.mxu0 0.0
      %2242 = vmatprep.subr.mxu0 0.0
      %2243 = vmatpush2.msra.mxu0 0.0
      %2244 = vmatprep.subr.mxu0 0.0
      %2245 = vmatpush2.msra.mxu0 0.0
      %2246 = vmatprep.subr.mxu0 0.0
      %2247 = vmatpush2.msra.mxu0 0.0
      %2248 = vmatprep.subr.mxu0 0.0
      %2249 = vmatpush2.msra.mxu0 0.0
      %2250 = vmatprep.subr.mxu0 0.0
      %2251 = vmatpush2.msra.mxu0 0.0
      %2252 = vmatprep.mubr.f32.mxu0 0.0
      %2253 = vmatmul.mubr.f32.gmra.mxu0 %v2186
      %v2254 = vpop.f32.mrf.mxu0
      %v2255 = vadd.f32 %v2184, %v2254
      %v2256 = vpop.f32.mrf.mxu0
      %2257 = vdwg.mxu0
      %v2258 = vadd.f32 %v1417, %v2255
      %v2259 = vsel %vm369, %v2258, 0.0
      %2260 = vadd.xlane.f32.xlu0 %v2259
      %v2261 = vpop.xlane.xlu0 %2260
      %v2262 = vmul.f32 %v2261, %v1205
      %v2263 = vsub.f32 %v2258, %v2262
      %v2264 = vmul.f32 %v2263, %v2263
      %v2265 = vsel %vm369, %v2264, 0.0
      %2266 = vadd.xlane.f32.xlu0 %v2265
      %v2267 = vpop.xlane.xlu0 %2266
      %v2268 = vmul.f32 %v2267, %v1205
      %v2269 = vadd.f32 %v2268, 1e-05
      %v2270 = vrsqrt.pop %v2269
      %v2271 = vmul.f32 %v2263, %v2270
      %v2272 = vlaneseq
      %v2273 = vshrl.u32 %v2272, 7
      %v2274 = vsub.s32 2, %v2273
      %v2275 = vrot.slane %v1419, %v2274
      %v2276 = vmul.f32 %v2271, %v2275
      %v2277 = vlaneseq
      %v2278 = vshrl.u32 %v2277, 7
      %v2279 = vsub.s32 3, %v2278
      %v2280 = vrot.slane %v1419, %v2279
      %v2281 = vadd.f32 %v2276, %v2280
      %s2282 = scalar_lea.vmem %s5, 32
      %v2283 = vld [vmem:[%s2282] sm:$0xff]
      %v2284 = vld [vmem:[%s2282 + $0x8] sm:$0xff]
      %v2285 = vld [vmem:[%s2282 + $0x10] sm:$0xff]
      %v2286 = vld [vmem:[%s2282 + $0x18] sm:$0xff]
      %v2287 = vlaneseq
      %v2288 = vshrl.u32 %v2287, 7
      %v2289 = vsub.s32 4, %v2288
      %v2290 = vrot.slane %v1419, %v2289
      %v2292 = vsel %vm369, %v2281, 0
      %2294 = vmatprep.subr.mxu0 0.0
      %2295 = vmatpush1.msra.mxu0 0.0
      %2296 = vmatprep.subr.mxu0 0.0
      %2297 = vmatpush1.msra.mxu0 0.0
      %2298 = vmatprep.subr.mxu0 0.0
      %2299 = vmatpush1.msra.mxu0 0.0
      %2300 = vmatprep.subr.mxu0 0.0
      %2301 = vmatpush1.msra.mxu0 0.0
      %2302 = vmatprep.subr.mxu0 0.0
      %2303 = vmatpush1.msra.mxu0 0.0
      %2304 = vmatprep.subr.mxu0 0.0
      %2305 = vmatpush1.msra.mxu0 0.0
      %2306 = vmatprep.subr.mxu0 0.0
      %2307 = vmatpush1.msra.mxu0 0.0
      %2308 = vmatprep.subr.mxu0 0.0
      %2309 = vmatpush1.msra.mxu0 0.0
      %2310 = vmatprep.subr.mxu0 0.0
      %2311 = vmatpush1.msra.mxu0 0.0
      %2312 = vmatprep.subr.mxu0 0.0
      %2313 = vmatpush1.msra.mxu0 0.0
      %2314 = vmatprep.subr.mxu0 0.0
      %2315 = vmatpush1.msra.mxu0 0.0
      %2316 = vmatprep.subr.mxu0 0.0
      %2317 = vmatpush1.msra.mxu0 0.0
      %2318 = vmatprep.subr.mxu0 0.0
      %2319 = vmatpush1.msra.mxu0 %v2286
      %2320 = vmatprep.subr.mxu0 0.0
      %2321 = vmatpush1.msra.mxu0 %v2285
      %2322 = vmatprep.subr.mxu0 0.0
      %2323 = vmatpush1.msra.mxu0 %v2284
      %2324 = vmatprep.subr.mxu0 0.0
      %2325 = vmatpush1.msra.mxu0 %v2283
      %2326 = vmatprep.subr.mxu0 0.0
      %2327 = vmatpush2.msra.mxu0 0.0
      %2328 = vmatprep.subr.mxu0 0.0
      %2329 = vmatpush2.msra.mxu0 0.0
      %2330 = vmatprep.subr.mxu0 0.0
      %2331 = vmatpush2.msra.mxu0 0.0
      %2332 = vmatprep.subr.mxu0 0.0
      %2333 = vmatpush2.msra.mxu0 0.0
      %2334 = vmatprep.subr.mxu0 0.0
      %2335 = vmatpush2.msra.mxu0 0.0
      %2336 = vmatprep.subr.mxu0 0.0
      %2337 = vmatpush2.msra.mxu0 0.0
      %2338 = vmatprep.subr.mxu0 0.0
      %2339 = vmatpush2.msra.mxu0 0.0
      %2340 = vmatprep.subr.mxu0 0.0
      %2341 = vmatpush2.msra.mxu0 0.0
      %2342 = vmatprep.subr.mxu0 0.0
      %2343 = vmatpush2.msra.mxu0 0.0
      %2344 = vmatprep.subr.mxu0 0.0
      %2345 = vmatpush2.msra.mxu0 0.0
      %2346 = vmatprep.subr.mxu0 0.0
      %2347 = vmatpush2.msra.mxu0 0.0
      %2348 = vmatprep.subr.mxu0 0.0
      %2349 = vmatpush2.msra.mxu0 0.0
      %2350 = vmatprep.subr.mxu0 0.0
      %2351 = vmatpush2.msra.mxu0 0.0
      %2352 = vmatprep.subr.mxu0 0.0
      %2353 = vmatpush2.msra.mxu0 0.0
      %2354 = vmatprep.subr.mxu0 0.0
      %2355 = vmatpush2.msra.mxu0 0.0
      %2356 = vmatprep.subr.mxu0 0.0
      %2357 = vmatpush2.msra.mxu0 0.0
      %2358 = vmatprep.mubr.f32.mxu0 0.0
      %2359 = vmatmul.mubr.f32.gmra.mxu0 %v2292
      %v2360 = vpop.f32.mrf.mxu0
      %v2361 = vadd.f32 %v2290, %v2360
      %v2362 = vpop.f32.mrf.mxu0
      %2363 = vdwg.mxu0
      %v2364 = vmax.f32 %v2361, 0.0
      %s2365 = scalar_lea.vmem %s6, 64
      %v2366 = vld [vmem:[%s2365] sm:$0xff]
      %v2367 = vld [vmem:[%s2365 + $0x8] sm:$0xff]
      %v2368 = vld [vmem:[%s2365 + $0x10] sm:$0xff]
      %v2369 = vld [vmem:[%s2365 + $0x18] sm:$0xff]
      %v2370 = vld [vmem:[%s2365 + $0x20] sm:$0xff]
      %v2371 = vld [vmem:[%s2365 + $0x28] sm:$0xff]
      %v2372 = vld [vmem:[%s2365 + $0x30] sm:$0xff]
      %v2373 = vld [vmem:[%s2365 + $0x38] sm:$0xff]
      %v2374 = vlaneseq
      %v2375 = vshrl.u32 %v2374, 7
      %v2376 = vsub.s32 5, %v2375
      %v2377 = vrot.slane %v1419, %v2376
      %v2379 = vsel %vm1320, %v2364, 0
      %2381 = vmatprep.subr.mxu0 0.0
      %2382 = vmatpush1.msra.mxu0 0.0
      %2383 = vmatprep.subr.mxu0 0.0
      %2384 = vmatpush1.msra.mxu0 0.0
      %2385 = vmatprep.subr.mxu0 0.0
      %2386 = vmatpush1.msra.mxu0 0.0
      %2387 = vmatprep.subr.mxu0 0.0
      %2388 = vmatpush1.msra.mxu0 0.0
      %2389 = vmatprep.subr.mxu0 0.0
      %2390 = vmatpush1.msra.mxu0 0.0
      %2391 = vmatprep.subr.mxu0 0.0
      %2392 = vmatpush1.msra.mxu0 0.0
      %2393 = vmatprep.subr.mxu0 0.0
      %2394 = vmatpush1.msra.mxu0 0.0
      %2395 = vmatprep.subr.mxu0 0.0
      %2396 = vmatpush1.msra.mxu0 0.0
      %2397 = vmatprep.subr.mxu0 0.0
      %2398 = vmatpush1.msra.mxu0 %v2373
      %2399 = vmatprep.subr.mxu0 0.0
      %2400 = vmatpush1.msra.mxu0 %v2372
      %2401 = vmatprep.subr.mxu0 0.0
      %2402 = vmatpush1.msra.mxu0 %v2371
      %2403 = vmatprep.subr.mxu0 0.0
      %2404 = vmatpush1.msra.mxu0 %v2370
      %2405 = vmatprep.subr.mxu0 0.0
      %2406 = vmatpush1.msra.mxu0 %v2369
      %2407 = vmatprep.subr.mxu0 0.0
      %2408 = vmatpush1.msra.mxu0 %v2368
      %2409 = vmatprep.subr.mxu0 0.0
      %2410 = vmatpush1.msra.mxu0 %v2367
      %2411 = vmatprep.subr.mxu0 0.0
      %2412 = vmatpush1.msra.mxu0 %v2366
      %2413 = vmatprep.subr.mxu0 0.0
      %2414 = vmatpush2.msra.mxu0 0.0
      %2415 = vmatprep.subr.mxu0 0.0
      %2416 = vmatpush2.msra.mxu0 0.0
      %2417 = vmatprep.subr.mxu0 0.0
      %2418 = vmatpush2.msra.mxu0 0.0
      %2419 = vmatprep.subr.mxu0 0.0
      %2420 = vmatpush2.msra.mxu0 0.0
      %2421 = vmatprep.subr.mxu0 0.0
      %2422 = vmatpush2.msra.mxu0 0.0
      %2423 = vmatprep.subr.mxu0 0.0
      %2424 = vmatpush2.msra.mxu0 0.0
      %2425 = vmatprep.subr.mxu0 0.0
      %2426 = vmatpush2.msra.mxu0 0.0
      %2427 = vmatprep.subr.mxu0 0.0
      %2428 = vmatpush2.msra.mxu0 0.0
      %2429 = vmatprep.subr.mxu0 0.0
      %2430 = vmatpush2.msra.mxu0 0.0
      %2431 = vmatprep.subr.mxu0 0.0
      %2432 = vmatpush2.msra.mxu0 0.0
      %2433 = vmatprep.subr.mxu0 0.0
      %2434 = vmatpush2.msra.mxu0 0.0
      %2435 = vmatprep.subr.mxu0 0.0
      %2436 = vmatpush2.msra.mxu0 0.0
      %2437 = vmatprep.subr.mxu0 0.0
      %2438 = vmatpush2.msra.mxu0 0.0
      %2439 = vmatprep.subr.mxu0 0.0
      %2440 = vmatpush2.msra.mxu0 0.0
      %2441 = vmatprep.subr.mxu0 0.0
      %2442 = vmatpush2.msra.mxu0 0.0
      %2443 = vmatprep.subr.mxu0 0.0
      %2444 = vmatpush2.msra.mxu0 0.0
      %2445 = vmatprep.mubr.f32.mxu0 0.0
      %2446 = vmatmul.mubr.f32.gmra.mxu0 %v2379
      %v2447 = vpop.f32.mrf.mxu0
      %v2448 = vadd.f32 %v2377, %v2447
      %v2449 = vpop.f32.mrf.mxu0
      %2450 = vdwg.mxu0
      %v2451 = vadd.f32 %v2281, %v2448
      %v2452 = vsel %vm369, %v2451, 0.0
      %2453 = vadd.xlane.f32.xlu0 %v2452
      %v2454 = vpop.xlane.xlu0 %2453
      %v2455 = vmul.f32 %v2454, %v1205
      %v2456 = vsub.f32 %v2451, %v2455
      %v2457 = vmul.f32 %v2456, %v2456
      %v2458 = vsel %vm369, %v2457, 0.0
      %2459 = vadd.xlane.f32.xlu0 %v2458
      %v2460 = vpop.xlane.xlu0 %2459
      %v2461 = vmul.f32 %v2460, %v1205
      %v2462 = vadd.f32 %v2461, 1e-05
      %v2463 = vrsqrt.pop %v2462
      %v2464 = vmul.f32 %v2456, %v2463
      %v2465 = vlaneseq
      %v2466 = vshrl.u32 %v2465, 7
      %v2467 = vsub.s32 6, %v2466
      %v2468 = vrot.slane %v1419, %v2467
      %v2469 = vmul.f32 %v2464, %v2468
      %v2470 = vlaneseq
      %v2471 = vshrl.u32 %v2470, 7
      %v2472 = vsub.s32 7, %v2471
      %v2473 = vrot.slane %v1419, %v2472
      %v2474 = vadd.f32 %v2469, %v2473
      %v2475 = vld [vmem:[%s8] sm:$0xff]
      %v2476 = vld [vmem:[%s8 + $0x8] sm:$0xff]
      %v2477 = vld [vmem:[%s8 + $0x10] sm:$0xff]
      %v2478 = vld [vmem:[%s8 + $0x18] sm:$0xff]
      %v2479 = vld [vmem:[%s9] sm:$0x1]
      %v2481 = vlaneseq
      %v2482 = vshrl.u32 %v2481, 7
      %v2483 = vsub.s32 0, %v2482
      %v2484 = vrot.slane %v2479, %v2483
      %v2487 = vsel %vm369, %v2474, 0
      %2489 = vmatprep.subr.mxu0 0.0
      %2490 = vmatpush1.msra.mxu0 0.0
      %2491 = vmatprep.subr.mxu0 0.0
      %2492 = vmatpush1.msra.mxu0 0.0
      %2493 = vmatprep.subr.mxu0 0.0
      %2494 = vmatpush1.msra.mxu0 0.0
      %2495 = vmatprep.subr.mxu0 0.0
      %2496 = vmatpush1.msra.mxu0 0.0
      %2497 = vmatprep.subr.mxu0 0.0
      %2498 = vmatpush1.msra.mxu0 0.0
      %2499 = vmatprep.subr.mxu0 0.0
      %2500 = vmatpush1.msra.mxu0 0.0
      %2501 = vmatprep.subr.mxu0 0.0
      %2502 = vmatpush1.msra.mxu0 0.0
      %2503 = vmatprep.subr.mxu0 0.0
      %2504 = vmatpush1.msra.mxu0 0.0
      %2505 = vmatprep.subr.mxu0 0.0
      %2506 = vmatpush1.msra.mxu0 0.0
      %2507 = vmatprep.subr.mxu0 0.0
      %2508 = vmatpush1.msra.mxu0 0.0
      %2509 = vmatprep.subr.mxu0 0.0
      %2510 = vmatpush1.msra.mxu0 0.0
      %2511 = vmatprep.subr.mxu0 0.0
      %2512 = vmatpush1.msra.mxu0 0.0
      %2513 = vmatprep.subr.mxu0 0.0
      %2514 = vmatpush1.msra.mxu0 %v2478
      %2515 = vmatprep.subr.mxu0 0.0
      %2516 = vmatpush1.msra.mxu0 %v2477
      %2517 = vmatprep.subr.mxu0 0.0
      %2518 = vmatpush1.msra.mxu0 %v2476
      %2519 = vmatprep.subr.mxu0 0.0
      %2520 = vmatpush1.msra.mxu0 %v2475
      %2521 = vmatprep.subr.mxu0 0.0
      %2522 = vmatpush2.msra.mxu0 0.0
      %2523 = vmatprep.subr.mxu0 0.0
      %2524 = vmatpush2.msra.mxu0 0.0
      %2525 = vmatprep.subr.mxu0 0.0
      %2526 = vmatpush2.msra.mxu0 0.0
      %2527 = vmatprep.subr.mxu0 0.0
      %2528 = vmatpush2.msra.mxu0 0.0
      %2529 = vmatprep.subr.mxu0 0.0
      %2530 = vmatpush2.msra.mxu0 0.0
      %2531 = vmatprep.subr.mxu0 0.0
      %2532 = vmatpush2.msra.mxu0 0.0
      %2533 = vmatprep.subr.mxu0 0.0
      %2534 = vmatpush2.msra.mxu0 0.0
      %2535 = vmatprep.subr.mxu0 0.0
      %2536 = vmatpush2.msra.mxu0 0.0
      %2537 = vmatprep.subr.mxu0 0.0
      %2538 = vmatpush2.msra.mxu0 0.0
      %2539 = vmatprep.subr.mxu0 0.0
      %2540 = vmatpush2.msra.mxu0 0.0
      %2541 = vmatprep.subr.mxu0 0.0
      %2542 = vmatpush2.msra.mxu0 0.0
      %2543 = vmatprep.subr.mxu0 0.0
      %2544 = vmatpush2.msra.mxu0 0.0
      %2545 = vmatprep.subr.mxu0 0.0
      %2546 = vmatpush2.msra.mxu0 0.0
      %2547 = vmatprep.subr.mxu0 0.0
      %2548 = vmatpush2.msra.mxu0 0.0
      %2549 = vmatprep.subr.mxu0 0.0
      %2550 = vmatpush2.msra.mxu0 0.0
      %2551 = vmatprep.subr.mxu0 0.0
      %2552 = vmatpush2.msra.mxu0 0.0
      %2553 = vmatprep.mubr.f32.mxu0 0.0
      %2554 = vmatmul.mubr.f32.gmra.mxu0 %v2487
      %v2555 = vpop.f32.mrf.mxu0
      %v2556 = vadd.f32 %v2484, %v2555
      %v2557 = vpop.f32.mrf.mxu0
      %2558 = vdwg.mxu0
      %2559 = vst [vmem:[%s354] sm:$0xff] %v2556
      %p2560 = scmp.lt.s32.totalorder %s21, 1
      %s2561 = scalar_select %p2560, %s21, 1
      %s2562 = smul.addr %s2561, 8
      %s2563 = scalar_lea.vmem %s10, %s2562
      // Predicated region
      $region61: #{transformer_forward.1} parent=59 // pred_check
        %p2564 = pneg %p254
      $region62: #{transformer_forward.1} parent=59 // pred_check_branch
        %2566 = sbr.rel (%p2564) target = $region64
      $region63: #{transformer_forward.1} parent=59 // pred_region
        _
      $region64: #{transformer_forward.1} parent=59 // pred_fallthru
        _
    $region60: #{transformer_forward.1} parent=5 // pred_fallthru
      _
    %p2567 = scmp.le.s32.totalorder 2, %s16
    // Predicated region
    $region65: #{transformer_forward.1} parent=5 // pred_check
      %p2568 = pneg %p2567
    $region66: #{transformer_forward.1} parent=5 // pred_check_branch
      %2570 = sbr.rel (%p2568) target = $region68
    $region67: #{transformer_forward.1} parent=5 // pred_region
      %s2571 = ssub.s32 %s16, 2
      // Predicated region
      $region69: #{transformer_forward.1} parent=67 // pred_check
        %p2572 = pneg %p260
      $region70: #{transformer_forward.1} parent=67 // pred_check_branch
        %2574 = sbr.rel (%p2572) target = $region72
      $region71: #{transformer_forward.1} parent=67 // pred_region
        %p2575 = scmp.lt.s32.totalorder %s22, 1
        %s2576 = scalar_select %p2575, %s22, 1
        %s2577 = smul.addr %s2576, 8
        %s2578 = scalar_lea.vmem %s10, %s2577
      $region72: #{transformer_forward.1} parent=67 // pred_fallthru
        _
    $region68: #{transformer_forward.1} parent=5 // pred_fallthru
      _
  $region6: #{transformer_forward.1} parent=0 // loop_footer
    %s20 = sadd.s32 1, %s16
  $region7: #{transformer_forward.1} parent=0 // loop_footer_branch
    %15 = sbr.rel target = $region3
  $region8: #{transformer_forward.1} parent=0 // loop_exit
    _

</llo_original>
